<compile_context>
chip_gen: v7x
topology: tpu7x:2x2x1
jax: 0.10.0
libtpu: 0.0.40
codegen_flags: <defaults>
</compile_context>

<pallas_src>
import math
import functools

import jax
import jax.numpy as jnp
from jax.experimental import pallas as pl
from jax.experimental.pallas import tpu as pltpu

# Keep well under the 64 MiB per-TensorCore VMEM of v7x; plenty for the <4 MiB blocks used here.
VMEM_LIMIT = 32 * 1024 * 1024


def _cp(**kw):
    return pltpu.CompilerParams(vmem_limit_bytes=VMEM_LIMIT, **kw)


def _round_up(x, m):
    return (x + m - 1) // m * m


# --------------------------- cos_waves table kernel ----------------------------------

def _cos_table_kernel(freqs_ref, phases_ref, o_ref):
    # o_ref: (wave_size, TN)   freqs_ref / phases_ref: (1, TN)
    t = jax.lax.broadcasted_iota(jnp.int32, o_ref.shape, 0).astype(jnp.float32)
    angle = t * freqs_ref[...] + phases_ref[...]
    o_ref[...] = jnp.cos(angle).astype(o_ref.dtype)


def build_cos_table(freqs, phases, wave_size, *, compute_dtype=jnp.bfloat16, tile_n=128):
    """cos_waves[t, f] = cos(freqs[f] * t + phases[f]), columns padded to a multiple of 128.

    Call once and reuse the result across forwards (freqs/phases are parameters)."""
    num_freqs = freqs.shape[0]
    nf_pad = _round_up(num_freqs, tile_n)
    f2 = jnp.zeros((1, nf_pad), jnp.float32).at[0, :num_freqs].set(freqs.astype(jnp.float32))
    p2 = jnp.zeros((1, nf_pad), jnp.float32).at[0, :num_freqs].set(phases.astype(jnp.float32))
    return pl.pallas_call(
        _cos_table_kernel,
        grid=(nf_pad // tile_n,),
        in_specs=[pl.BlockSpec((1, tile_n), lambda j: (0, j)),
                  pl.BlockSpec((1, tile_n), lambda j: (0, j))],
        out_specs=pl.BlockSpec((wave_size, tile_n), lambda j: (0, j)),
        out_shape=jax.ShapeDtypeStruct((wave_size, nf_pad), compute_dtype),
        compiler_params=_cp(dimension_semantics=("parallel",)),
    )(f2, p2)   # padded columns hold junk; they are sliced off after the matmul


# --------------------------- |x @ cos_waves| / wave_size ------------------------------

def _fourier_matmul_kernel(x_ref, cw_ref, o_ref, *, inv_wave):
    # x_ref: (TM, wave_size) bf16   cw_ref: (wave_size, NF_pad) bf16   o_ref: (TM, NF_pad) f32
    y = jnp.dot(x_ref[...], cw_ref[...], preferred_element_type=jnp.float32)
    o_ref[...] = jnp.abs(y) * inv_wave


def fourier_apply(x, cos_table, wave_size, num_freqs, *,
                  compute_dtype=jnp.bfloat16, tile_m=512):
    """FourierLayer3.forward for x of shape (..., wave_size) -> (..., num_freqs)."""
    assert x.shape[-1] == wave_size
    lead = x.shape[:-1]
    m = math.prod(lead) if lead else 1
    nf_pad = cos_table.shape[1]

    x2 = x.reshape(m, wave_size).astype(compute_dtype)

    # Tile the row dimension so the Pallas pipeline double-buffers DMA against the MXU.
    tm = tile_m if m >= tile_m else max(16, _round_up(m, 16))
    m_pad = _round_up(m, tm)
    if m_pad != m:
        x2 = jnp.pad(x2, ((0, m_pad - m), (0, 0)))

    out = pl.pallas_call(
        functools.partial(_fourier_matmul_kernel, inv_wave=1.0 / wave_size),
        grid=(m_pad // tm,),
        in_specs=[pl.BlockSpec((tm, wave_size), lambda i: (i, 0)),
                  pl.BlockSpec((wave_size, nf_pad), lambda i: (0, 0))],
        out_specs=pl.BlockSpec((tm, nf_pad), lambda i: (i, 0)),
        out_shape=jax.ShapeDtypeStruct((m_pad, nf_pad), jnp.float32),
        compiler_params=_cp(dimension_semantics=("parallel",)),
    )(x2, cos_table)

    return out[:m, :num_freqs].reshape(*lead, num_freqs)


def fourier_layer3_forward(freqs, phases, x, wave_size, *, compute_dtype=jnp.bfloat16):
    """Full FourierLayer3.forward (table build + apply). For repeated calls, build the
    table once with build_cos_table() and call fourier_apply() directly."""
    table = build_cos_table(freqs, phases, wave_size, compute_dtype=compute_dtype)
    return fourier_apply(x, table, wave_size, freqs.shape[0], compute_dtype=compute_dtype)


# --------------------------------- init & demo ----------------------------------------

def init_fourier_params(key, num_freqs):
    kf, kp = jax.random.split(key)
    samp_rate = 8000.0
    min_f = 2 * math.pi * 27 / samp_rate
    max_f = 2 * math.pi * 4186.6 / samp_rate
    freqs = jax.random.uniform(kf, (num_freqs,), minval=min_f, maxval=max_f)
    phases = jax.random.uniform(kp, (num_freqs,), minval=0.0, maxval=math.pi)
    return freqs, phases


if __name__ == "__main__":
    # Small shapes consistent with the module (MirNet uses wave_size=1024, num_freqs=513,
    # x = (B, 1, 31, 1024)).  num_freqs=200 exercises the lane-padding path (200 -> 256).
    WAVE_SIZE = 256
    NUM_FREQS = 200
    key = jax.random.PRNGKey(0)
    pkey, xkey = jax.random.split(key)
    freqs, phases = init_fourier_params(pkey, NUM_FREQS)
    x = jax.random.normal(xkey, (2, 1, 8, WAVE_SIZE), dtype=jnp.float32)

    fwd = jax.jit(functools.partial(fourier_layer3_forward, wave_size=WAVE_SIZE))
    out = jax.block_until_ready(fwd(freqs, phases, x))
    assert out.shape == (2, 1, 8, NUM_FREQS), out.shape

    # Pure-JAX f32 reference (bf16 MXU operands -> small absolute tolerance after /wave_size).
    t = jnp.arange(WAVE_SIZE, dtype=jnp.float32)[:, None]
    cw = jnp.cos(t * freqs[None, :] + phases[None, :])
    ref = (jnp.abs(x.reshape(-1, WAVE_SIZE) @ cw) / WAVE_SIZE).reshape(out.shape)
    max_err = float(jnp.max(jnp.abs(out - ref)))
    assert max_err < 5e-3, max_err

    print("KERNEL_OK")
</pallas_src>

<mosaic_0001>
module attributes {stable_mosaic.version = 11 : i64} {
  func.func @_fourier_matmul_kernel(%arg0: i32, %arg1: memref<16x256xbf16, #tpu.memory_space<vmem>>, %arg2: memref<256x256xbf16, #tpu.memory_space<vmem>>, %arg3: memref<16x256xf32, #tpu.memory_space<vmem>>) attributes {dimension_semantics = [#tpu.dimension_semantics<parallel>], iteration_bounds = array<i64: 1>, scalar_prefetch = 0 : i64, scratch_operands = 0 : i64, tpu.core_type = #tpu.core_type<tc>, window_params = [{transform_indices = @transform_0, window_bounds = array<i64: 16, 256>}, {pipeline_mode = #tpu.pipeline_mode<synchronous>, transform_indices = @transform_1, window_bounds = array<i64: 256, 256>}, {transform_indices = @transform_2, window_bounds = array<i64: 16, 256>}]} {
    %c0 = arith.constant 0 : index
    %c0_0 = arith.constant 0 : index
    %0 = vector.load %arg1[%c0, %c0_0] : memref<16x256xbf16, #tpu.memory_space<vmem>>, vector<16x256xbf16>
    %c0_1 = arith.constant 0 : index
    %c0_2 = arith.constant 0 : index
    %1 = vector.load %arg2[%c0_1, %c0_2] : memref<256x256xbf16, #tpu.memory_space<vmem>>, vector<256x256xbf16>
    %cst = arith.constant dense<0.000000e+00> : vector<16x256xf32>
    %2 = tpu.matmul %0, %1, %cst {dimension_numbers = #tpu.dot_dimension_numbers<[1], [0], [0], [1], [0, 0, 1, 1], [], []>} : vector<16x256xbf16>, vector<256x256xbf16>, vector<16x256xf32> -> vector<16x256xf32>
    %3 = math.absf %2 : vector<16x256xf32>
    %cst_3 = arith.constant 3.906250e-03 : f32
    %4 = vector.broadcast %cst_3 : f32 to vector<16x256xf32>
    %5 = arith.mulf %3, %4 : vector<16x256xf32>
    %c0_4 = arith.constant 0 : index
    %c0_5 = arith.constant 0 : index
    %6 = vector.load %arg3[%c0_4, %c0_5] : memref<16x256xf32, #tpu.memory_space<vmem>>, vector<16x256xf32>
    tpu.vector_store %arg3[%c0_4, %c0_5], %5 {strides = array<i32>} : memref<16x256xf32, #tpu.memory_space<vmem>>, vector<16x256xf32>,
    return
  }
  func.func @transform_0(%arg0: i32) -> (i32, i32) {
    %c0_i32 = arith.constant 0 : i32
    %c0_i32_0 = arith.constant 0 : i32
    return %arg0, %c0_i32 : i32, i32
  }
  func.func @transform_1(%arg0: i32) -> (i32, i32) {
    %c0_i32 = arith.constant 0 : i32
    %c0_i32_0 = arith.constant 0 : i32
    %c0_i32_1 = arith.constant 0 : i32
    return %c0_i32, %c0_i32_0 : i32, i32
  }
  func.func @transform_2(%arg0: i32) -> (i32, i32) {
    %c0_i32 = arith.constant 0 : i32
    %c0_i32_0 = arith.constant 0 : i32
    return %arg0, %c0_i32 : i32, i32
  }
}

module attributes {stable_mosaic.version = 11 : i64} {
  func.func @_cos_table_kernel(%arg0: i32, %arg1: memref<1x128xf32, #tpu.memory_space<vmem>>, %arg2: memref<1x128xf32, #tpu.memory_space<vmem>>, %arg3: memref<256x128xbf16, #tpu.memory_space<vmem>>) attributes {dimension_semantics = [#tpu.dimension_semantics<parallel>], iteration_bounds = array<i64: 2>, scalar_prefetch = 0 : i64, scratch_operands = 0 : i64, tpu.core_type = #tpu.core_type<tc>, window_params = [{transform_indices = @transform_0, window_bounds = array<i64: 1, 128>}, {transform_indices = @transform_1, window_bounds = array<i64: 1, 128>}, {transform_indices = @transform_2, window_bounds = array<i64: 256, 128>}]} {
    %0 = tpu.iota {dimensions = array<i32: 0>} : vector<256x128xi32>
    %1 = arith.sitofp %0 : vector<256x128xi32> to vector<256x128xf32>
    %c0 = arith.constant 0 : index
    %c0_0 = arith.constant 0 : index
    %2 = vector.load %arg1[%c0, %c0_0] : memref<1x128xf32, #tpu.memory_space<vmem>>, vector<1x128xf32>
    %3 = vector.broadcast %2 : vector<1x128xf32> to vector<256x128xf32>
    %4 = arith.mulf %1, %3 : vector<256x128xf32>
    %c0_1 = arith.constant 0 : index
    %c0_2 = arith.constant 0 : index
    %5 = vector.load %arg2[%c0_1, %c0_2] : memref<1x128xf32, #tpu.memory_space<vmem>>, vector<1x128xf32>
    %6 = vector.broadcast %5 : vector<1x128xf32> to vector<256x128xf32>
    %7 = arith.addf %4, %6 : vector<256x128xf32>
    %8 = math.cos %7 : vector<256x128xf32>
    %9 = arith.truncf %8 : vector<256x128xf32> to vector<256x128xbf16>
    %c0_3 = arith.constant 0 : index
    %c0_4 = arith.constant 0 : index
    %10 = vector.load %arg3[%c0_3, %c0_4] : memref<256x128xbf16, #tpu.memory_space<vmem>>, vector<256x128xbf16>
    tpu.vector_store %arg3[%c0_3, %c0_4], %9 {strides = array<i32>} : memref<256x128xbf16, #tpu.memory_space<vmem>>, vector<256x128xbf16>,
    return
  }
  func.func @transform_0(%arg0: i32) -> (i32, i32) {
    %c0_i32 = arith.constant 0 : i32
    %c0_i32_0 = arith.constant 0 : i32
    return %c0_i32, %arg0 : i32, i32
  }
  func.func @transform_1(%arg0: i32) -> (i32, i32) {
    %c0_i32 = arith.constant 0 : i32
    %c0_i32_0 = arith.constant 0 : i32
    return %c0_i32, %arg0 : i32, i32
  }
  func.func @transform_2(%arg0: i32) -> (i32, i32) {
    %c0_i32 = arith.constant 0 : i32
    %c0_i32_0 = arith.constant 0 : i32
    return %c0_i32, %arg0 : i32, i32
  }
}

</mosaic_0001>

<llo_original>
// kernel: fourier_layer3_forward.3
$region0: #{fourier_layer3_forward.3}
  #allocation0 [shape = 'u32[]', space=smem, size = 0x4, offset = 0x4, fixed_abs, tag = 'smem constant byte address 0x4 - core index']
  #allocation1 [shape = 'u32[144,128]{1,0:T(1,128)}', space=vmem, size = 0x12000, scoped, tag = 'internal scratch']
  %s0 = inlined_call_operand.vmem [shape: bf16[16,256], index: 0, kind: input, shape index: {}]
  %s1 = inlined_call_operand.vmem [shape: bf16[256,256], index: 1, kind: input, shape index: {}]
  %s2 = inlined_call_operand.vmem [shape: f32[16,256], index: 2, kind: output, shape index: {}]
  %s3 = sld [smem:[#allocation0]]
  $region18: #{fourier_layer3_forward.3} parent=0
    _
  %s5 = ssub.s32 1, %s3
  %s6 = scalar_select 0, %s5, %s3
  // Predicated region
  $region2: #{fourier_layer3_forward.3} parent=0 // pred_check
    _
  $region3: #{fourier_layer3_forward.3} parent=0 // pred_check_branch
    %8 = sbr.rel (0) target = $region5
  $region4: #{fourier_layer3_forward.3} parent=0 // pred_region
    _
  $region5: #{fourier_layer3_forward.3} parent=0 // pred_fallthru
    _
  // Predicated region
  $region6: #{fourier_layer3_forward.3} parent=0 // pred_check
    _
  $region7: #{fourier_layer3_forward.3} parent=0 // pred_check_branch
    %10 = sbr.rel (0) target = $region9
  $region8: #{fourier_layer3_forward.3} parent=0 // pred_region
    _
  $region9: #{fourier_layer3_forward.3} parent=0 // pred_fallthru
    _
  %v11 = vld [vmem:[%s0] sm:$0xff]
  %v12 = vld [vmem:[%s0 + $0x8] sm:$0xff]
  %v13 = vld [vmem:[%s1] sm:$0xff]
  %v14 = vld [vmem:[%s1 + $0x8] sm:$0xff]
  %v15 = vld [vmem:[%s1 + $0x10] sm:$0xff]
  %v16 = vld [vmem:[%s1 + $0x18] sm:$0xff]
  %v17 = vld [vmem:[%s1 + $0x20] sm:$0xff]
  %v18 = vld [vmem:[%s1 + $0x28] sm:$0xff]
  %v19 = vld [vmem:[%s1 + $0x30] sm:$0xff]
  %v20 = vld [vmem:[%s1 + $0x38] sm:$0xff]
  %v21 = vld [vmem:[%s1 + $0x40] sm:$0xff]
  %v22 = vld [vmem:[%s1 + $0x48] sm:$0xff]
  %v23 = vld [vmem:[%s1 + $0x50] sm:$0xff]
  %v24 = vld [vmem:[%s1 + $0x58] sm:$0xff]
  %v25 = vld [vmem:[%s1 + $0x60] sm:$0xff]
  %v26 = vld [vmem:[%s1 + $0x68] sm:$0xff]
  %v27 = vld [vmem:[%s1 + $0x70] sm:$0xff]
  %v28 = vld [vmem:[%s1 + $0x78] sm:$0xff]
  %v29 = vld [vmem:[%s1 + $0x80] sm:$0xff]
  %v30 = vld [vmem:[%s1 + $0x88] sm:$0xff]
  %v31 = vld [vmem:[%s1 + $0x90] sm:$0xff]
  %v32 = vld [vmem:[%s1 + $0x98] sm:$0xff]
  %v33 = vld [vmem:[%s1 + $0xa0] sm:$0xff]
  %v34 = vld [vmem:[%s1 + $0xa8] sm:$0xff]
  %v35 = vld [vmem:[%s1 + $0xb0] sm:$0xff]
  %v36 = vld [vmem:[%s1 + $0xb8] sm:$0xff]
  %v37 = vld [vmem:[%s1 + $0xc0] sm:$0xff]
  %v38 = vld [vmem:[%s1 + $0xc8] sm:$0xff]
  %v39 = vld [vmem:[%s1 + $0xd0] sm:$0xff]
  %v40 = vld [vmem:[%s1 + $0xd8] sm:$0xff]
  %v41 = vld [vmem:[%s1 + $0xe0] sm:$0xff]
  %v42 = vld [vmem:[%s1 + $0xe8] sm:$0xff]
  %v43 = vld [vmem:[%s1 + $0xf0] sm:$0xff]
  %v44 = vld [vmem:[%s1 + $0xf8] sm:$0xff]
  %v47 = vunpack.c.l.b16 %v11
  %v48 = vunpack.c.h.b16 %v11
  %v49 = vunpack.c.l.b16 %v12
  %v50 = vunpack.c.h.b16 %v12
  %v51 = vpack.c.b16 %v49, %v47
  %v52 = vpack.c.b16 %v50, %v48
  %v87 = vunpack.c.l.b16 %v13
  %v88 = vunpack.c.h.b16 %v13
  %v89 = vunpack.c.l.b16 %v14
  %v90 = vunpack.c.h.b16 %v14
  %v91 = vunpack.c.l.b16 %v15
  %v92 = vunpack.c.h.b16 %v15
  %v93 = vunpack.c.l.b16 %v16
  %v94 = vunpack.c.h.b16 %v16
  %v95 = vunpack.c.l.b16 %v17
  %v96 = vunpack.c.h.b16 %v17
  %v97 = vunpack.c.l.b16 %v18
  %v98 = vunpack.c.h.b16 %v18
  %v99 = vunpack.c.l.b16 %v19
  %v100 = vunpack.c.h.b16 %v19
  %v101 = vunpack.c.l.b16 %v20
  %v102 = vunpack.c.h.b16 %v20
  %v103 = vunpack.c.l.b16 %v21
  %v104 = vunpack.c.h.b16 %v21
  %v105 = vunpack.c.l.b16 %v22
  %v106 = vunpack.c.h.b16 %v22
  %v107 = vunpack.c.l.b16 %v23
  %v108 = vunpack.c.h.b16 %v23
  %v109 = vunpack.c.l.b16 %v24
  %v110 = vunpack.c.h.b16 %v24
  %v111 = vunpack.c.l.b16 %v25
  %v112 = vunpack.c.h.b16 %v25
  %v113 = vunpack.c.l.b16 %v26
  %v114 = vunpack.c.h.b16 %v26
  %v115 = vunpack.c.l.b16 %v27
  %v116 = vunpack.c.h.b16 %v27
  %v117 = vunpack.c.l.b16 %v28
  %v118 = vunpack.c.h.b16 %v28
  %v119 = vunpack.c.l.b16 %v29
  %v120 = vunpack.c.h.b16 %v29
  %v121 = vunpack.c.l.b16 %v30
  %v122 = vunpack.c.h.b16 %v30
  %v123 = vunpack.c.l.b16 %v31
  %v124 = vunpack.c.h.b16 %v31
  %v125 = vunpack.c.l.b16 %v32
  %v126 = vunpack.c.h.b16 %v32
  %v127 = vunpack.c.l.b16 %v33
  %v128 = vunpack.c.h.b16 %v33
  %v129 = vunpack.c.l.b16 %v34
  %v130 = vunpack.c.h.b16 %v34
  %v131 = vunpack.c.l.b16 %v35
  %v132 = vunpack.c.h.b16 %v35
  %v133 = vunpack.c.l.b16 %v36
  %v134 = vunpack.c.h.b16 %v36
  %v135 = vunpack.c.l.b16 %v37
  %v136 = vunpack.c.h.b16 %v37
  %v137 = vunpack.c.l.b16 %v38
  %v138 = vunpack.c.h.b16 %v38
  %v139 = vunpack.c.l.b16 %v39
  %v140 = vunpack.c.h.b16 %v39
  %v141 = vunpack.c.l.b16 %v40
  %v142 = vunpack.c.h.b16 %v40
  %v143 = vunpack.c.l.b16 %v41
  %v144 = vunpack.c.h.b16 %v41
  %v145 = vunpack.c.l.b16 %v42
  %v146 = vunpack.c.h.b16 %v42
  %v147 = vunpack.c.l.b16 %v43
  %v148 = vunpack.c.h.b16 %v43
  %v149 = vunpack.c.l.b16 %v44
  %v150 = vunpack.c.h.b16 %v44
  %v151 = vpack.c.b16 %v89, %v87
  %v152 = vpack.c.b16 %v90, %v88
  %v153 = vpack.c.b16 %v93, %v91
  %v154 = vpack.c.b16 %v94, %v92
  %v155 = vpack.c.b16 %v97, %v95
  %v156 = vpack.c.b16 %v98, %v96
  %v157 = vpack.c.b16 %v101, %v99
  %v158 = vpack.c.b16 %v102, %v100
  %v159 = vpack.c.b16 %v105, %v103
  %v160 = vpack.c.b16 %v106, %v104
  %v161 = vpack.c.b16 %v109, %v107
  %v162 = vpack.c.b16 %v110, %v108
  %v163 = vpack.c.b16 %v113, %v111
  %v164 = vpack.c.b16 %v114, %v112
  %v165 = vpack.c.b16 %v117, %v115
  %v166 = vpack.c.b16 %v118, %v116
  %v167 = vpack.c.b16 %v121, %v119
  %v168 = vpack.c.b16 %v122, %v120
  %v169 = vpack.c.b16 %v125, %v123
  %v170 = vpack.c.b16 %v126, %v124
  %v171 = vpack.c.b16 %v129, %v127
  %v172 = vpack.c.b16 %v130, %v128
  %v173 = vpack.c.b16 %v133, %v131
  %v174 = vpack.c.b16 %v134, %v132
  %v175 = vpack.c.b16 %v137, %v135
  %v176 = vpack.c.b16 %v138, %v136
  %v177 = vpack.c.b16 %v141, %v139
  %v178 = vpack.c.b16 %v142, %v140
  %v179 = vpack.c.b16 %v145, %v143
  %v180 = vpack.c.b16 %v146, %v144
  %v181 = vpack.c.b16 %v149, %v147
  %v182 = vpack.c.b16 %v150, %v148
  %215 = vmatprep.subr.bf16.mxu0 %v152
  %216 = vmatpush1.bf16.msra.mxu0 %v151
  %217 = vmatprep.subr.bf16.mxu0 %v154
  %218 = vmatpush1.bf16.msra.mxu0 %v153
  %219 = vmatprep.subr.bf16.mxu0 %v156
  %220 = vmatpush1.bf16.msra.mxu0 %v155
  %221 = vmatprep.subr.bf16.mxu0 %v158
  %222 = vmatpush1.bf16.msra.mxu0 %v157
  %223 = vmatprep.subr.bf16.mxu0 %v160
  %224 = vmatpush1.bf16.msra.mxu0 %v159
  %225 = vmatprep.subr.bf16.mxu0 %v162
  %226 = vmatpush1.bf16.msra.mxu0 %v161
  %227 = vmatprep.subr.bf16.mxu0 %v164
  %228 = vmatpush1.bf16.msra.mxu0 %v163
  %229 = vmatprep.subr.bf16.mxu0 %v166
  %230 = vmatpush1.bf16.msra.mxu0 %v165
  %231 = vmatprep.subr.bf16.mxu0 %v168
  %232 = vmatpush1.bf16.msra.mxu0 %v167
  %233 = vmatprep.subr.bf16.mxu0 %v170
  %234 = vmatpush1.bf16.msra.mxu0 %v169
  %235 = vmatprep.subr.bf16.mxu0 %v172
  %236 = vmatpush1.bf16.msra.mxu0 %v171
  %237 = vmatprep.subr.bf16.mxu0 %v174
  %238 = vmatpush1.bf16.msra.mxu0 %v173
  %239 = vmatprep.subr.bf16.mxu0 %v176
  %240 = vmatpush1.bf16.msra.mxu0 %v175
  %241 = vmatprep.subr.bf16.mxu0 %v178
  %242 = vmatpush1.bf16.msra.mxu0 %v177
  %243 = vmatprep.subr.bf16.mxu0 %v180
  %244 = vmatpush1.bf16.msra.mxu0 %v179
  %245 = vmatprep.subr.bf16.mxu0 %v182
  %246 = vmatpush1.bf16.msra.mxu0 %v181
  %247 = vmatprep.mubr.bf16.mxu0 %v52
  %248 = vmatmul.mubr.bf16.gmra.mrb[0].mxu0 %v51
  %v249 = vpop.f32.mrb[0].mxu0
  %v250 = vadd.f32 0.0, %v249
  %v251 = vpop.f32.mrb[0].mxu0
  %v252 = vadd.f32 0.0, %v251
  %v253 = vpop.f32.mrb[0].mxu0
  %v254 = vadd.f32 0.0, %v253
  %v255 = vpop.f32.mrb[0].mxu0
  %v256 = vadd.f32 0.0, %v255
  %257 = vdwg.mxu0
  %v258 = vand.u32 2147483647, %v250
  %v259 = vand.u32 2147483647, %v252
  %v260 = vand.u32 2147483647, %v254
  %v261 = vand.u32 2147483647, %v256
  %v262 = vmul.f32 %v258, 0.00390625
  %v263 = vmul.f32 %v259, 0.00390625
  %v264 = vmul.f32 %v260, 0.00390625
  %v265 = vmul.f32 %v261, 0.00390625
  %266 = vst [vmem:[%s2] sm:$0xff] %v262
  %267 = vst [vmem:[%s2 + $0x8] sm:$0xff] %v263
  %268 = vst [vmem:[%s2 + $0x10] sm:$0xff] %v264
  %269 = vst [vmem:[%s2 + $0x18] sm:$0xff] %v265
  // Predicated region
  $region10: #{fourier_layer3_forward.3} parent=0 // pred_check
    _
  $region11: #{fourier_layer3_forward.3} parent=0 // pred_check_branch
    %271 = sbr.rel (0) target = $region13
  $region12: #{fourier_layer3_forward.3} parent=0 // pred_region
    _
  $region13: #{fourier_layer3_forward.3} parent=0 // pred_fallthru
    _
  // Predicated region
  $region14: #{fourier_layer3_forward.3} parent=0 // pred_check
    _
  $region15: #{fourier_layer3_forward.3} parent=0 // pred_check_branch
    %273 = sbr.rel (0) target = $region17
  $region16: #{fourier_layer3_forward.3} parent=0 // pred_region
    _
  $region17: #{fourier_layer3_forward.3} parent=0 // pred_fallthru
    _

// kernel: fourier_layer3_forward.2
$region0: #{fourier_layer3_forward.2}
  #allocation0 [shape = 'u32[]', space=smem, size = 0x4, offset = 0x4, fixed_abs, tag = 'smem constant byte address 0x4 - core index']
  #allocation1 [shape = 'u32[144,128]{1,0:T(1,128)}', space=vmem, size = 0x12000, scoped, tag = 'internal scratch']
  %s0 = inlined_call_operand.vmem [shape: f32[1,256], index: 0, kind: input, shape index: {}]
  %s1 = inlined_call_operand.vmem [shape: f32[1,256], index: 1, kind: input, shape index: {}]
  %s2 = inlined_call_operand.vmem [shape: bf16[256,256], index: 2, kind: output, shape index: {}]
  %s3 = sld [smem:[#allocation0]]
  $region78: #{fourier_layer3_forward.2} parent=0
    _
  %s5 = ssub.s32 1, %s3
  %s6 = scalar_select 0, %s5, %s3
  $region1: #{fourier_layer3_forward.2} parent=0
    #allocation2 [shape = 'u8[131072]{0}', space=vmem, size = 0x20000, scoped, tag = 'output window, operand 0']
    loop: start=0, step=1, limit=4
    $region2: #{fourier_layer3_forward.2} parent=1 // loop_pre_header
      _
    $region3: #{fourier_layer3_forward.2} parent=1 // loop_header
      %s8 = sphi 0, %s12
      %p9 = scmp.ge.s32.totalorder %s8, 4
      %s18 = sphi 0, %s20
      %s21 = sphi 0, %s18
      %s22 = sphi 0, %s21
      %s38 = sphi 0, %s22
      %s44 = sphi 0, %s46
      %s47 = sphi 0, %s44
      %s48 = sphi 0, %s47
      %s64 = sphi 0, %s48
      %s70 = sphi 0, %s72
      %s73 = sphi 0, %s70
      %s74 = sphi 0, %s73
      %s90 = sphi 0, %s74
    $region4: #{fourier_layer3_forward.2} parent=1 // loop_header_branch
      %11 = sbr.rel (%p9) target = $region8
    $region5: #{fourier_layer3_forward.2} parent=1 // loop_body
      %s13 = ssub.s32 %s8, 1
      %s14 = ssub.s32 %s8, 2
      %s15 = sadd.s32 %s8, 1
      %s16 = ssub.s32 %s8, %s15
      %p17 = scmp.eq.s32.totalorder %s16, 0
      %s19 = sadd.s32 %s18, 1
      %s20 = scalar_select %p17, %s18, %s19
      %p23 = pneg %p17
      %p24 = scmp.eq.s32.totalorder %s8, 1
      %p25 = por %p23, %p24
      %p26 = scmp.ne.s32.totalorder %s18, %s21
      %p27 = scmp.eq.s32.totalorder %s8, 0
      %p28 = por %p26, %p27
      %p29 = scmp.ne.s32.totalorder %s18, %s21
      %p30 = scmp.eq.s32.totalorder %s13, 1
      %p31 = por %p29, %p30
      %p32 = scmp.ne.s32.totalorder %s21, %s22
      %p33 = scmp.eq.s32.totalorder %s13, 0
      %p34 = por %p32, %p33
      %p35 = scmp.ne.s32.totalorder %s21, %s22
      %p36 = scmp.eq.s32.totalorder %s14, 1
      %p37 = por %p35, %p36
      %p39 = scmp.ne.s32.totalorder %s22, %s38
      %p40 = scmp.eq.s32.totalorder %s14, 0
      %p41 = por %p39, %p40
      %s42 = ssub.s32 %s8, %s15
      %p43 = scmp.eq.s32.totalorder %s42, 0
      %s45 = sadd.s32 %s44, 1
      %s46 = scalar_select %p43, %s44, %s45
      %p49 = pneg %p43
      %p50 = scmp.eq.s32.totalorder %s8, 1
      %p51 = por %p49, %p50
      %p52 = scmp.ne.s32.totalorder %s44, %s47
      %p53 = scmp.eq.s32.totalorder %s8, 0
      %p54 = por %p52, %p53
      %p55 = scmp.ne.s32.totalorder %s44, %s47
      %p56 = scmp.eq.s32.totalorder %s13, 1
      %p57 = por %p55, %p56
      %p58 = scmp.ne.s32.totalorder %s47, %s48
      %p59 = scmp.eq.s32.totalorder %s13, 0
      %p60 = por %p58, %p59
      %p61 = scmp.ne.s32.totalorder %s47, %s48
      %p62 = scmp.eq.s32.totalorder %s14, 1
      %p63 = por %p61, %p62
      %p65 = scmp.ne.s32.totalorder %s48, %s64
      %p66 = scmp.eq.s32.totalorder %s14, 0
      %p67 = por %p65, %p66
      %s68 = ssub.s32 %s8, %s15
      %p69 = scmp.eq.s32.totalorder %s68, 0
      %s71 = sadd.s32 %s70, 1
      %s72 = scalar_select %p69, %s70, %s71
      %p75 = pneg %p69
      %p76 = scmp.eq.s32.totalorder %s8, 1
      %p77 = por %p75, %p76
      %p78 = scmp.ne.s32.totalorder %s70, %s73
      %p79 = scmp.eq.s32.totalorder %s8, 0
      %p80 = por %p78, %p79
      %p81 = scmp.ne.s32.totalorder %s70, %s73
      %p82 = scmp.eq.s32.totalorder %s13, 1
      %p83 = por %p81, %p82
      %p84 = scmp.ne.s32.totalorder %s73, %s74
      %p85 = scmp.eq.s32.totalorder %s13, 0
      %p86 = por %p84, %p85
      %p87 = scmp.ne.s32.totalorder %s73, %s74
      %p88 = scmp.eq.s32.totalorder %s14, 1
      %p89 = por %p87, %p88
      %p91 = scmp.ne.s32.totalorder %s74, %s90
      %p92 = scmp.eq.s32.totalorder %s14, 0
      %p93 = por %p91, %p92
      %p94 = scmp.le.s32.totalorder 1, %s8
      %p95 = scmp.lt.s32.totalorder %s8, 3
      %p96 = pnand %p94, %p95
      %p97 = pneg %p96
      // Predicated region
      $region9: #{fourier_layer3_forward.2} parent=5 // pred_check
        _
      $region10: #{fourier_layer3_forward.2} parent=5 // pred_check_branch
        %99 = sbr.rel (%p96) target = $region12
      $region11: #{fourier_layer3_forward.2} parent=5 // pred_region
        %s100 = ssub.s32 %s8, 1
      $region12: #{fourier_layer3_forward.2} parent=5 // pred_fallthru
        _
      %p101 = scmp.lt.s32.totalorder %s8, 2
      // Predicated region
      $region13: #{fourier_layer3_forward.2} parent=5 // pred_check
        %p102 = pneg %p101
      $region14: #{fourier_layer3_forward.2} parent=5 // pred_check_branch
        %104 = sbr.rel (%p102) target = $region16
      $region15: #{fourier_layer3_forward.2} parent=5 // pred_region
        // Predicated region
        $region17: #{fourier_layer3_forward.2} parent=15 // pred_check
          %p105 = pneg %p28
        $region18: #{fourier_layer3_forward.2} parent=15 // pred_check_branch
          %107 = sbr.rel (%p105) target = $region20
        $region19: #{fourier_layer3_forward.2} parent=15 // pred_region
          %p108 = scmp.lt.s32.totalorder %s8, 1
          %s109 = scalar_select %p108, %s8, 1
          %s110 = scalar_lea.vmem %s0, %s109
        $region20: #{fourier_layer3_forward.2} parent=15 // pred_fallthru
          _
        // Predicated region
        $region21: #{fourier_layer3_forward.2} parent=15 // pred_check
          %p111 = pneg %p54
        $region22: #{fourier_layer3_forward.2} parent=15 // pred_check_branch
          %113 = sbr.rel (%p111) target = $region24
        $region23: #{fourier_layer3_forward.2} parent=15 // pred_region
          %p114 = scmp.lt.s32.totalorder %s8, 1
          %s115 = scalar_select %p114, %s8, 1
          %s116 = scalar_lea.vmem %s1, %s115
        $region24: #{fourier_layer3_forward.2} parent=15 // pred_fallthru
          _
      $region16: #{fourier_layer3_forward.2} parent=5 // pred_fallthru
        _
      %p117 = scmp.le.s32.totalorder 1, %s8
      %p118 = scmp.lt.s32.totalorder %s8, 3
      %p119 = pnand %p117, %p118
      %p120 = pneg %p119
      // Predicated region
      $region25: #{fourier_layer3_forward.2} parent=5 // pred_check
        _
      $region26: #{fourier_layer3_forward.2} parent=5 // pred_check_branch
        %122 = sbr.rel (%p119) target = $region28
      $region27: #{fourier_layer3_forward.2} parent=5 // pred_region
        %s123 = ssub.s32 %s8, 1
        %p124 = scmp.lt.s32.totalorder %s13, 1
        %s125 = scalar_select %p124, %s13, 1
        %s126 = scalar_lea.vmem %s0, %s125
        %p127 = pneg %p34
        %p128 = pneg %p31
        %p129 = scmp.lt.s32.totalorder %s13, 1
        %s130 = scalar_select %p129, %s13, 1
        %s131 = scalar_lea.vmem %s1, %s130
        %p132 = pneg %p60
        %p133 = pneg %p57
        %p134 = pneg %p86
        %p135 = pneg %p83
        %s136 = sand.u32 %s73, 1
        %s137 = sand.u32 %s73, 1
        %s138 = smul.addr %s137, 128
        %s139 = scalar_lea.vmem [#allocation2], %s138
        %p140 = scmp.lt.s32.totalorder %s13, 1
        %s141 = scalar_select %p140, %s13, 1
        %s142 = scalar_lea.vmem %s0, %s141
        %p143 = scmp.lt.s32.totalorder %s13, 1
        %s144 = scalar_select %p143, %s13, 1
        %s145 = scalar_lea.vmem %s1, %s144
        %v146 = vlaneseq
        %v147 = vshrl.u32 %v146, 7
        %v148 = vadd.s32 %v147, 8
        %v149 = vadd.s32 %v147, 16
        %v150 = vadd.s32 %v147, 24
        %v151 = vadd.s32 %v147, 32
        %v152 = vadd.s32 %v147, 40
        %v153 = vadd.s32 %v147, 48
        %v154 = vadd.s32 %v147, 56
        %v155 = vadd.s32 %v147, 64
        %v156 = vadd.s32 %v147, 72
        %v157 = vadd.s32 %v147, 80
        %v158 = vadd.s32 %v147, 88
        %v159 = vadd.s32 %v147, 96
        %v160 = vadd.s32 %v147, 104
        %v161 = vadd.s32 %v147, 112
        %v162 = vadd.s32 %v147, 120
        %v163 = vadd.s32 %v147, 128
        %v164 = vadd.s32 %v147, 136
        %v165 = vadd.s32 %v147, 144
        %v166 = vadd.s32 %v147, 152
        %v167 = vadd.s32 %v147, 160
        %v168 = vadd.s32 %v147, 168
        %v169 = vadd.s32 %v147, 176
        %v170 = vadd.s32 %v147, 184
        %v171 = vadd.s32 %v147, 192
        %v172 = vadd.s32 %v147, 200
        %v173 = vadd.s32 %v147, 208
        %v174 = vadd.s32 %v147, 216
        %v175 = vadd.s32 %v147, 224
        %v176 = vadd.s32 %v147, 232
        %v177 = vadd.s32 %v147, 240
        %v178 = vadd.s32 %v147, 248
        %v179 = vcvt.s32.f32 %v147
        %v180 = vcvt.s32.f32 %v148
        %v181 = vcvt.s32.f32 %v149
        %v182 = vcvt.s32.f32 %v150
        %v183 = vcvt.s32.f32 %v151
        %v184 = vcvt.s32.f32 %v152
        %v185 = vcvt.s32.f32 %v153
        %v186 = vcvt.s32.f32 %v154
        %v187 = vcvt.s32.f32 %v155
        %v188 = vcvt.s32.f32 %v156
        %v189 = vcvt.s32.f32 %v157
        %v190 = vcvt.s32.f32 %v158
        %v191 = vcvt.s32.f32 %v159
        %v192 = vcvt.s32.f32 %v160
        %v193 = vcvt.s32.f32 %v161
        %v194 = vcvt.s32.f32 %v162
        %v195 = vcvt.s32.f32 %v163
        %v196 = vcvt.s32.f32 %v164
        %v197 = vcvt.s32.f32 %v165
        %v198 = vcvt.s32.f32 %v166
        %v199 = vcvt.s32.f32 %v167
        %v200 = vcvt.s32.f32 %v168
        %v201 = vcvt.s32.f32 %v169
        %v202 = vcvt.s32.f32 %v170
        %v203 = vcvt.s32.f32 %v171
        %v204 = vcvt.s32.f32 %v172
        %v205 = vcvt.s32.f32 %v173
        %v206 = vcvt.s32.f32 %v174
        %v207 = vcvt.s32.f32 %v175
        %v208 = vcvt.s32.f32 %v176
        %v209 = vcvt.s32.f32 %v177
        %v210 = vcvt.s32.f32 %v178
        %v211 = vld [vmem:[%s142] sm:$0x1]
        %v213 = vlaneseq
        %v214 = vshrl.u32 %v213, 7
        %v215 = vsub.s32 0, %v214
        %v216 = vrot.slane %v211, %v215
        %v218 = vmul.f32 %v179, %v216
        %v219 = vmul.f32 %v180, %v216
        %v220 = vmul.f32 %v181, %v216
        %v221 = vmul.f32 %v182, %v216
        %v222 = vmul.f32 %v183, %v216
        %v223 = vmul.f32 %v184, %v216
        %v224 = vmul.f32 %v185, %v216
        %v225 = vmul.f32 %v186, %v216
        %v226 = vmul.f32 %v187, %v216
        %v227 = vmul.f32 %v188, %v216
        %v228 = vmul.f32 %v189, %v216
        %v229 = vmul.f32 %v190, %v216
        %v230 = vmul.f32 %v191, %v216
        %v231 = vmul.f32 %v192, %v216
        %v232 = vmul.f32 %v193, %v216
        %v233 = vmul.f32 %v194, %v216
        %v234 = vmul.f32 %v195, %v216
        %v235 = vmul.f32 %v196, %v216
        %v236 = vmul.f32 %v197, %v216
        %v237 = vmul.f32 %v198, %v216
        %v238 = vmul.f32 %v199, %v216
        %v239 = vmul.f32 %v200, %v216
        %v240 = vmul.f32 %v201, %v216
        %v241 = vmul.f32 %v202, %v216
        %v242 = vmul.f32 %v203, %v216
        %v243 = vmul.f32 %v204, %v216
        %v244 = vmul.f32 %v205, %v216
        %v245 = vmul.f32 %v206, %v216
        %v246 = vmul.f32 %v207, %v216
        %v247 = vmul.f32 %v208, %v216
        %v248 = vmul.f32 %v209, %v216
        %v249 = vmul.f32 %v210, %v216
        %v250 = vld [vmem:[%s145] sm:$0x1]
        %v252 = vlaneseq
        %v253 = vshrl.u32 %v252, 7
        %v254 = vsub.s32 0, %v253
        %v255 = vrot.slane %v250, %v254
        %v257 = vadd.f32 %v218, %v255
        %v258 = vadd.f32 %v219, %v255
        %v259 = vadd.f32 %v220, %v255
        %v260 = vadd.f32 %v221, %v255
        %v261 = vadd.f32 %v222, %v255
        %v262 = vadd.f32 %v223, %v255
        %v263 = vadd.f32 %v224, %v255
        %v264 = vadd.f32 %v225, %v255
        %v265 = vadd.f32 %v226, %v255
        %v266 = vadd.f32 %v227, %v255
        %v267 = vadd.f32 %v228, %v255
        %v268 = vadd.f32 %v229, %v255
        %v269 = vadd.f32 %v230, %v255
        %v270 = vadd.f32 %v231, %v255
        %v271 = vadd.f32 %v232, %v255
        %v272 = vadd.f32 %v233, %v255
        %v273 = vadd.f32 %v234, %v255
        %v274 = vadd.f32 %v235, %v255
        %v275 = vadd.f32 %v236, %v255
        %v276 = vadd.f32 %v237, %v255
        %v277 = vadd.f32 %v238, %v255
        %v278 = vadd.f32 %v239, %v255
        %v279 = vadd.f32 %v240, %v255
        %v280 = vadd.f32 %v241, %v255
        %v281 = vadd.f32 %v242, %v255
        %v282 = vadd.f32 %v243, %v255
        %v283 = vadd.f32 %v244, %v255
        %v284 = vadd.f32 %v245, %v255
        %v285 = vadd.f32 %v246, %v255
        %v286 = vadd.f32 %v247, %v255
        %v287 = vadd.f32 %v248, %v255
        %v288 = vadd.f32 %v249, %v255
        %v289 = vand.u32 2147483647, %v257
        %vm290 = vcmp.le.f32.partialorder %v289, 0.7853982
        %vm291 = vcmp.lt.s32.totalorder %v257, 0
        %v292 = vand.u32 %v257, 2139095040
        %v293 = vshrl.u32 %v292, 23
        %v294 = vsub.s32 %v293, 127
        %v295 = vand.u32 2147483647, %v257
        %v296 = vand.u32 %v295, 8388607
        %v297 = vor.u32 %v296, 8388608
        %v298 = vsub.s32 0, %v297
        %v299 = vadd.s32 %v294, 1
        %vm300 = vcmp.gt.s32.totalorder %v299, 0
        %v301 = vsel %vm300, %v299, 0
        %v302 = vshrl.u32 %v301, 5
        %v303 = vand.u32 %v301, 31
        %v304 = vsub.s32 32, %v303
        %v305 = vshrl.u32 683565275, %v304
        %v306 = vshll.u32 683565275, %v303
        %v307 = vshrl.u32 2475754826, %v304
        %v308 = vor.u32 %v306, %v307
        %v309 = vshll.u32 2475754826, %v303
        %v310 = vshrl.u32 2131351028, %v304
        %v311 = vor.u32 %v309, %v310
        %v312 = vshll.u32 2131351028, %v303
        %v313 = vshrl.u32 2102212464, %v304
        %v314 = vor.u32 %v312, %v313
        %v315 = vshll.u32 2102212464, %v303
        %v316 = vshrl.u32 920167782, %v304
        %v317 = vor.u32 %v315, %v316
        %v318 = vshll.u32 920167782, %v303
        %v319 = vshrl.u32 1326507024, %v304
        %v320 = vor.u32 %v318, %v319
        %vm321 = vcmp.lt.s32.totalorder %v302, 1
        %vm322 = vcmp.lt.s32.totalorder %v302, 2
        %vm323 = vcmp.lt.s32.totalorder %v302, 3
        %vm324 = vcmp.lt.s32.totalorder %v302, 4
        %v325 = vsel %vm321, %v305, %v308
        %v326 = vsel %vm324, %v314, 2102212464
        %v327 = vsel %vm323, %v311, %v326
        %v328 = vsel %vm322, %v325, %v327
        %v329 = vsel %vm321, %v308, %v311
        %v330 = vsel %vm324, %v317, 920167782
        %v331 = vsel %vm323, %v314, %v330
        %v332 = vsel %vm322, %v329, %v331
        %v333 = vsel %vm321, %v311, %v314
        %v334 = vsel %vm324, %v320, 1326507024
        %v335 = vsel %vm323, %v317, %v334
        %v336 = vsel %vm322, %v333, %v335
        %v337 = vshll.u32 %v297, 8
        %v338 = vmul.u32.u64.compose %v337, %v336
        %v339 = vextract.low.u32 %v338
        %v340 = vextract.high.u32 %v338
        %v341 = vmul.u32.u64.compose %v337, %v332
        %v342 = vextract.low.u32 %v341
        %v343 = vextract.high.u32 %v341
        %v344 = vmul.u32 %v337, %v328
        %v345 = vadd.s32 %v340, %v342
        %vm346 = vc.u32 %v340, %v342
        %v347 = vadd.s32 %v343, 1
        %v348 = vsel %vm346, %v347, %v343
        %v349 = vadd.s32 %v344, %v348
        %v350 = vadd.s32 %v349, 536870912
        %v351 = vshrl.u32 %v350, 30
        %v352 = vshll.u32 %v351, 30
        %v353 = vsub.s32 %v349, %v352
        %vm354 = vcmp.lt.s32.totalorder %v353, 0
        %v355 = vsub.s32 0, %v353
        %v356 = vsel %vm354, %v355, %v353
        %v357 = vclz %v356
        %v358 = vsub.s32 %v357, 2
        %vm359 = vcmp.gt.s32.totalorder 0, %v358
        %v360 = vsel %vm359, 0, %v358
        %v361 = vsub.s32 32, %v360
        %v362 = vshll.u32 %v353, %v360
        %v363 = vshrl.u32 %v345, %v361
        %v364 = vor.u32 %v362, %v363
        %v365 = vsub.s32 4294967266, %v360
        %v366 = vadd.s32 %v365, 127
        %v367 = vshll.u32 %v366, 23
        %v368 = vor.u32 4788187, %v367
        %v369 = vand.u32 2147483647, %v368
        %v371 = vcvt.s32.f32 %v364
        %v372 = vmul.f32 %v371, %v369
        %v373 = vxor.u32 %v372, 2147483648
        %v374 = vsel %vm291, %v373, %v372
        %v375 = vsub.s32 4, %v351
        %v376 = vsel %vm291, %v375, %v351
        %v377 = vsel %vm290, %v257, %v374
        %v378 = vsel %vm290, 0, %v376
        %v379 = vcosq.f32.pop %v377
        %v380 = vsinq.f32.pop %v377
        %vm381 = vweird.f32 %v257
        %v382 = vand.u32 %v378, 3
        %vm383 = vcmp.lt.s32.totalorder %v382, 2
        %vm384 = vcmp.eq.s32.totalorder %v382, 0
        %v385 = vxor.u32 %v380, 2147483648
        %v386 = vsel %vm384, %v379, %v385
        %vm387 = vcmp.eq.s32.totalorder %v382, 2
        %v388 = vxor.u32 %v379, 2147483648
        %v389 = vsel %vm387, %v388, %v380
        %v390 = vsel %vm383, %v386, %v389
        %v391 = vsel %vm381, nan, %v390
        %v392 = vand.u32 2147483647, %v258
        %vm393 = vcmp.le.f32.partialorder %v392, 0.7853982
        %vm394 = vcmp.lt.s32.totalorder %v258, 0
        %v395 = vand.u32 %v258, 2139095040
        %v396 = vshrl.u32 %v395, 23
        %v397 = vsub.s32 %v396, 127
        %v398 = vand.u32 2147483647, %v258
        %v399 = vand.u32 %v398, 8388607
        %v400 = vor.u32 %v399, 8388608
        %v401 = vsub.s32 0, %v400
        %v402 = vadd.s32 %v397, 1
        %vm403 = vcmp.gt.s32.totalorder %v402, 0
        %v404 = vsel %vm403, %v402, 0
        %v405 = vshrl.u32 %v404, 5
        %v406 = vand.u32 %v404, 31
        %v407 = vsub.s32 32, %v406
        %v408 = vshrl.u32 683565275, %v407
        %v409 = vshll.u32 683565275, %v406
        %v410 = vshrl.u32 2475754826, %v407
        %v411 = vor.u32 %v409, %v410
        %v412 = vshll.u32 2475754826, %v406
        %v413 = vshrl.u32 2131351028, %v407
        %v414 = vor.u32 %v412, %v413
        %v415 = vshll.u32 2131351028, %v406
        %v416 = vshrl.u32 2102212464, %v407
        %v417 = vor.u32 %v415, %v416
        %v418 = vshll.u32 2102212464, %v406
        %v419 = vshrl.u32 920167782, %v407
        %v420 = vor.u32 %v418, %v419
        %v421 = vshll.u32 920167782, %v406
        %v422 = vshrl.u32 1326507024, %v407
        %v423 = vor.u32 %v421, %v422
        %vm424 = vcmp.lt.s32.totalorder %v405, 1
        %vm425 = vcmp.lt.s32.totalorder %v405, 2
        %vm426 = vcmp.lt.s32.totalorder %v405, 3
        %vm427 = vcmp.lt.s32.totalorder %v405, 4
        %v428 = vsel %vm424, %v408, %v411
        %v429 = vsel %vm427, %v417, 2102212464
        %v430 = vsel %vm426, %v414, %v429
        %v431 = vsel %vm425, %v428, %v430
        %v432 = vsel %vm424, %v411, %v414
        %v433 = vsel %vm427, %v420, 920167782
        %v434 = vsel %vm426, %v417, %v433
        %v435 = vsel %vm425, %v432, %v434
        %v436 = vsel %vm424, %v414, %v417
        %v437 = vsel %vm427, %v423, 1326507024
        %v438 = vsel %vm426, %v420, %v437
        %v439 = vsel %vm425, %v436, %v438
        %v440 = vshll.u32 %v400, 8
        %v441 = vmul.u32.u64.compose %v440, %v439
        %v442 = vextract.low.u32 %v441
        %v443 = vextract.high.u32 %v441
        %v444 = vmul.u32.u64.compose %v440, %v435
        %v445 = vextract.low.u32 %v444
        %v446 = vextract.high.u32 %v444
        %v447 = vmul.u32 %v440, %v431
        %v448 = vadd.s32 %v443, %v445
        %vm449 = vc.u32 %v443, %v445
        %v450 = vadd.s32 %v446, 1
        %v451 = vsel %vm449, %v450, %v446
        %v452 = vadd.s32 %v447, %v451
        %v453 = vadd.s32 %v452, 536870912
        %v454 = vshrl.u32 %v453, 30
        %v455 = vshll.u32 %v454, 30
        %v456 = vsub.s32 %v452, %v455
        %vm457 = vcmp.lt.s32.totalorder %v456, 0
        %v458 = vsub.s32 0, %v456
        %v459 = vsel %vm457, %v458, %v456
        %v460 = vclz %v459
        %v461 = vsub.s32 %v460, 2
        %vm462 = vcmp.gt.s32.totalorder 0, %v461
        %v463 = vsel %vm462, 0, %v461
        %v464 = vsub.s32 32, %v463
        %v465 = vshll.u32 %v456, %v463
        %v466 = vshrl.u32 %v448, %v464
        %v467 = vor.u32 %v465, %v466
        %v468 = vsub.s32 4294967266, %v463
        %v469 = vadd.s32 %v468, 127
        %v470 = vshll.u32 %v469, 23
        %v471 = vor.u32 4788187, %v470
        %v472 = vand.u32 2147483647, %v471
        %v474 = vcvt.s32.f32 %v467
        %v475 = vmul.f32 %v474, %v472
        %v476 = vxor.u32 %v475, 2147483648
        %v477 = vsel %vm394, %v476, %v475
        %v478 = vsub.s32 4, %v454
        %v479 = vsel %vm394, %v478, %v454
        %v480 = vsel %vm393, %v258, %v477
        %v481 = vsel %vm393, 0, %v479
        %v482 = vcosq.f32.pop %v480
        %v483 = vsinq.f32.pop %v480
        %vm484 = vweird.f32 %v258
        %v485 = vand.u32 %v481, 3
        %vm486 = vcmp.lt.s32.totalorder %v485, 2
        %vm487 = vcmp.eq.s32.totalorder %v485, 0
        %v488 = vxor.u32 %v483, 2147483648
        %v489 = vsel %vm487, %v482, %v488
        %vm490 = vcmp.eq.s32.totalorder %v485, 2
        %v491 = vxor.u32 %v482, 2147483648
        %v492 = vsel %vm490, %v491, %v483
        %v493 = vsel %vm486, %v489, %v492
        %v494 = vsel %vm484, nan, %v493
        %v495 = vand.u32 2147483647, %v259
        %vm496 = vcmp.le.f32.partialorder %v495, 0.7853982
        %vm497 = vcmp.lt.s32.totalorder %v259, 0
        %v498 = vand.u32 %v259, 2139095040
        %v499 = vshrl.u32 %v498, 23
        %v500 = vsub.s32 %v499, 127
        %v501 = vand.u32 2147483647, %v259
        %v502 = vand.u32 %v501, 8388607
        %v503 = vor.u32 %v502, 8388608
        %v504 = vsub.s32 0, %v503
        %v505 = vadd.s32 %v500, 1
        %vm506 = vcmp.gt.s32.totalorder %v505, 0
        %v507 = vsel %vm506, %v505, 0
        %v508 = vshrl.u32 %v507, 5
        %v509 = vand.u32 %v507, 31
        %v510 = vsub.s32 32, %v509
        %v511 = vshrl.u32 683565275, %v510
        %v512 = vshll.u32 683565275, %v509
        %v513 = vshrl.u32 2475754826, %v510
        %v514 = vor.u32 %v512, %v513
        %v515 = vshll.u32 2475754826, %v509
        %v516 = vshrl.u32 2131351028, %v510
        %v517 = vor.u32 %v515, %v516
        %v518 = vshll.u32 2131351028, %v509
        %v519 = vshrl.u32 2102212464, %v510
        %v520 = vor.u32 %v518, %v519
        %v521 = vshll.u32 2102212464, %v509
        %v522 = vshrl.u32 920167782, %v510
        %v523 = vor.u32 %v521, %v522
        %v524 = vshll.u32 920167782, %v509
        %v525 = vshrl.u32 1326507024, %v510
        %v526 = vor.u32 %v524, %v525
        %vm527 = vcmp.lt.s32.totalorder %v508, 1
        %vm528 = vcmp.lt.s32.totalorder %v508, 2
        %vm529 = vcmp.lt.s32.totalorder %v508, 3
        %vm530 = vcmp.lt.s32.totalorder %v508, 4
        %v531 = vsel %vm527, %v511, %v514
        %v532 = vsel %vm530, %v520, 2102212464
        %v533 = vsel %vm529, %v517, %v532
        %v534 = vsel %vm528, %v531, %v533
        %v535 = vsel %vm527, %v514, %v517
        %v536 = vsel %vm530, %v523, 920167782
        %v537 = vsel %vm529, %v520, %v536
        %v538 = vsel %vm528, %v535, %v537
        %v539 = vsel %vm527, %v517, %v520
        %v540 = vsel %vm530, %v526, 1326507024
        %v541 = vsel %vm529, %v523, %v540
        %v542 = vsel %vm528, %v539, %v541
        %v543 = vshll.u32 %v503, 8
        %v544 = vmul.u32.u64.compose %v543, %v542
        %v545 = vextract.low.u32 %v544
        %v546 = vextract.high.u32 %v544
        %v547 = vmul.u32.u64.compose %v543, %v538
        %v548 = vextract.low.u32 %v547
        %v549 = vextract.high.u32 %v547
        %v550 = vmul.u32 %v543, %v534
        %v551 = vadd.s32 %v546, %v548
        %vm552 = vc.u32 %v546, %v548
        %v553 = vadd.s32 %v549, 1
        %v554 = vsel %vm552, %v553, %v549
        %v555 = vadd.s32 %v550, %v554
        %v556 = vadd.s32 %v555, 536870912
        %v557 = vshrl.u32 %v556, 30
        %v558 = vshll.u32 %v557, 30
        %v559 = vsub.s32 %v555, %v558
        %vm560 = vcmp.lt.s32.totalorder %v559, 0
        %v561 = vsub.s32 0, %v559
        %v562 = vsel %vm560, %v561, %v559
        %v563 = vclz %v562
        %v564 = vsub.s32 %v563, 2
        %vm565 = vcmp.gt.s32.totalorder 0, %v564
        %v566 = vsel %vm565, 0, %v564
        %v567 = vsub.s32 32, %v566
        %v568 = vshll.u32 %v559, %v566
        %v569 = vshrl.u32 %v551, %v567
        %v570 = vor.u32 %v568, %v569
        %v571 = vsub.s32 4294967266, %v566
        %v572 = vadd.s32 %v571, 127
        %v573 = vshll.u32 %v572, 23
        %v574 = vor.u32 4788187, %v573
        %v575 = vand.u32 2147483647, %v574
        %v577 = vcvt.s32.f32 %v570
        %v578 = vmul.f32 %v577, %v575
        %v579 = vxor.u32 %v578, 2147483648
        %v580 = vsel %vm497, %v579, %v578
        %v581 = vsub.s32 4, %v557
        %v582 = vsel %vm497, %v581, %v557
        %v583 = vsel %vm496, %v259, %v580
        %v584 = vsel %vm496, 0, %v582
        %v585 = vcosq.f32.pop %v583
        %v586 = vsinq.f32.pop %v583
        %vm587 = vweird.f32 %v259
        %v588 = vand.u32 %v584, 3
        %vm589 = vcmp.lt.s32.totalorder %v588, 2
        %vm590 = vcmp.eq.s32.totalorder %v588, 0
        %v591 = vxor.u32 %v586, 2147483648
        %v592 = vsel %vm590, %v585, %v591
        %vm593 = vcmp.eq.s32.totalorder %v588, 2
        %v594 = vxor.u32 %v585, 2147483648
        %v595 = vsel %vm593, %v594, %v586
        %v596 = vsel %vm589, %v592, %v595
        %v597 = vsel %vm587, nan, %v596
        %v598 = vand.u32 2147483647, %v260
        %vm599 = vcmp.le.f32.partialorder %v598, 0.7853982
        %vm600 = vcmp.lt.s32.totalorder %v260, 0
        %v601 = vand.u32 %v260, 2139095040
        %v602 = vshrl.u32 %v601, 23
        %v603 = vsub.s32 %v602, 127
        %v604 = vand.u32 2147483647, %v260
        %v605 = vand.u32 %v604, 8388607
        %v606 = vor.u32 %v605, 8388608
        %v607 = vsub.s32 0, %v606
        %v608 = vadd.s32 %v603, 1
        %vm609 = vcmp.gt.s32.totalorder %v608, 0
        %v610 = vsel %vm609, %v608, 0
        %v611 = vshrl.u32 %v610, 5
        %v612 = vand.u32 %v610, 31
        %v613 = vsub.s32 32, %v612
        %v614 = vshrl.u32 683565275, %v613
        %v615 = vshll.u32 683565275, %v612
        %v616 = vshrl.u32 2475754826, %v613
        %v617 = vor.u32 %v615, %v616
        %v618 = vshll.u32 2475754826, %v612
        %v619 = vshrl.u32 2131351028, %v613
        %v620 = vor.u32 %v618, %v619
        %v621 = vshll.u32 2131351028, %v612
        %v622 = vshrl.u32 2102212464, %v613
        %v623 = vor.u32 %v621, %v622
        %v624 = vshll.u32 2102212464, %v612
        %v625 = vshrl.u32 920167782, %v613
        %v626 = vor.u32 %v624, %v625
        %v627 = vshll.u32 920167782, %v612
        %v628 = vshrl.u32 1326507024, %v613
        %v629 = vor.u32 %v627, %v628
        %vm630 = vcmp.lt.s32.totalorder %v611, 1
        %vm631 = vcmp.lt.s32.totalorder %v611, 2
        %vm632 = vcmp.lt.s32.totalorder %v611, 3
        %vm633 = vcmp.lt.s32.totalorder %v611, 4
        %v634 = vsel %vm630, %v614, %v617
        %v635 = vsel %vm633, %v623, 2102212464
        %v636 = vsel %vm632, %v620, %v635
        %v637 = vsel %vm631, %v634, %v636
        %v638 = vsel %vm630, %v617, %v620
        %v639 = vsel %vm633, %v626, 920167782
        %v640 = vsel %vm632, %v623, %v639
        %v641 = vsel %vm631, %v638, %v640
        %v642 = vsel %vm630, %v620, %v623
        %v643 = vsel %vm633, %v629, 1326507024
        %v644 = vsel %vm632, %v626, %v643
        %v645 = vsel %vm631, %v642, %v644
        %v646 = vshll.u32 %v606, 8
        %v647 = vmul.u32.u64.compose %v646, %v645
        %v648 = vextract.low.u32 %v647
        %v649 = vextract.high.u32 %v647
        %v650 = vmul.u32.u64.compose %v646, %v641
        %v651 = vextract.low.u32 %v650
        %v652 = vextract.high.u32 %v650
        %v653 = vmul.u32 %v646, %v637
        %v654 = vadd.s32 %v649, %v651
        %vm655 = vc.u32 %v649, %v651
        %v656 = vadd.s32 %v652, 1
        %v657 = vsel %vm655, %v656, %v652
        %v658 = vadd.s32 %v653, %v657
        %v659 = vadd.s32 %v658, 536870912
        %v660 = vshrl.u32 %v659, 30
        %v661 = vshll.u32 %v660, 30
        %v662 = vsub.s32 %v658, %v661
        %vm663 = vcmp.lt.s32.totalorder %v662, 0
        %v664 = vsub.s32 0, %v662
        %v665 = vsel %vm663, %v664, %v662
        %v666 = vclz %v665
        %v667 = vsub.s32 %v666, 2
        %vm668 = vcmp.gt.s32.totalorder 0, %v667
        %v669 = vsel %vm668, 0, %v667
        %v670 = vsub.s32 32, %v669
        %v671 = vshll.u32 %v662, %v669
        %v672 = vshrl.u32 %v654, %v670
        %v673 = vor.u32 %v671, %v672
        %v674 = vsub.s32 4294967266, %v669
        %v675 = vadd.s32 %v674, 127
        %v676 = vshll.u32 %v675, 23
        %v677 = vor.u32 4788187, %v676
        %v678 = vand.u32 2147483647, %v677
        %v680 = vcvt.s32.f32 %v673
        %v681 = vmul.f32 %v680, %v678
        %v682 = vxor.u32 %v681, 2147483648
        %v683 = vsel %vm600, %v682, %v681
        %v684 = vsub.s32 4, %v660
        %v685 = vsel %vm600, %v684, %v660
        %v686 = vsel %vm599, %v260, %v683
        %v687 = vsel %vm599, 0, %v685
        %v688 = vcosq.f32.pop %v686
        %v689 = vsinq.f32.pop %v686
        %vm690 = vweird.f32 %v260
        %v691 = vand.u32 %v687, 3
        %vm692 = vcmp.lt.s32.totalorder %v691, 2
        %vm693 = vcmp.eq.s32.totalorder %v691, 0
        %v694 = vxor.u32 %v689, 2147483648
        %v695 = vsel %vm693, %v688, %v694
        %vm696 = vcmp.eq.s32.totalorder %v691, 2
        %v697 = vxor.u32 %v688, 2147483648
        %v698 = vsel %vm696, %v697, %v689
        %v699 = vsel %vm692, %v695, %v698
        %v700 = vsel %vm690, nan, %v699
        %v701 = vand.u32 2147483647, %v261
        %vm702 = vcmp.le.f32.partialorder %v701, 0.7853982
        %vm703 = vcmp.lt.s32.totalorder %v261, 0
        %v704 = vand.u32 %v261, 2139095040
        %v705 = vshrl.u32 %v704, 23
        %v706 = vsub.s32 %v705, 127
        %v707 = vand.u32 2147483647, %v261
        %v708 = vand.u32 %v707, 8388607
        %v709 = vor.u32 %v708, 8388608
        %v710 = vsub.s32 0, %v709
        %v711 = vadd.s32 %v706, 1
        %vm712 = vcmp.gt.s32.totalorder %v711, 0
        %v713 = vsel %vm712, %v711, 0
        %v714 = vshrl.u32 %v713, 5
        %v715 = vand.u32 %v713, 31
        %v716 = vsub.s32 32, %v715
        %v717 = vshrl.u32 683565275, %v716
        %v718 = vshll.u32 683565275, %v715
        %v719 = vshrl.u32 2475754826, %v716
        %v720 = vor.u32 %v718, %v719
        %v721 = vshll.u32 2475754826, %v715
        %v722 = vshrl.u32 2131351028, %v716
        %v723 = vor.u32 %v721, %v722
        %v724 = vshll.u32 2131351028, %v715
        %v725 = vshrl.u32 2102212464, %v716
        %v726 = vor.u32 %v724, %v725
        %v727 = vshll.u32 2102212464, %v715
        %v728 = vshrl.u32 920167782, %v716
        %v729 = vor.u32 %v727, %v728
        %v730 = vshll.u32 920167782, %v715
        %v731 = vshrl.u32 1326507024, %v716
        %v732 = vor.u32 %v730, %v731
        %vm733 = vcmp.lt.s32.totalorder %v714, 1
        %vm734 = vcmp.lt.s32.totalorder %v714, 2
        %vm735 = vcmp.lt.s32.totalorder %v714, 3
        %vm736 = vcmp.lt.s32.totalorder %v714, 4
        %v737 = vsel %vm733, %v717, %v720
        %v738 = vsel %vm736, %v726, 2102212464
        %v739 = vsel %vm735, %v723, %v738
        %v740 = vsel %vm734, %v737, %v739
        %v741 = vsel %vm733, %v720, %v723
        %v742 = vsel %vm736, %v729, 920167782
        %v743 = vsel %vm735, %v726, %v742
        %v744 = vsel %vm734, %v741, %v743
        %v745 = vsel %vm733, %v723, %v726
        %v746 = vsel %vm736, %v732, 1326507024
        %v747 = vsel %vm735, %v729, %v746
        %v748 = vsel %vm734, %v745, %v747
        %v749 = vshll.u32 %v709, 8
        %v750 = vmul.u32.u64.compose %v749, %v748
        %v751 = vextract.low.u32 %v750
        %v752 = vextract.high.u32 %v750
        %v753 = vmul.u32.u64.compose %v749, %v744
        %v754 = vextract.low.u32 %v753
        %v755 = vextract.high.u32 %v753
        %v756 = vmul.u32 %v749, %v740
        %v757 = vadd.s32 %v752, %v754
        %vm758 = vc.u32 %v752, %v754
        %v759 = vadd.s32 %v755, 1
        %v760 = vsel %vm758, %v759, %v755
        %v761 = vadd.s32 %v756, %v760
        %v762 = vadd.s32 %v761, 536870912
        %v763 = vshrl.u32 %v762, 30
        %v764 = vshll.u32 %v763, 30
        %v765 = vsub.s32 %v761, %v764
        %vm766 = vcmp.lt.s32.totalorder %v765, 0
        %v767 = vsub.s32 0, %v765
        %v768 = vsel %vm766, %v767, %v765
        %v769 = vclz %v768
        %v770 = vsub.s32 %v769, 2
        %vm771 = vcmp.gt.s32.totalorder 0, %v770
        %v772 = vsel %vm771, 0, %v770
        %v773 = vsub.s32 32, %v772
        %v774 = vshll.u32 %v765, %v772
        %v775 = vshrl.u32 %v757, %v773
        %v776 = vor.u32 %v774, %v775
        %v777 = vsub.s32 4294967266, %v772
        %v778 = vadd.s32 %v777, 127
        %v779 = vshll.u32 %v778, 23
        %v780 = vor.u32 4788187, %v779
        %v781 = vand.u32 2147483647, %v780
        %v783 = vcvt.s32.f32 %v776
        %v784 = vmul.f32 %v783, %v781
        %v785 = vxor.u32 %v784, 2147483648
        %v786 = vsel %vm703, %v785, %v784
        %v787 = vsub.s32 4, %v763
        %v788 = vsel %vm703, %v787, %v763
        %v789 = vsel %vm702, %v261, %v786
        %v790 = vsel %vm702, 0, %v788
        %v791 = vcosq.f32.pop %v789
        %v792 = vsinq.f32.pop %v789
        %vm793 = vweird.f32 %v261
        %v794 = vand.u32 %v790, 3
        %vm795 = vcmp.lt.s32.totalorder %v794, 2
        %vm796 = vcmp.eq.s32.totalorder %v794, 0
        %v797 = vxor.u32 %v792, 2147483648
        %v798 = vsel %vm796, %v791, %v797
        %vm799 = vcmp.eq.s32.totalorder %v794, 2
        %v800 = vxor.u32 %v791, 2147483648
        %v801 = vsel %vm799, %v800, %v792
        %v802 = vsel %vm795, %v798, %v801
        %v803 = vsel %vm793, nan, %v802
        %v804 = vand.u32 2147483647, %v262
        %vm805 = vcmp.le.f32.partialorder %v804, 0.7853982
        %vm806 = vcmp.lt.s32.totalorder %v262, 0
        %v807 = vand.u32 %v262, 2139095040
        %v808 = vshrl.u32 %v807, 23
        %v809 = vsub.s32 %v808, 127
        %v810 = vand.u32 2147483647, %v262
        %v811 = vand.u32 %v810, 8388607
        %v812 = vor.u32 %v811, 8388608
        %v813 = vsub.s32 0, %v812
        %v814 = vadd.s32 %v809, 1
        %vm815 = vcmp.gt.s32.totalorder %v814, 0
        %v816 = vsel %vm815, %v814, 0
        %v817 = vshrl.u32 %v816, 5
        %v818 = vand.u32 %v816, 31
        %v819 = vsub.s32 32, %v818
        %v820 = vshrl.u32 683565275, %v819
        %v821 = vshll.u32 683565275, %v818
        %v822 = vshrl.u32 2475754826, %v819
        %v823 = vor.u32 %v821, %v822
        %v824 = vshll.u32 2475754826, %v818
        %v825 = vshrl.u32 2131351028, %v819
        %v826 = vor.u32 %v824, %v825
        %v827 = vshll.u32 2131351028, %v818
        %v828 = vshrl.u32 2102212464, %v819
        %v829 = vor.u32 %v827, %v828
        %v830 = vshll.u32 2102212464, %v818
        %v831 = vshrl.u32 920167782, %v819
        %v832 = vor.u32 %v830, %v831
        %v833 = vshll.u32 920167782, %v818
        %v834 = vshrl.u32 1326507024, %v819
        %v835 = vor.u32 %v833, %v834
        %vm836 = vcmp.lt.s32.totalorder %v817, 1
        %vm837 = vcmp.lt.s32.totalorder %v817, 2
        %vm838 = vcmp.lt.s32.totalorder %v817, 3
        %vm839 = vcmp.lt.s32.totalorder %v817, 4
        %v840 = vsel %vm836, %v820, %v823
        %v841 = vsel %vm839, %v829, 2102212464
        %v842 = vsel %vm838, %v826, %v841
        %v843 = vsel %vm837, %v840, %v842
        %v844 = vsel %vm836, %v823, %v826
        %v845 = vsel %vm839, %v832, 920167782
        %v846 = vsel %vm838, %v829, %v845
        %v847 = vsel %vm837, %v844, %v846
        %v848 = vsel %vm836, %v826, %v829
        %v849 = vsel %vm839, %v835, 1326507024
        %v850 = vsel %vm838, %v832, %v849
        %v851 = vsel %vm837, %v848, %v850
        %v852 = vshll.u32 %v812, 8
        %v853 = vmul.u32.u64.compose %v852, %v851
        %v854 = vextract.low.u32 %v853
        %v855 = vextract.high.u32 %v853
        %v856 = vmul.u32.u64.compose %v852, %v847
        %v857 = vextract.low.u32 %v856
        %v858 = vextract.high.u32 %v856
        %v859 = vmul.u32 %v852, %v843
        %v860 = vadd.s32 %v855, %v857
        %vm861 = vc.u32 %v855, %v857
        %v862 = vadd.s32 %v858, 1
        %v863 = vsel %vm861, %v862, %v858
        %v864 = vadd.s32 %v859, %v863
        %v865 = vadd.s32 %v864, 536870912
        %v866 = vshrl.u32 %v865, 30
        %v867 = vshll.u32 %v866, 30
        %v868 = vsub.s32 %v864, %v867
        %vm869 = vcmp.lt.s32.totalorder %v868, 0
        %v870 = vsub.s32 0, %v868
        %v871 = vsel %vm869, %v870, %v868
        %v872 = vclz %v871
        %v873 = vsub.s32 %v872, 2
        %vm874 = vcmp.gt.s32.totalorder 0, %v873
        %v875 = vsel %vm874, 0, %v873
        %v876 = vsub.s32 32, %v875
        %v877 = vshll.u32 %v868, %v875
        %v878 = vshrl.u32 %v860, %v876
        %v879 = vor.u32 %v877, %v878
        %v880 = vsub.s32 4294967266, %v875
        %v881 = vadd.s32 %v880, 127
        %v882 = vshll.u32 %v881, 23
        %v883 = vor.u32 4788187, %v882
        %v884 = vand.u32 2147483647, %v883
        %v886 = vcvt.s32.f32 %v879
        %v887 = vmul.f32 %v886, %v884
        %v888 = vxor.u32 %v887, 2147483648
        %v889 = vsel %vm806, %v888, %v887
        %v890 = vsub.s32 4, %v866
        %v891 = vsel %vm806, %v890, %v866
        %v892 = vsel %vm805, %v262, %v889
        %v893 = vsel %vm805, 0, %v891
        %v894 = vcosq.f32.pop %v892
        %v895 = vsinq.f32.pop %v892
        %vm896 = vweird.f32 %v262
        %v897 = vand.u32 %v893, 3
        %vm898 = vcmp.lt.s32.totalorder %v897, 2
        %vm899 = vcmp.eq.s32.totalorder %v897, 0
        %v900 = vxor.u32 %v895, 2147483648
        %v901 = vsel %vm899, %v894, %v900
        %vm902 = vcmp.eq.s32.totalorder %v897, 2
        %v903 = vxor.u32 %v894, 2147483648
        %v904 = vsel %vm902, %v903, %v895
        %v905 = vsel %vm898, %v901, %v904
        %v906 = vsel %vm896, nan, %v905
        %v907 = vand.u32 2147483647, %v263
        %vm908 = vcmp.le.f32.partialorder %v907, 0.7853982
        %vm909 = vcmp.lt.s32.totalorder %v263, 0
        %v910 = vand.u32 %v263, 2139095040
        %v911 = vshrl.u32 %v910, 23
        %v912 = vsub.s32 %v911, 127
        %v913 = vand.u32 2147483647, %v263
        %v914 = vand.u32 %v913, 8388607
        %v915 = vor.u32 %v914, 8388608
        %v916 = vsub.s32 0, %v915
        %v917 = vadd.s32 %v912, 1
        %vm918 = vcmp.gt.s32.totalorder %v917, 0
        %v919 = vsel %vm918, %v917, 0
        %v920 = vshrl.u32 %v919, 5
        %v921 = vand.u32 %v919, 31
        %v922 = vsub.s32 32, %v921
        %v923 = vshrl.u32 683565275, %v922
        %v924 = vshll.u32 683565275, %v921
        %v925 = vshrl.u32 2475754826, %v922
        %v926 = vor.u32 %v924, %v925
        %v927 = vshll.u32 2475754826, %v921
        %v928 = vshrl.u32 2131351028, %v922
        %v929 = vor.u32 %v927, %v928
        %v930 = vshll.u32 2131351028, %v921
        %v931 = vshrl.u32 2102212464, %v922
        %v932 = vor.u32 %v930, %v931
        %v933 = vshll.u32 2102212464, %v921
        %v934 = vshrl.u32 920167782, %v922
        %v935 = vor.u32 %v933, %v934
        %v936 = vshll.u32 920167782, %v921
        %v937 = vshrl.u32 1326507024, %v922
        %v938 = vor.u32 %v936, %v937
        %vm939 = vcmp.lt.s32.totalorder %v920, 1
        %vm940 = vcmp.lt.s32.totalorder %v920, 2
        %vm941 = vcmp.lt.s32.totalorder %v920, 3
        %vm942 = vcmp.lt.s32.totalorder %v920, 4
        %v943 = vsel %vm939, %v923, %v926
        %v944 = vsel %vm942, %v932, 2102212464
        %v945 = vsel %vm941, %v929, %v944
        %v946 = vsel %vm940, %v943, %v945
        %v947 = vsel %vm939, %v926, %v929
        %v948 = vsel %vm942, %v935, 920167782
        %v949 = vsel %vm941, %v932, %v948
        %v950 = vsel %vm940, %v947, %v949
        %v951 = vsel %vm939, %v929, %v932
        %v952 = vsel %vm942, %v938, 1326507024
        %v953 = vsel %vm941, %v935, %v952
        %v954 = vsel %vm940, %v951, %v953
        %v955 = vshll.u32 %v915, 8
        %v956 = vmul.u32.u64.compose %v955, %v954
        %v957 = vextract.low.u32 %v956
        %v958 = vextract.high.u32 %v956
        %v959 = vmul.u32.u64.compose %v955, %v950
        %v960 = vextract.low.u32 %v959
        %v961 = vextract.high.u32 %v959
        %v962 = vmul.u32 %v955, %v946
        %v963 = vadd.s32 %v958, %v960
        %vm964 = vc.u32 %v958, %v960
        %v965 = vadd.s32 %v961, 1
        %v966 = vsel %vm964, %v965, %v961
        %v967 = vadd.s32 %v962, %v966
        %v968 = vadd.s32 %v967, 536870912
        %v969 = vshrl.u32 %v968, 30
        %v970 = vshll.u32 %v969, 30
        %v971 = vsub.s32 %v967, %v970
        %vm972 = vcmp.lt.s32.totalorder %v971, 0
        %v973 = vsub.s32 0, %v971
        %v974 = vsel %vm972, %v973, %v971
        %v975 = vclz %v974
        %v976 = vsub.s32 %v975, 2
        %vm977 = vcmp.gt.s32.totalorder 0, %v976
        %v978 = vsel %vm977, 0, %v976
        %v979 = vsub.s32 32, %v978
        %v980 = vshll.u32 %v971, %v978
        %v981 = vshrl.u32 %v963, %v979
        %v982 = vor.u32 %v980, %v981
        %v983 = vsub.s32 4294967266, %v978
        %v984 = vadd.s32 %v983, 127
        %v985 = vshll.u32 %v984, 23
        %v986 = vor.u32 4788187, %v985
        %v987 = vand.u32 2147483647, %v986
        %v989 = vcvt.s32.f32 %v982
        %v990 = vmul.f32 %v989, %v987
        %v991 = vxor.u32 %v990, 2147483648
        %v992 = vsel %vm909, %v991, %v990
        %v993 = vsub.s32 4, %v969
        %v994 = vsel %vm909, %v993, %v969
        %v995 = vsel %vm908, %v263, %v992
        %v996 = vsel %vm908, 0, %v994
        %v997 = vcosq.f32.pop %v995
        %v998 = vsinq.f32.pop %v995
        %vm999 = vweird.f32 %v263
        %v1000 = vand.u32 %v996, 3
        %vm1001 = vcmp.lt.s32.totalorder %v1000, 2
        %vm1002 = vcmp.eq.s32.totalorder %v1000, 0
        %v1003 = vxor.u32 %v998, 2147483648
        %v1004 = vsel %vm1002, %v997, %v1003
        %vm1005 = vcmp.eq.s32.totalorder %v1000, 2
        %v1006 = vxor.u32 %v997, 2147483648
        %v1007 = vsel %vm1005, %v1006, %v998
        %v1008 = vsel %vm1001, %v1004, %v1007
        %v1009 = vsel %vm999, nan, %v1008
        %v1010 = vand.u32 2147483647, %v264
        %vm1011 = vcmp.le.f32.partialorder %v1010, 0.7853982
        %vm1012 = vcmp.lt.s32.totalorder %v264, 0
        %v1013 = vand.u32 %v264, 2139095040
        %v1014 = vshrl.u32 %v1013, 23
        %v1015 = vsub.s32 %v1014, 127
        %v1016 = vand.u32 2147483647, %v264
        %v1017 = vand.u32 %v1016, 8388607
        %v1018 = vor.u32 %v1017, 8388608
        %v1019 = vsub.s32 0, %v1018
        %v1020 = vadd.s32 %v1015, 1
        %vm1021 = vcmp.gt.s32.totalorder %v1020, 0
        %v1022 = vsel %vm1021, %v1020, 0
        %v1023 = vshrl.u32 %v1022, 5
        %v1024 = vand.u32 %v1022, 31
        %v1025 = vsub.s32 32, %v1024
        %v1026 = vshrl.u32 683565275, %v1025
        %v1027 = vshll.u32 683565275, %v1024
        %v1028 = vshrl.u32 2475754826, %v1025
        %v1029 = vor.u32 %v1027, %v1028
        %v1030 = vshll.u32 2475754826, %v1024
        %v1031 = vshrl.u32 2131351028, %v1025
        %v1032 = vor.u32 %v1030, %v1031
        %v1033 = vshll.u32 2131351028, %v1024
        %v1034 = vshrl.u32 2102212464, %v1025
        %v1035 = vor.u32 %v1033, %v1034
        %v1036 = vshll.u32 2102212464, %v1024
        %v1037 = vshrl.u32 920167782, %v1025
        %v1038 = vor.u32 %v1036, %v1037
        %v1039 = vshll.u32 920167782, %v1024
        %v1040 = vshrl.u32 1326507024, %v1025
        %v1041 = vor.u32 %v1039, %v1040
        %vm1042 = vcmp.lt.s32.totalorder %v1023, 1
        %vm1043 = vcmp.lt.s32.totalorder %v1023, 2
        %vm1044 = vcmp.lt.s32.totalorder %v1023, 3
        %vm1045 = vcmp.lt.s32.totalorder %v1023, 4
        %v1046 = vsel %vm1042, %v1026, %v1029
        %v1047 = vsel %vm1045, %v1035, 2102212464
        %v1048 = vsel %vm1044, %v1032, %v1047
        %v1049 = vsel %vm1043, %v1046, %v1048
        %v1050 = vsel %vm1042, %v1029, %v1032
        %v1051 = vsel %vm1045, %v1038, 920167782
        %v1052 = vsel %vm1044, %v1035, %v1051
        %v1053 = vsel %vm1043, %v1050, %v1052
        %v1054 = vsel %vm1042, %v1032, %v1035
        %v1055 = vsel %vm1045, %v1041, 1326507024
        %v1056 = vsel %vm1044, %v1038, %v1055
        %v1057 = vsel %vm1043, %v1054, %v1056
        %v1058 = vshll.u32 %v1018, 8
        %v1059 = vmul.u32.u64.compose %v1058, %v1057
        %v1060 = vextract.low.u32 %v1059
        %v1061 = vextract.high.u32 %v1059
        %v1062 = vmul.u32.u64.compose %v1058, %v1053
        %v1063 = vextract.low.u32 %v1062
        %v1064 = vextract.high.u32 %v1062
        %v1065 = vmul.u32 %v1058, %v1049
        %v1066 = vadd.s32 %v1061, %v1063
        %vm1067 = vc.u32 %v1061, %v1063
        %v1068 = vadd.s32 %v1064, 1
        %v1069 = vsel %vm1067, %v1068, %v1064
        %v1070 = vadd.s32 %v1065, %v1069
        %v1071 = vadd.s32 %v1070, 536870912
        %v1072 = vshrl.u32 %v1071, 30
        %v1073 = vshll.u32 %v1072, 30
        %v1074 = vsub.s32 %v1070, %v1073
        %vm1075 = vcmp.lt.s32.totalorder %v1074, 0
        %v1076 = vsub.s32 0, %v1074
        %v1077 = vsel %vm1075, %v1076, %v1074
        %v1078 = vclz %v1077
        %v1079 = vsub.s32 %v1078, 2
        %vm1080 = vcmp.gt.s32.totalorder 0, %v1079
        %v1081 = vsel %vm1080, 0, %v1079
        %v1082 = vsub.s32 32, %v1081
        %v1083 = vshll.u32 %v1074, %v1081
        %v1084 = vshrl.u32 %v1066, %v1082
        %v1085 = vor.u32 %v1083, %v1084
        %v1086 = vsub.s32 4294967266, %v1081
        %v1087 = vadd.s32 %v1086, 127
        %v1088 = vshll.u32 %v1087, 23
        %v1089 = vor.u32 4788187, %v1088
        %v1090 = vand.u32 2147483647, %v1089
        %v1092 = vcvt.s32.f32 %v1085
        %v1093 = vmul.f32 %v1092, %v1090
        %v1094 = vxor.u32 %v1093, 2147483648
        %v1095 = vsel %vm1012, %v1094, %v1093
        %v1096 = vsub.s32 4, %v1072
        %v1097 = vsel %vm1012, %v1096, %v1072
        %v1098 = vsel %vm1011, %v264, %v1095
        %v1099 = vsel %vm1011, 0, %v1097
        %v1100 = vcosq.f32.pop %v1098
        %v1101 = vsinq.f32.pop %v1098
        %vm1102 = vweird.f32 %v264
        %v1103 = vand.u32 %v1099, 3
        %vm1104 = vcmp.lt.s32.totalorder %v1103, 2
        %vm1105 = vcmp.eq.s32.totalorder %v1103, 0
        %v1106 = vxor.u32 %v1101, 2147483648
        %v1107 = vsel %vm1105, %v1100, %v1106
        %vm1108 = vcmp.eq.s32.totalorder %v1103, 2
        %v1109 = vxor.u32 %v1100, 2147483648
        %v1110 = vsel %vm1108, %v1109, %v1101
        %v1111 = vsel %vm1104, %v1107, %v1110
        %v1112 = vsel %vm1102, nan, %v1111
        %v1113 = vand.u32 2147483647, %v265
        %vm1114 = vcmp.le.f32.partialorder %v1113, 0.7853982
        %vm1115 = vcmp.lt.s32.totalorder %v265, 0
        %v1116 = vand.u32 %v265, 2139095040
        %v1117 = vshrl.u32 %v1116, 23
        %v1118 = vsub.s32 %v1117, 127
        %v1119 = vand.u32 2147483647, %v265
        %v1120 = vand.u32 %v1119, 8388607
        %v1121 = vor.u32 %v1120, 8388608
        %v1122 = vsub.s32 0, %v1121
        %v1123 = vadd.s32 %v1118, 1
        %vm1124 = vcmp.gt.s32.totalorder %v1123, 0
        %v1125 = vsel %vm1124, %v1123, 0
        %v1126 = vshrl.u32 %v1125, 5
        %v1127 = vand.u32 %v1125, 31
        %v1128 = vsub.s32 32, %v1127
        %v1129 = vshrl.u32 683565275, %v1128
        %v1130 = vshll.u32 683565275, %v1127
        %v1131 = vshrl.u32 2475754826, %v1128
        %v1132 = vor.u32 %v1130, %v1131
        %v1133 = vshll.u32 2475754826, %v1127
        %v1134 = vshrl.u32 2131351028, %v1128
        %v1135 = vor.u32 %v1133, %v1134
        %v1136 = vshll.u32 2131351028, %v1127
        %v1137 = vshrl.u32 2102212464, %v1128
        %v1138 = vor.u32 %v1136, %v1137
        %v1139 = vshll.u32 2102212464, %v1127
        %v1140 = vshrl.u32 920167782, %v1128
        %v1141 = vor.u32 %v1139, %v1140
        %v1142 = vshll.u32 920167782, %v1127
        %v1143 = vshrl.u32 1326507024, %v1128
        %v1144 = vor.u32 %v1142, %v1143
        %vm1145 = vcmp.lt.s32.totalorder %v1126, 1
        %vm1146 = vcmp.lt.s32.totalorder %v1126, 2
        %vm1147 = vcmp.lt.s32.totalorder %v1126, 3
        %vm1148 = vcmp.lt.s32.totalorder %v1126, 4
        %v1149 = vsel %vm1145, %v1129, %v1132
        %v1150 = vsel %vm1148, %v1138, 2102212464
        %v1151 = vsel %vm1147, %v1135, %v1150
        %v1152 = vsel %vm1146, %v1149, %v1151
        %v1153 = vsel %vm1145, %v1132, %v1135
        %v1154 = vsel %vm1148, %v1141, 920167782
        %v1155 = vsel %vm1147, %v1138, %v1154
        %v1156 = vsel %vm1146, %v1153, %v1155
        %v1157 = vsel %vm1145, %v1135, %v1138
        %v1158 = vsel %vm1148, %v1144, 1326507024
        %v1159 = vsel %vm1147, %v1141, %v1158
        %v1160 = vsel %vm1146, %v1157, %v1159
        %v1161 = vshll.u32 %v1121, 8
        %v1162 = vmul.u32.u64.compose %v1161, %v1160
        %v1163 = vextract.low.u32 %v1162
        %v1164 = vextract.high.u32 %v1162
        %v1165 = vmul.u32.u64.compose %v1161, %v1156
        %v1166 = vextract.low.u32 %v1165
        %v1167 = vextract.high.u32 %v1165
        %v1168 = vmul.u32 %v1161, %v1152
        %v1169 = vadd.s32 %v1164, %v1166
        %vm1170 = vc.u32 %v1164, %v1166
        %v1171 = vadd.s32 %v1167, 1
        %v1172 = vsel %vm1170, %v1171, %v1167
        %v1173 = vadd.s32 %v1168, %v1172
        %v1174 = vadd.s32 %v1173, 536870912
        %v1175 = vshrl.u32 %v1174, 30
        %v1176 = vshll.u32 %v1175, 30
        %v1177 = vsub.s32 %v1173, %v1176
        %vm1178 = vcmp.lt.s32.totalorder %v1177, 0
        %v1179 = vsub.s32 0, %v1177
        %v1180 = vsel %vm1178, %v1179, %v1177
        %v1181 = vclz %v1180
        %v1182 = vsub.s32 %v1181, 2
        %vm1183 = vcmp.gt.s32.totalorder 0, %v1182
        %v1184 = vsel %vm1183, 0, %v1182
        %v1185 = vsub.s32 32, %v1184
        %v1186 = vshll.u32 %v1177, %v1184
        %v1187 = vshrl.u32 %v1169, %v1185
        %v1188 = vor.u32 %v1186, %v1187
        %v1189 = vsub.s32 4294967266, %v1184
        %v1190 = vadd.s32 %v1189, 127
        %v1191 = vshll.u32 %v1190, 23
        %v1192 = vor.u32 4788187, %v1191
        %v1193 = vand.u32 2147483647, %v1192
        %v1195 = vcvt.s32.f32 %v1188
        %v1196 = vmul.f32 %v1195, %v1193
        %v1197 = vxor.u32 %v1196, 2147483648
        %v1198 = vsel %vm1115, %v1197, %v1196
        %v1199 = vsub.s32 4, %v1175
        %v1200 = vsel %vm1115, %v1199, %v1175
        %v1201 = vsel %vm1114, %v265, %v1198
        %v1202 = vsel %vm1114, 0, %v1200
        %v1203 = vcosq.f32.pop %v1201
        %v1204 = vsinq.f32.pop %v1201
        %vm1205 = vweird.f32 %v265
        %v1206 = vand.u32 %v1202, 3
        %vm1207 = vcmp.lt.s32.totalorder %v1206, 2
        %vm1208 = vcmp.eq.s32.totalorder %v1206, 0
        %v1209 = vxor.u32 %v1204, 2147483648
        %v1210 = vsel %vm1208, %v1203, %v1209
        %vm1211 = vcmp.eq.s32.totalorder %v1206, 2
        %v1212 = vxor.u32 %v1203, 2147483648
        %v1213 = vsel %vm1211, %v1212, %v1204
        %v1214 = vsel %vm1207, %v1210, %v1213
        %v1215 = vsel %vm1205, nan, %v1214
        %v1216 = vand.u32 2147483647, %v266
        %vm1217 = vcmp.le.f32.partialorder %v1216, 0.7853982
        %vm1218 = vcmp.lt.s32.totalorder %v266, 0
        %v1219 = vand.u32 %v266, 2139095040
        %v1220 = vshrl.u32 %v1219, 23
        %v1221 = vsub.s32 %v1220, 127
        %v1222 = vand.u32 2147483647, %v266
        %v1223 = vand.u32 %v1222, 8388607
        %v1224 = vor.u32 %v1223, 8388608
        %v1225 = vsub.s32 0, %v1224
        %v1226 = vadd.s32 %v1221, 1
        %vm1227 = vcmp.gt.s32.totalorder %v1226, 0
        %v1228 = vsel %vm1227, %v1226, 0
        %v1229 = vshrl.u32 %v1228, 5
        %v1230 = vand.u32 %v1228, 31
        %v1231 = vsub.s32 32, %v1230
        %v1232 = vshrl.u32 683565275, %v1231
        %v1233 = vshll.u32 683565275, %v1230
        %v1234 = vshrl.u32 2475754826, %v1231
        %v1235 = vor.u32 %v1233, %v1234
        %v1236 = vshll.u32 2475754826, %v1230
        %v1237 = vshrl.u32 2131351028, %v1231
        %v1238 = vor.u32 %v1236, %v1237
        %v1239 = vshll.u32 2131351028, %v1230
        %v1240 = vshrl.u32 2102212464, %v1231
        %v1241 = vor.u32 %v1239, %v1240
        %v1242 = vshll.u32 2102212464, %v1230
        %v1243 = vshrl.u32 920167782, %v1231
        %v1244 = vor.u32 %v1242, %v1243
        %v1245 = vshll.u32 920167782, %v1230
        %v1246 = vshrl.u32 1326507024, %v1231
        %v1247 = vor.u32 %v1245, %v1246
        %vm1248 = vcmp.lt.s32.totalorder %v1229, 1
        %vm1249 = vcmp.lt.s32.totalorder %v1229, 2
        %vm1250 = vcmp.lt.s32.totalorder %v1229, 3
        %vm1251 = vcmp.lt.s32.totalorder %v1229, 4
        %v1252 = vsel %vm1248, %v1232, %v1235
        %v1253 = vsel %vm1251, %v1241, 2102212464
        %v1254 = vsel %vm1250, %v1238, %v1253
        %v1255 = vsel %vm1249, %v1252, %v1254
        %v1256 = vsel %vm1248, %v1235, %v1238
        %v1257 = vsel %vm1251, %v1244, 920167782
        %v1258 = vsel %vm1250, %v1241, %v1257
        %v1259 = vsel %vm1249, %v1256, %v1258
        %v1260 = vsel %vm1248, %v1238, %v1241
        %v1261 = vsel %vm1251, %v1247, 1326507024
        %v1262 = vsel %vm1250, %v1244, %v1261
        %v1263 = vsel %vm1249, %v1260, %v1262
        %v1264 = vshll.u32 %v1224, 8
        %v1265 = vmul.u32.u64.compose %v1264, %v1263
        %v1266 = vextract.low.u32 %v1265
        %v1267 = vextract.high.u32 %v1265
        %v1268 = vmul.u32.u64.compose %v1264, %v1259
        %v1269 = vextract.low.u32 %v1268
        %v1270 = vextract.high.u32 %v1268
        %v1271 = vmul.u32 %v1264, %v1255
        %v1272 = vadd.s32 %v1267, %v1269
        %vm1273 = vc.u32 %v1267, %v1269
        %v1274 = vadd.s32 %v1270, 1
        %v1275 = vsel %vm1273, %v1274, %v1270
        %v1276 = vadd.s32 %v1271, %v1275
        %v1277 = vadd.s32 %v1276, 536870912
        %v1278 = vshrl.u32 %v1277, 30
        %v1279 = vshll.u32 %v1278, 30
        %v1280 = vsub.s32 %v1276, %v1279
        %vm1281 = vcmp.lt.s32.totalorder %v1280, 0
        %v1282 = vsub.s32 0, %v1280
        %v1283 = vsel %vm1281, %v1282, %v1280
        %v1284 = vclz %v1283
        %v1285 = vsub.s32 %v1284, 2
        %vm1286 = vcmp.gt.s32.totalorder 0, %v1285
        %v1287 = vsel %vm1286, 0, %v1285
        %v1288 = vsub.s32 32, %v1287
        %v1289 = vshll.u32 %v1280, %v1287
        %v1290 = vshrl.u32 %v1272, %v1288
        %v1291 = vor.u32 %v1289, %v1290
        %v1292 = vsub.s32 4294967266, %v1287
        %v1293 = vadd.s32 %v1292, 127
        %v1294 = vshll.u32 %v1293, 23
        %v1295 = vor.u32 4788187, %v1294
        %v1296 = vand.u32 2147483647, %v1295
        %v1298 = vcvt.s32.f32 %v1291
        %v1299 = vmul.f32 %v1298, %v1296
        %v1300 = vxor.u32 %v1299, 2147483648
        %v1301 = vsel %vm1218, %v1300, %v1299
        %v1302 = vsub.s32 4, %v1278
        %v1303 = vsel %vm1218, %v1302, %v1278
        %v1304 = vsel %vm1217, %v266, %v1301
        %v1305 = vsel %vm1217, 0, %v1303
        %v1306 = vcosq.f32.pop %v1304
        %v1307 = vsinq.f32.pop %v1304
        %vm1308 = vweird.f32 %v266
        %v1309 = vand.u32 %v1305, 3
        %vm1310 = vcmp.lt.s32.totalorder %v1309, 2
        %vm1311 = vcmp.eq.s32.totalorder %v1309, 0
        %v1312 = vxor.u32 %v1307, 2147483648
        %v1313 = vsel %vm1311, %v1306, %v1312
        %vm1314 = vcmp.eq.s32.totalorder %v1309, 2
        %v1315 = vxor.u32 %v1306, 2147483648
        %v1316 = vsel %vm1314, %v1315, %v1307
        %v1317 = vsel %vm1310, %v1313, %v1316
        %v1318 = vsel %vm1308, nan, %v1317
        %v1319 = vand.u32 2147483647, %v267
        %vm1320 = vcmp.le.f32.partialorder %v1319, 0.7853982
        %vm1321 = vcmp.lt.s32.totalorder %v267, 0
        %v1322 = vand.u32 %v267, 2139095040
        %v1323 = vshrl.u32 %v1322, 23
        %v1324 = vsub.s32 %v1323, 127
        %v1325 = vand.u32 2147483647, %v267
        %v1326 = vand.u32 %v1325, 8388607
        %v1327 = vor.u32 %v1326, 8388608
        %v1328 = vsub.s32 0, %v1327
        %v1329 = vadd.s32 %v1324, 1
        %vm1330 = vcmp.gt.s32.totalorder %v1329, 0
        %v1331 = vsel %vm1330, %v1329, 0
        %v1332 = vshrl.u32 %v1331, 5
        %v1333 = vand.u32 %v1331, 31
        %v1334 = vsub.s32 32, %v1333
        %v1335 = vshrl.u32 683565275, %v1334
        %v1336 = vshll.u32 683565275, %v1333
        %v1337 = vshrl.u32 2475754826, %v1334
        %v1338 = vor.u32 %v1336, %v1337
        %v1339 = vshll.u32 2475754826, %v1333
        %v1340 = vshrl.u32 2131351028, %v1334
        %v1341 = vor.u32 %v1339, %v1340
        %v1342 = vshll.u32 2131351028, %v1333
        %v1343 = vshrl.u32 2102212464, %v1334
        %v1344 = vor.u32 %v1342, %v1343
        %v1345 = vshll.u32 2102212464, %v1333
        %v1346 = vshrl.u32 920167782, %v1334
        %v1347 = vor.u32 %v1345, %v1346
        %v1348 = vshll.u32 920167782, %v1333
        %v1349 = vshrl.u32 1326507024, %v1334
        %v1350 = vor.u32 %v1348, %v1349
        %vm1351 = vcmp.lt.s32.totalorder %v1332, 1
        %vm1352 = vcmp.lt.s32.totalorder %v1332, 2
        %vm1353 = vcmp.lt.s32.totalorder %v1332, 3
        %vm1354 = vcmp.lt.s32.totalorder %v1332, 4
        %v1355 = vsel %vm1351, %v1335, %v1338
        %v1356 = vsel %vm1354, %v1344, 2102212464
        %v1357 = vsel %vm1353, %v1341, %v1356
        %v1358 = vsel %vm1352, %v1355, %v1357
        %v1359 = vsel %vm1351, %v1338, %v1341
        %v1360 = vsel %vm1354, %v1347, 920167782
        %v1361 = vsel %vm1353, %v1344, %v1360
        %v1362 = vsel %vm1352, %v1359, %v1361
        %v1363 = vsel %vm1351, %v1341, %v1344
        %v1364 = vsel %vm1354, %v1350, 1326507024
        %v1365 = vsel %vm1353, %v1347, %v1364
        %v1366 = vsel %vm1352, %v1363, %v1365
        %v1367 = vshll.u32 %v1327, 8
        %v1368 = vmul.u32.u64.compose %v1367, %v1366
        %v1369 = vextract.low.u32 %v1368
        %v1370 = vextract.high.u32 %v1368
        %v1371 = vmul.u32.u64.compose %v1367, %v1362
        %v1372 = vextract.low.u32 %v1371
        %v1373 = vextract.high.u32 %v1371
        %v1374 = vmul.u32 %v1367, %v1358
        %v1375 = vadd.s32 %v1370, %v1372
        %vm1376 = vc.u32 %v1370, %v1372
        %v1377 = vadd.s32 %v1373, 1
        %v1378 = vsel %vm1376, %v1377, %v1373
        %v1379 = vadd.s32 %v1374, %v1378
        %v1380 = vadd.s32 %v1379, 536870912
        %v1381 = vshrl.u32 %v1380, 30
        %v1382 = vshll.u32 %v1381, 30
        %v1383 = vsub.s32 %v1379, %v1382
        %vm1384 = vcmp.lt.s32.totalorder %v1383, 0
        %v1385 = vsub.s32 0, %v1383
        %v1386 = vsel %vm1384, %v1385, %v1383
        %v1387 = vclz %v1386
        %v1388 = vsub.s32 %v1387, 2
        %vm1389 = vcmp.gt.s32.totalorder 0, %v1388
        %v1390 = vsel %vm1389, 0, %v1388
        %v1391 = vsub.s32 32, %v1390
        %v1392 = vshll.u32 %v1383, %v1390
        %v1393 = vshrl.u32 %v1375, %v1391
        %v1394 = vor.u32 %v1392, %v1393
        %v1395 = vsub.s32 4294967266, %v1390
        %v1396 = vadd.s32 %v1395, 127
        %v1397 = vshll.u32 %v1396, 23
        %v1398 = vor.u32 4788187, %v1397
        %v1399 = vand.u32 2147483647, %v1398
        %v1401 = vcvt.s32.f32 %v1394
        %v1402 = vmul.f32 %v1401, %v1399
        %v1403 = vxor.u32 %v1402, 2147483648
        %v1404 = vsel %vm1321, %v1403, %v1402
        %v1405 = vsub.s32 4, %v1381
        %v1406 = vsel %vm1321, %v1405, %v1381
        %v1407 = vsel %vm1320, %v267, %v1404
        %v1408 = vsel %vm1320, 0, %v1406
        %v1409 = vcosq.f32.pop %v1407
        %v1410 = vsinq.f32.pop %v1407
        %vm1411 = vweird.f32 %v267
        %v1412 = vand.u32 %v1408, 3
        %vm1413 = vcmp.lt.s32.totalorder %v1412, 2
        %vm1414 = vcmp.eq.s32.totalorder %v1412, 0
        %v1415 = vxor.u32 %v1410, 2147483648
        %v1416 = vsel %vm1414, %v1409, %v1415
        %vm1417 = vcmp.eq.s32.totalorder %v1412, 2
        %v1418 = vxor.u32 %v1409, 2147483648
        %v1419 = vsel %vm1417, %v1418, %v1410
        %v1420 = vsel %vm1413, %v1416, %v1419
        %v1421 = vsel %vm1411, nan, %v1420
        %v1422 = vand.u32 2147483647, %v268
        %vm1423 = vcmp.le.f32.partialorder %v1422, 0.7853982
        %vm1424 = vcmp.lt.s32.totalorder %v268, 0
        %v1425 = vand.u32 %v268, 2139095040
        %v1426 = vshrl.u32 %v1425, 23
        %v1427 = vsub.s32 %v1426, 127
        %v1428 = vand.u32 2147483647, %v268
        %v1429 = vand.u32 %v1428, 8388607
        %v1430 = vor.u32 %v1429, 8388608
        %v1431 = vsub.s32 0, %v1430
        %v1432 = vadd.s32 %v1427, 1
        %vm1433 = vcmp.gt.s32.totalorder %v1432, 0
        %v1434 = vsel %vm1433, %v1432, 0
        %v1435 = vshrl.u32 %v1434, 5
        %v1436 = vand.u32 %v1434, 31
        %v1437 = vsub.s32 32, %v1436
        %v1438 = vshrl.u32 683565275, %v1437
        %v1439 = vshll.u32 683565275, %v1436
        %v1440 = vshrl.u32 2475754826, %v1437
        %v1441 = vor.u32 %v1439, %v1440
        %v1442 = vshll.u32 2475754826, %v1436
        %v1443 = vshrl.u32 2131351028, %v1437
        %v1444 = vor.u32 %v1442, %v1443
        %v1445 = vshll.u32 2131351028, %v1436
        %v1446 = vshrl.u32 2102212464, %v1437
        %v1447 = vor.u32 %v1445, %v1446
        %v1448 = vshll.u32 2102212464, %v1436
        %v1449 = vshrl.u32 920167782, %v1437
        %v1450 = vor.u32 %v1448, %v1449
        %v1451 = vshll.u32 920167782, %v1436
        %v1452 = vshrl.u32 1326507024, %v1437
        %v1453 = vor.u32 %v1451, %v1452
        %vm1454 = vcmp.lt.s32.totalorder %v1435, 1
        %vm1455 = vcmp.lt.s32.totalorder %v1435, 2
        %vm1456 = vcmp.lt.s32.totalorder %v1435, 3
        %vm1457 = vcmp.lt.s32.totalorder %v1435, 4
        %v1458 = vsel %vm1454, %v1438, %v1441
        %v1459 = vsel %vm1457, %v1447, 2102212464
        %v1460 = vsel %vm1456, %v1444, %v1459
        %v1461 = vsel %vm1455, %v1458, %v1460
        %v1462 = vsel %vm1454, %v1441, %v1444
        %v1463 = vsel %vm1457, %v1450, 920167782
        %v1464 = vsel %vm1456, %v1447, %v1463
        %v1465 = vsel %vm1455, %v1462, %v1464
        %v1466 = vsel %vm1454, %v1444, %v1447
        %v1467 = vsel %vm1457, %v1453, 1326507024
        %v1468 = vsel %vm1456, %v1450, %v1467
        %v1469 = vsel %vm1455, %v1466, %v1468
        %v1470 = vshll.u32 %v1430, 8
        %v1471 = vmul.u32.u64.compose %v1470, %v1469
        %v1472 = vextract.low.u32 %v1471
        %v1473 = vextract.high.u32 %v1471
        %v1474 = vmul.u32.u64.compose %v1470, %v1465
        %v1475 = vextract.low.u32 %v1474
        %v1476 = vextract.high.u32 %v1474
        %v1477 = vmul.u32 %v1470, %v1461
        %v1478 = vadd.s32 %v1473, %v1475
        %vm1479 = vc.u32 %v1473, %v1475
        %v1480 = vadd.s32 %v1476, 1
        %v1481 = vsel %vm1479, %v1480, %v1476
        %v1482 = vadd.s32 %v1477, %v1481
        %v1483 = vadd.s32 %v1482, 536870912
        %v1484 = vshrl.u32 %v1483, 30
        %v1485 = vshll.u32 %v1484, 30
        %v1486 = vsub.s32 %v1482, %v1485
        %vm1487 = vcmp.lt.s32.totalorder %v1486, 0
        %v1488 = vsub.s32 0, %v1486
        %v1489 = vsel %vm1487, %v1488, %v1486
        %v1490 = vclz %v1489
        %v1491 = vsub.s32 %v1490, 2
        %vm1492 = vcmp.gt.s32.totalorder 0, %v1491
        %v1493 = vsel %vm1492, 0, %v1491
        %v1494 = vsub.s32 32, %v1493
        %v1495 = vshll.u32 %v1486, %v1493
        %v1496 = vshrl.u32 %v1478, %v1494
        %v1497 = vor.u32 %v1495, %v1496
        %v1498 = vsub.s32 4294967266, %v1493
        %v1499 = vadd.s32 %v1498, 127
        %v1500 = vshll.u32 %v1499, 23
        %v1501 = vor.u32 4788187, %v1500
        %v1502 = vand.u32 2147483647, %v1501
        %v1504 = vcvt.s32.f32 %v1497
        %v1505 = vmul.f32 %v1504, %v1502
        %v1506 = vxor.u32 %v1505, 2147483648
        %v1507 = vsel %vm1424, %v1506, %v1505
        %v1508 = vsub.s32 4, %v1484
        %v1509 = vsel %vm1424, %v1508, %v1484
        %v1510 = vsel %vm1423, %v268, %v1507
        %v1511 = vsel %vm1423, 0, %v1509
        %v1512 = vcosq.f32.pop %v1510
        %v1513 = vsinq.f32.pop %v1510
        %vm1514 = vweird.f32 %v268
        %v1515 = vand.u32 %v1511, 3
        %vm1516 = vcmp.lt.s32.totalorder %v1515, 2
        %vm1517 = vcmp.eq.s32.totalorder %v1515, 0
        %v1518 = vxor.u32 %v1513, 2147483648
        %v1519 = vsel %vm1517, %v1512, %v1518
        %vm1520 = vcmp.eq.s32.totalorder %v1515, 2
        %v1521 = vxor.u32 %v1512, 2147483648
        %v1522 = vsel %vm1520, %v1521, %v1513
        %v1523 = vsel %vm1516, %v1519, %v1522
        %v1524 = vsel %vm1514, nan, %v1523
        %v1525 = vand.u32 2147483647, %v269
        %vm1526 = vcmp.le.f32.partialorder %v1525, 0.7853982
        %vm1527 = vcmp.lt.s32.totalorder %v269, 0
        %v1528 = vand.u32 %v269, 2139095040
        %v1529 = vshrl.u32 %v1528, 23
        %v1530 = vsub.s32 %v1529, 127
        %v1531 = vand.u32 2147483647, %v269
        %v1532 = vand.u32 %v1531, 8388607
        %v1533 = vor.u32 %v1532, 8388608
        %v1534 = vsub.s32 0, %v1533
        %v1535 = vadd.s32 %v1530, 1
        %vm1536 = vcmp.gt.s32.totalorder %v1535, 0
        %v1537 = vsel %vm1536, %v1535, 0
        %v1538 = vshrl.u32 %v1537, 5
        %v1539 = vand.u32 %v1537, 31
        %v1540 = vsub.s32 32, %v1539
        %v1541 = vshrl.u32 683565275, %v1540
        %v1542 = vshll.u32 683565275, %v1539
        %v1543 = vshrl.u32 2475754826, %v1540
        %v1544 = vor.u32 %v1542, %v1543
        %v1545 = vshll.u32 2475754826, %v1539
        %v1546 = vshrl.u32 2131351028, %v1540
        %v1547 = vor.u32 %v1545, %v1546
        %v1548 = vshll.u32 2131351028, %v1539
        %v1549 = vshrl.u32 2102212464, %v1540
        %v1550 = vor.u32 %v1548, %v1549
        %v1551 = vshll.u32 2102212464, %v1539
        %v1552 = vshrl.u32 920167782, %v1540
        %v1553 = vor.u32 %v1551, %v1552
        %v1554 = vshll.u32 920167782, %v1539
        %v1555 = vshrl.u32 1326507024, %v1540
        %v1556 = vor.u32 %v1554, %v1555
        %vm1557 = vcmp.lt.s32.totalorder %v1538, 1
        %vm1558 = vcmp.lt.s32.totalorder %v1538, 2
        %vm1559 = vcmp.lt.s32.totalorder %v1538, 3
        %vm1560 = vcmp.lt.s32.totalorder %v1538, 4
        %v1561 = vsel %vm1557, %v1541, %v1544
        %v1562 = vsel %vm1560, %v1550, 2102212464
        %v1563 = vsel %vm1559, %v1547, %v1562
        %v1564 = vsel %vm1558, %v1561, %v1563
        %v1565 = vsel %vm1557, %v1544, %v1547
        %v1566 = vsel %vm1560, %v1553, 920167782
        %v1567 = vsel %vm1559, %v1550, %v1566
        %v1568 = vsel %vm1558, %v1565, %v1567
        %v1569 = vsel %vm1557, %v1547, %v1550
        %v1570 = vsel %vm1560, %v1556, 1326507024
        %v1571 = vsel %vm1559, %v1553, %v1570
        %v1572 = vsel %vm1558, %v1569, %v1571
        %v1573 = vshll.u32 %v1533, 8
        %v1574 = vmul.u32.u64.compose %v1573, %v1572
        %v1575 = vextract.low.u32 %v1574
        %v1576 = vextract.high.u32 %v1574
        %v1577 = vmul.u32.u64.compose %v1573, %v1568
        %v1578 = vextract.low.u32 %v1577
        %v1579 = vextract.high.u32 %v1577
        %v1580 = vmul.u32 %v1573, %v1564
        %v1581 = vadd.s32 %v1576, %v1578
        %vm1582 = vc.u32 %v1576, %v1578
        %v1583 = vadd.s32 %v1579, 1
        %v1584 = vsel %vm1582, %v1583, %v1579
        %v1585 = vadd.s32 %v1580, %v1584
        %v1586 = vadd.s32 %v1585, 536870912
        %v1587 = vshrl.u32 %v1586, 30
        %v1588 = vshll.u32 %v1587, 30
        %v1589 = vsub.s32 %v1585, %v1588
        %vm1590 = vcmp.lt.s32.totalorder %v1589, 0
        %v1591 = vsub.s32 0, %v1589
        %v1592 = vsel %vm1590, %v1591, %v1589
        %v1593 = vclz %v1592
        %v1594 = vsub.s32 %v1593, 2
        %vm1595 = vcmp.gt.s32.totalorder 0, %v1594
        %v1596 = vsel %vm1595, 0, %v1594
        %v1597 = vsub.s32 32, %v1596
        %v1598 = vshll.u32 %v1589, %v1596
        %v1599 = vshrl.u32 %v1581, %v1597
        %v1600 = vor.u32 %v1598, %v1599
        %v1601 = vsub.s32 4294967266, %v1596
        %v1602 = vadd.s32 %v1601, 127
        %v1603 = vshll.u32 %v1602, 23
        %v1604 = vor.u32 4788187, %v1603
        %v1605 = vand.u32 2147483647, %v1604
        %v1607 = vcvt.s32.f32 %v1600
        %v1608 = vmul.f32 %v1607, %v1605
        %v1609 = vxor.u32 %v1608, 2147483648
        %v1610 = vsel %vm1527, %v1609, %v1608
        %v1611 = vsub.s32 4, %v1587
        %v1612 = vsel %vm1527, %v1611, %v1587
        %v1613 = vsel %vm1526, %v269, %v1610
        %v1614 = vsel %vm1526, 0, %v1612
        %v1615 = vcosq.f32.pop %v1613
        %v1616 = vsinq.f32.pop %v1613
        %vm1617 = vweird.f32 %v269
        %v1618 = vand.u32 %v1614, 3
        %vm1619 = vcmp.lt.s32.totalorder %v1618, 2
        %vm1620 = vcmp.eq.s32.totalorder %v1618, 0
        %v1621 = vxor.u32 %v1616, 2147483648
        %v1622 = vsel %vm1620, %v1615, %v1621
        %vm1623 = vcmp.eq.s32.totalorder %v1618, 2
        %v1624 = vxor.u32 %v1615, 2147483648
        %v1625 = vsel %vm1623, %v1624, %v1616
        %v1626 = vsel %vm1619, %v1622, %v1625
        %v1627 = vsel %vm1617, nan, %v1626
        %v1628 = vand.u32 2147483647, %v270
        %vm1629 = vcmp.le.f32.partialorder %v1628, 0.7853982
        %vm1630 = vcmp.lt.s32.totalorder %v270, 0
        %v1631 = vand.u32 %v270, 2139095040
        %v1632 = vshrl.u32 %v1631, 23
        %v1633 = vsub.s32 %v1632, 127
        %v1634 = vand.u32 2147483647, %v270
        %v1635 = vand.u32 %v1634, 8388607
        %v1636 = vor.u32 %v1635, 8388608
        %v1637 = vsub.s32 0, %v1636
        %v1638 = vadd.s32 %v1633, 1
        %vm1639 = vcmp.gt.s32.totalorder %v1638, 0
        %v1640 = vsel %vm1639, %v1638, 0
        %v1641 = vshrl.u32 %v1640, 5
        %v1642 = vand.u32 %v1640, 31
        %v1643 = vsub.s32 32, %v1642
        %v1644 = vshrl.u32 683565275, %v1643
        %v1645 = vshll.u32 683565275, %v1642
        %v1646 = vshrl.u32 2475754826, %v1643
        %v1647 = vor.u32 %v1645, %v1646
        %v1648 = vshll.u32 2475754826, %v1642
        %v1649 = vshrl.u32 2131351028, %v1643
        %v1650 = vor.u32 %v1648, %v1649
        %v1651 = vshll.u32 2131351028, %v1642
        %v1652 = vshrl.u32 2102212464, %v1643
        %v1653 = vor.u32 %v1651, %v1652
        %v1654 = vshll.u32 2102212464, %v1642
        %v1655 = vshrl.u32 920167782, %v1643
        %v1656 = vor.u32 %v1654, %v1655
        %v1657 = vshll.u32 920167782, %v1642
        %v1658 = vshrl.u32 1326507024, %v1643
        %v1659 = vor.u32 %v1657, %v1658
        %vm1660 = vcmp.lt.s32.totalorder %v1641, 1
        %vm1661 = vcmp.lt.s32.totalorder %v1641, 2
        %vm1662 = vcmp.lt.s32.totalorder %v1641, 3
        %vm1663 = vcmp.lt.s32.totalorder %v1641, 4
        %v1664 = vsel %vm1660, %v1644, %v1647
        %v1665 = vsel %vm1663, %v1653, 2102212464
        %v1666 = vsel %vm1662, %v1650, %v1665
        %v1667 = vsel %vm1661, %v1664, %v1666
        %v1668 = vsel %vm1660, %v1647, %v1650
        %v1669 = vsel %vm1663, %v1656, 920167782
        %v1670 = vsel %vm1662, %v1653, %v1669
        %v1671 = vsel %vm1661, %v1668, %v1670
        %v1672 = vsel %vm1660, %v1650, %v1653
        %v1673 = vsel %vm1663, %v1659, 1326507024
        %v1674 = vsel %vm1662, %v1656, %v1673
        %v1675 = vsel %vm1661, %v1672, %v1674
        %v1676 = vshll.u32 %v1636, 8
        %v1677 = vmul.u32.u64.compose %v1676, %v1675
        %v1678 = vextract.low.u32 %v1677
        %v1679 = vextract.high.u32 %v1677
        %v1680 = vmul.u32.u64.compose %v1676, %v1671
        %v1681 = vextract.low.u32 %v1680
        %v1682 = vextract.high.u32 %v1680
        %v1683 = vmul.u32 %v1676, %v1667
        %v1684 = vadd.s32 %v1679, %v1681
        %vm1685 = vc.u32 %v1679, %v1681
        %v1686 = vadd.s32 %v1682, 1
        %v1687 = vsel %vm1685, %v1686, %v1682
        %v1688 = vadd.s32 %v1683, %v1687
        %v1689 = vadd.s32 %v1688, 536870912
        %v1690 = vshrl.u32 %v1689, 30
        %v1691 = vshll.u32 %v1690, 30
        %v1692 = vsub.s32 %v1688, %v1691
        %vm1693 = vcmp.lt.s32.totalorder %v1692, 0
        %v1694 = vsub.s32 0, %v1692
        %v1695 = vsel %vm1693, %v1694, %v1692
        %v1696 = vclz %v1695
        %v1697 = vsub.s32 %v1696, 2
        %vm1698 = vcmp.gt.s32.totalorder 0, %v1697
        %v1699 = vsel %vm1698, 0, %v1697
        %v1700 = vsub.s32 32, %v1699
        %v1701 = vshll.u32 %v1692, %v1699
        %v1702 = vshrl.u32 %v1684, %v1700
        %v1703 = vor.u32 %v1701, %v1702
        %v1704 = vsub.s32 4294967266, %v1699
        %v1705 = vadd.s32 %v1704, 127
        %v1706 = vshll.u32 %v1705, 23
        %v1707 = vor.u32 4788187, %v1706
        %v1708 = vand.u32 2147483647, %v1707
        %v1710 = vcvt.s32.f32 %v1703
        %v1711 = vmul.f32 %v1710, %v1708
        %v1712 = vxor.u32 %v1711, 2147483648
        %v1713 = vsel %vm1630, %v1712, %v1711
        %v1714 = vsub.s32 4, %v1690
        %v1715 = vsel %vm1630, %v1714, %v1690
        %v1716 = vsel %vm1629, %v270, %v1713
        %v1717 = vsel %vm1629, 0, %v1715
        %v1718 = vcosq.f32.pop %v1716
        %v1719 = vsinq.f32.pop %v1716
        %vm1720 = vweird.f32 %v270
        %v1721 = vand.u32 %v1717, 3
        %vm1722 = vcmp.lt.s32.totalorder %v1721, 2
        %vm1723 = vcmp.eq.s32.totalorder %v1721, 0
        %v1724 = vxor.u32 %v1719, 2147483648
        %v1725 = vsel %vm1723, %v1718, %v1724
        %vm1726 = vcmp.eq.s32.totalorder %v1721, 2
        %v1727 = vxor.u32 %v1718, 2147483648
        %v1728 = vsel %vm1726, %v1727, %v1719
        %v1729 = vsel %vm1722, %v1725, %v1728
        %v1730 = vsel %vm1720, nan, %v1729
        %v1731 = vand.u32 2147483647, %v271
        %vm1732 = vcmp.le.f32.partialorder %v1731, 0.7853982
        %vm1733 = vcmp.lt.s32.totalorder %v271, 0
        %v1734 = vand.u32 %v271, 2139095040
        %v1735 = vshrl.u32 %v1734, 23
        %v1736 = vsub.s32 %v1735, 127
        %v1737 = vand.u32 2147483647, %v271
        %v1738 = vand.u32 %v1737, 8388607
        %v1739 = vor.u32 %v1738, 8388608
        %v1740 = vsub.s32 0, %v1739
        %v1741 = vadd.s32 %v1736, 1
        %vm1742 = vcmp.gt.s32.totalorder %v1741, 0
        %v1743 = vsel %vm1742, %v1741, 0
        %v1744 = vshrl.u32 %v1743, 5
        %v1745 = vand.u32 %v1743, 31
        %v1746 = vsub.s32 32, %v1745
        %v1747 = vshrl.u32 683565275, %v1746
        %v1748 = vshll.u32 683565275, %v1745
        %v1749 = vshrl.u32 2475754826, %v1746
        %v1750 = vor.u32 %v1748, %v1749
        %v1751 = vshll.u32 2475754826, %v1745
        %v1752 = vshrl.u32 2131351028, %v1746
        %v1753 = vor.u32 %v1751, %v1752
        %v1754 = vshll.u32 2131351028, %v1745
        %v1755 = vshrl.u32 2102212464, %v1746
        %v1756 = vor.u32 %v1754, %v1755
        %v1757 = vshll.u32 2102212464, %v1745
        %v1758 = vshrl.u32 920167782, %v1746
        %v1759 = vor.u32 %v1757, %v1758
        %v1760 = vshll.u32 920167782, %v1745
        %v1761 = vshrl.u32 1326507024, %v1746
        %v1762 = vor.u32 %v1760, %v1761
        %vm1763 = vcmp.lt.s32.totalorder %v1744, 1
        %vm1764 = vcmp.lt.s32.totalorder %v1744, 2
        %vm1765 = vcmp.lt.s32.totalorder %v1744, 3
        %vm1766 = vcmp.lt.s32.totalorder %v1744, 4
        %v1767 = vsel %vm1763, %v1747, %v1750
        %v1768 = vsel %vm1766, %v1756, 2102212464
        %v1769 = vsel %vm1765, %v1753, %v1768
        %v1770 = vsel %vm1764, %v1767, %v1769
        %v1771 = vsel %vm1763, %v1750, %v1753
        %v1772 = vsel %vm1766, %v1759, 920167782
        %v1773 = vsel %vm1765, %v1756, %v1772
        %v1774 = vsel %vm1764, %v1771, %v1773
        %v1775 = vsel %vm1763, %v1753, %v1756
        %v1776 = vsel %vm1766, %v1762, 1326507024
        %v1777 = vsel %vm1765, %v1759, %v1776
        %v1778 = vsel %vm1764, %v1775, %v1777
        %v1779 = vshll.u32 %v1739, 8
        %v1780 = vmul.u32.u64.compose %v1779, %v1778
        %v1781 = vextract.low.u32 %v1780
        %v1782 = vextract.high.u32 %v1780
        %v1783 = vmul.u32.u64.compose %v1779, %v1774
        %v1784 = vextract.low.u32 %v1783
        %v1785 = vextract.high.u32 %v1783
        %v1786 = vmul.u32 %v1779, %v1770
        %v1787 = vadd.s32 %v1782, %v1784
        %vm1788 = vc.u32 %v1782, %v1784
        %v1789 = vadd.s32 %v1785, 1
        %v1790 = vsel %vm1788, %v1789, %v1785
        %v1791 = vadd.s32 %v1786, %v1790
        %v1792 = vadd.s32 %v1791, 536870912
        %v1793 = vshrl.u32 %v1792, 30
        %v1794 = vshll.u32 %v1793, 30
        %v1795 = vsub.s32 %v1791, %v1794
        %vm1796 = vcmp.lt.s32.totalorder %v1795, 0
        %v1797 = vsub.s32 0, %v1795
        %v1798 = vsel %vm1796, %v1797, %v1795
        %v1799 = vclz %v1798
        %v1800 = vsub.s32 %v1799, 2
        %vm1801 = vcmp.gt.s32.totalorder 0, %v1800
        %v1802 = vsel %vm1801, 0, %v1800
        %v1803 = vsub.s32 32, %v1802
        %v1804 = vshll.u32 %v1795, %v1802
        %v1805 = vshrl.u32 %v1787, %v1803
        %v1806 = vor.u32 %v1804, %v1805
        %v1807 = vsub.s32 4294967266, %v1802
        %v1808 = vadd.s32 %v1807, 127
        %v1809 = vshll.u32 %v1808, 23
        %v1810 = vor.u32 4788187, %v1809
        %v1811 = vand.u32 2147483647, %v1810
        %v1813 = vcvt.s32.f32 %v1806
        %v1814 = vmul.f32 %v1813, %v1811
        %v1815 = vxor.u32 %v1814, 2147483648
        %v1816 = vsel %vm1733, %v1815, %v1814
        %v1817 = vsub.s32 4, %v1793
        %v1818 = vsel %vm1733, %v1817, %v1793
        %v1819 = vsel %vm1732, %v271, %v1816
        %v1820 = vsel %vm1732, 0, %v1818
        %v1821 = vcosq.f32.pop %v1819
        %v1822 = vsinq.f32.pop %v1819
        %vm1823 = vweird.f32 %v271
        %v1824 = vand.u32 %v1820, 3
        %vm1825 = vcmp.lt.s32.totalorder %v1824, 2
        %vm1826 = vcmp.eq.s32.totalorder %v1824, 0
        %v1827 = vxor.u32 %v1822, 2147483648
        %v1828 = vsel %vm1826, %v1821, %v1827
        %vm1829 = vcmp.eq.s32.totalorder %v1824, 2
        %v1830 = vxor.u32 %v1821, 2147483648
        %v1831 = vsel %vm1829, %v1830, %v1822
        %v1832 = vsel %vm1825, %v1828, %v1831
        %v1833 = vsel %vm1823, nan, %v1832
        %v1834 = vand.u32 2147483647, %v272
        %vm1835 = vcmp.le.f32.partialorder %v1834, 0.7853982
        %vm1836 = vcmp.lt.s32.totalorder %v272, 0
        %v1837 = vand.u32 %v272, 2139095040
        %v1838 = vshrl.u32 %v1837, 23
        %v1839 = vsub.s32 %v1838, 127
        %v1840 = vand.u32 2147483647, %v272
        %v1841 = vand.u32 %v1840, 8388607
        %v1842 = vor.u32 %v1841, 8388608
        %v1843 = vsub.s32 0, %v1842
        %v1844 = vadd.s32 %v1839, 1
        %vm1845 = vcmp.gt.s32.totalorder %v1844, 0
        %v1846 = vsel %vm1845, %v1844, 0
        %v1847 = vshrl.u32 %v1846, 5
        %v1848 = vand.u32 %v1846, 31
        %v1849 = vsub.s32 32, %v1848
        %v1850 = vshrl.u32 683565275, %v1849
        %v1851 = vshll.u32 683565275, %v1848
        %v1852 = vshrl.u32 2475754826, %v1849
        %v1853 = vor.u32 %v1851, %v1852
        %v1854 = vshll.u32 2475754826, %v1848
        %v1855 = vshrl.u32 2131351028, %v1849
        %v1856 = vor.u32 %v1854, %v1855
        %v1857 = vshll.u32 2131351028, %v1848
        %v1858 = vshrl.u32 2102212464, %v1849
        %v1859 = vor.u32 %v1857, %v1858
        %v1860 = vshll.u32 2102212464, %v1848
        %v1861 = vshrl.u32 920167782, %v1849
        %v1862 = vor.u32 %v1860, %v1861
        %v1863 = vshll.u32 920167782, %v1848
        %v1864 = vshrl.u32 1326507024, %v1849
        %v1865 = vor.u32 %v1863, %v1864
        %vm1866 = vcmp.lt.s32.totalorder %v1847, 1
        %vm1867 = vcmp.lt.s32.totalorder %v1847, 2
        %vm1868 = vcmp.lt.s32.totalorder %v1847, 3
        %vm1869 = vcmp.lt.s32.totalorder %v1847, 4
        %v1870 = vsel %vm1866, %v1850, %v1853
        %v1871 = vsel %vm1869, %v1859, 2102212464
        %v1872 = vsel %vm1868, %v1856, %v1871
        %v1873 = vsel %vm1867, %v1870, %v1872
        %v1874 = vsel %vm1866, %v1853, %v1856
        %v1875 = vsel %vm1869, %v1862, 920167782
        %v1876 = vsel %vm1868, %v1859, %v1875
        %v1877 = vsel %vm1867, %v1874, %v1876
        %v1878 = vsel %vm1866, %v1856, %v1859
        %v1879 = vsel %vm1869, %v1865, 1326507024
        %v1880 = vsel %vm1868, %v1862, %v1879
        %v1881 = vsel %vm1867, %v1878, %v1880
        %v1882 = vshll.u32 %v1842, 8
        %v1883 = vmul.u32.u64.compose %v1882, %v1881
        %v1884 = vextract.low.u32 %v1883
        %v1885 = vextract.high.u32 %v1883
        %v1886 = vmul.u32.u64.compose %v1882, %v1877
        %v1887 = vextract.low.u32 %v1886
        %v1888 = vextract.high.u32 %v1886
        %v1889 = vmul.u32 %v1882, %v1873
        %v1890 = vadd.s32 %v1885, %v1887
        %vm1891 = vc.u32 %v1885, %v1887
        %v1892 = vadd.s32 %v1888, 1
        %v1893 = vsel %vm1891, %v1892, %v1888
        %v1894 = vadd.s32 %v1889, %v1893
        %v1895 = vadd.s32 %v1894, 536870912
        %v1896 = vshrl.u32 %v1895, 30
        %v1897 = vshll.u32 %v1896, 30
        %v1898 = vsub.s32 %v1894, %v1897
        %vm1899 = vcmp.lt.s32.totalorder %v1898, 0
        %v1900 = vsub.s32 0, %v1898
        %v1901 = vsel %vm1899, %v1900, %v1898
        %v1902 = vclz %v1901
        %v1903 = vsub.s32 %v1902, 2
        %vm1904 = vcmp.gt.s32.totalorder 0, %v1903
        %v1905 = vsel %vm1904, 0, %v1903
        %v1906 = vsub.s32 32, %v1905
        %v1907 = vshll.u32 %v1898, %v1905
        %v1908 = vshrl.u32 %v1890, %v1906
        %v1909 = vor.u32 %v1907, %v1908
        %v1910 = vsub.s32 4294967266, %v1905
        %v1911 = vadd.s32 %v1910, 127
        %v1912 = vshll.u32 %v1911, 23
        %v1913 = vor.u32 4788187, %v1912
        %v1914 = vand.u32 2147483647, %v1913
        %v1916 = vcvt.s32.f32 %v1909
        %v1917 = vmul.f32 %v1916, %v1914
        %v1918 = vxor.u32 %v1917, 2147483648
        %v1919 = vsel %vm1836, %v1918, %v1917
        %v1920 = vsub.s32 4, %v1896
        %v1921 = vsel %vm1836, %v1920, %v1896
        %v1922 = vsel %vm1835, %v272, %v1919
        %v1923 = vsel %vm1835, 0, %v1921
        %v1924 = vcosq.f32.pop %v1922
        %v1925 = vsinq.f32.pop %v1922
        %vm1926 = vweird.f32 %v272
        %v1927 = vand.u32 %v1923, 3
        %vm1928 = vcmp.lt.s32.totalorder %v1927, 2
        %vm1929 = vcmp.eq.s32.totalorder %v1927, 0
        %v1930 = vxor.u32 %v1925, 2147483648
        %v1931 = vsel %vm1929, %v1924, %v1930
        %vm1932 = vcmp.eq.s32.totalorder %v1927, 2
        %v1933 = vxor.u32 %v1924, 2147483648
        %v1934 = vsel %vm1932, %v1933, %v1925
        %v1935 = vsel %vm1928, %v1931, %v1934
        %v1936 = vsel %vm1926, nan, %v1935
        %v1937 = vand.u32 2147483647, %v273
        %vm1938 = vcmp.le.f32.partialorder %v1937, 0.7853982
        %vm1939 = vcmp.lt.s32.totalorder %v273, 0
        %v1940 = vand.u32 %v273, 2139095040
        %v1941 = vshrl.u32 %v1940, 23
        %v1942 = vsub.s32 %v1941, 127
        %v1943 = vand.u32 2147483647, %v273
        %v1944 = vand.u32 %v1943, 8388607
        %v1945 = vor.u32 %v1944, 8388608
        %v1946 = vsub.s32 0, %v1945
        %v1947 = vadd.s32 %v1942, 1
        %vm1948 = vcmp.gt.s32.totalorder %v1947, 0
        %v1949 = vsel %vm1948, %v1947, 0
        %v1950 = vshrl.u32 %v1949, 5
        %v1951 = vand.u32 %v1949, 31
        %v1952 = vsub.s32 32, %v1951
        %v1953 = vshrl.u32 683565275, %v1952
        %v1954 = vshll.u32 683565275, %v1951
        %v1955 = vshrl.u32 2475754826, %v1952
        %v1956 = vor.u32 %v1954, %v1955
        %v1957 = vshll.u32 2475754826, %v1951
        %v1958 = vshrl.u32 2131351028, %v1952
        %v1959 = vor.u32 %v1957, %v1958
        %v1960 = vshll.u32 2131351028, %v1951
        %v1961 = vshrl.u32 2102212464, %v1952
        %v1962 = vor.u32 %v1960, %v1961
        %v1963 = vshll.u32 2102212464, %v1951
        %v1964 = vshrl.u32 920167782, %v1952
        %v1965 = vor.u32 %v1963, %v1964
        %v1966 = vshll.u32 920167782, %v1951
        %v1967 = vshrl.u32 1326507024, %v1952
        %v1968 = vor.u32 %v1966, %v1967
        %vm1969 = vcmp.lt.s32.totalorder %v1950, 1
        %vm1970 = vcmp.lt.s32.totalorder %v1950, 2
        %vm1971 = vcmp.lt.s32.totalorder %v1950, 3
        %vm1972 = vcmp.lt.s32.totalorder %v1950, 4
        %v1973 = vsel %vm1969, %v1953, %v1956
        %v1974 = vsel %vm1972, %v1962, 2102212464
        %v1975 = vsel %vm1971, %v1959, %v1974
        %v1976 = vsel %vm1970, %v1973, %v1975
        %v1977 = vsel %vm1969, %v1956, %v1959
        %v1978 = vsel %vm1972, %v1965, 920167782
        %v1979 = vsel %vm1971, %v1962, %v1978
        %v1980 = vsel %vm1970, %v1977, %v1979
        %v1981 = vsel %vm1969, %v1959, %v1962
        %v1982 = vsel %vm1972, %v1968, 1326507024
        %v1983 = vsel %vm1971, %v1965, %v1982
        %v1984 = vsel %vm1970, %v1981, %v1983
        %v1985 = vshll.u32 %v1945, 8
        %v1986 = vmul.u32.u64.compose %v1985, %v1984
        %v1987 = vextract.low.u32 %v1986
        %v1988 = vextract.high.u32 %v1986
        %v1989 = vmul.u32.u64.compose %v1985, %v1980
        %v1990 = vextract.low.u32 %v1989
        %v1991 = vextract.high.u32 %v1989
        %v1992 = vmul.u32 %v1985, %v1976
        %v1993 = vadd.s32 %v1988, %v1990
        %vm1994 = vc.u32 %v1988, %v1990
        %v1995 = vadd.s32 %v1991, 1
        %v1996 = vsel %vm1994, %v1995, %v1991
        %v1997 = vadd.s32 %v1992, %v1996
        %v1998 = vadd.s32 %v1997, 536870912
        %v1999 = vshrl.u32 %v1998, 30
        %v2000 = vshll.u32 %v1999, 30
        %v2001 = vsub.s32 %v1997, %v2000
        %vm2002 = vcmp.lt.s32.totalorder %v2001, 0
        %v2003 = vsub.s32 0, %v2001
        %v2004 = vsel %vm2002, %v2003, %v2001
        %v2005 = vclz %v2004
        %v2006 = vsub.s32 %v2005, 2
        %vm2007 = vcmp.gt.s32.totalorder 0, %v2006
        %v2008 = vsel %vm2007, 0, %v2006
        %v2009 = vsub.s32 32, %v2008
        %v2010 = vshll.u32 %v2001, %v2008
        %v2011 = vshrl.u32 %v1993, %v2009
        %v2012 = vor.u32 %v2010, %v2011
        %v2013 = vsub.s32 4294967266, %v2008
        %v2014 = vadd.s32 %v2013, 127
        %v2015 = vshll.u32 %v2014, 23
        %v2016 = vor.u32 4788187, %v2015
        %v2017 = vand.u32 2147483647, %v2016
        %v2019 = vcvt.s32.f32 %v2012
        %v2020 = vmul.f32 %v2019, %v2017
        %v2021 = vxor.u32 %v2020, 2147483648
        %v2022 = vsel %vm1939, %v2021, %v2020
        %v2023 = vsub.s32 4, %v1999
        %v2024 = vsel %vm1939, %v2023, %v1999
        %v2025 = vsel %vm1938, %v273, %v2022
        %v2026 = vsel %vm1938, 0, %v2024
        %v2027 = vcosq.f32.pop %v2025
        %v2028 = vsinq.f32.pop %v2025
        %vm2029 = vweird.f32 %v273
        %v2030 = vand.u32 %v2026, 3
        %vm2031 = vcmp.lt.s32.totalorder %v2030, 2
        %vm2032 = vcmp.eq.s32.totalorder %v2030, 0
        %v2033 = vxor.u32 %v2028, 2147483648
        %v2034 = vsel %vm2032, %v2027, %v2033
        %vm2035 = vcmp.eq.s32.totalorder %v2030, 2
        %v2036 = vxor.u32 %v2027, 2147483648
        %v2037 = vsel %vm2035, %v2036, %v2028
        %v2038 = vsel %vm2031, %v2034, %v2037
        %v2039 = vsel %vm2029, nan, %v2038
        %v2040 = vand.u32 2147483647, %v274
        %vm2041 = vcmp.le.f32.partialorder %v2040, 0.7853982
        %vm2042 = vcmp.lt.s32.totalorder %v274, 0
        %v2043 = vand.u32 %v274, 2139095040
        %v2044 = vshrl.u32 %v2043, 23
        %v2045 = vsub.s32 %v2044, 127
        %v2046 = vand.u32 2147483647, %v274
        %v2047 = vand.u32 %v2046, 8388607
        %v2048 = vor.u32 %v2047, 8388608
        %v2049 = vsub.s32 0, %v2048
        %v2050 = vadd.s32 %v2045, 1
        %vm2051 = vcmp.gt.s32.totalorder %v2050, 0
        %v2052 = vsel %vm2051, %v2050, 0
        %v2053 = vshrl.u32 %v2052, 5
        %v2054 = vand.u32 %v2052, 31
        %v2055 = vsub.s32 32, %v2054
        %v2056 = vshrl.u32 683565275, %v2055
        %v2057 = vshll.u32 683565275, %v2054
        %v2058 = vshrl.u32 2475754826, %v2055
        %v2059 = vor.u32 %v2057, %v2058
        %v2060 = vshll.u32 2475754826, %v2054
        %v2061 = vshrl.u32 2131351028, %v2055
        %v2062 = vor.u32 %v2060, %v2061
        %v2063 = vshll.u32 2131351028, %v2054
        %v2064 = vshrl.u32 2102212464, %v2055
        %v2065 = vor.u32 %v2063, %v2064
        %v2066 = vshll.u32 2102212464, %v2054
        %v2067 = vshrl.u32 920167782, %v2055
        %v2068 = vor.u32 %v2066, %v2067
        %v2069 = vshll.u32 920167782, %v2054
        %v2070 = vshrl.u32 1326507024, %v2055
        %v2071 = vor.u32 %v2069, %v2070
        %vm2072 = vcmp.lt.s32.totalorder %v2053, 1
        %vm2073 = vcmp.lt.s32.totalorder %v2053, 2
        %vm2074 = vcmp.lt.s32.totalorder %v2053, 3
        %vm2075 = vcmp.lt.s32.totalorder %v2053, 4
        %v2076 = vsel %vm2072, %v2056, %v2059
        %v2077 = vsel %vm2075, %v2065, 2102212464
        %v2078 = vsel %vm2074, %v2062, %v2077
        %v2079 = vsel %vm2073, %v2076, %v2078
        %v2080 = vsel %vm2072, %v2059, %v2062
        %v2081 = vsel %vm2075, %v2068, 920167782
        %v2082 = vsel %vm2074, %v2065, %v2081
        %v2083 = vsel %vm2073, %v2080, %v2082
        %v2084 = vsel %vm2072, %v2062, %v2065
        %v2085 = vsel %vm2075, %v2071, 1326507024
        %v2086 = vsel %vm2074, %v2068, %v2085
        %v2087 = vsel %vm2073, %v2084, %v2086
        %v2088 = vshll.u32 %v2048, 8
        %v2089 = vmul.u32.u64.compose %v2088, %v2087
        %v2090 = vextract.low.u32 %v2089
        %v2091 = vextract.high.u32 %v2089
        %v2092 = vmul.u32.u64.compose %v2088, %v2083
        %v2093 = vextract.low.u32 %v2092
        %v2094 = vextract.high.u32 %v2092
        %v2095 = vmul.u32 %v2088, %v2079
        %v2096 = vadd.s32 %v2091, %v2093
        %vm2097 = vc.u32 %v2091, %v2093
        %v2098 = vadd.s32 %v2094, 1
        %v2099 = vsel %vm2097, %v2098, %v2094
        %v2100 = vadd.s32 %v2095, %v2099
        %v2101 = vadd.s32 %v2100, 536870912
        %v2102 = vshrl.u32 %v2101, 30
        %v2103 = vshll.u32 %v2102, 30
        %v2104 = vsub.s32 %v2100, %v2103
        %vm2105 = vcmp.lt.s32.totalorder %v2104, 0
        %v2106 = vsub.s32 0, %v2104
        %v2107 = vsel %vm2105, %v2106, %v2104
        %v2108 = vclz %v2107
        %v2109 = vsub.s32 %v2108, 2
        %vm2110 = vcmp.gt.s32.totalorder 0, %v2109
        %v2111 = vsel %vm2110, 0, %v2109
        %v2112 = vsub.s32 32, %v2111
        %v2113 = vshll.u32 %v2104, %v2111
        %v2114 = vshrl.u32 %v2096, %v2112
        %v2115 = vor.u32 %v2113, %v2114
        %v2116 = vsub.s32 4294967266, %v2111
        %v2117 = vadd.s32 %v2116, 127
        %v2118 = vshll.u32 %v2117, 23
        %v2119 = vor.u32 4788187, %v2118
        %v2120 = vand.u32 2147483647, %v2119
        %v2122 = vcvt.s32.f32 %v2115
        %v2123 = vmul.f32 %v2122, %v2120
        %v2124 = vxor.u32 %v2123, 2147483648
        %v2125 = vsel %vm2042, %v2124, %v2123
        %v2126 = vsub.s32 4, %v2102
        %v2127 = vsel %vm2042, %v2126, %v2102
        %v2128 = vsel %vm2041, %v274, %v2125
        %v2129 = vsel %vm2041, 0, %v2127
        %v2130 = vcosq.f32.pop %v2128
        %v2131 = vsinq.f32.pop %v2128
        %vm2132 = vweird.f32 %v274
        %v2133 = vand.u32 %v2129, 3
        %vm2134 = vcmp.lt.s32.totalorder %v2133, 2
        %vm2135 = vcmp.eq.s32.totalorder %v2133, 0
        %v2136 = vxor.u32 %v2131, 2147483648
        %v2137 = vsel %vm2135, %v2130, %v2136
        %vm2138 = vcmp.eq.s32.totalorder %v2133, 2
        %v2139 = vxor.u32 %v2130, 2147483648
        %v2140 = vsel %vm2138, %v2139, %v2131
        %v2141 = vsel %vm2134, %v2137, %v2140
        %v2142 = vsel %vm2132, nan, %v2141
        %v2143 = vand.u32 2147483647, %v275
        %vm2144 = vcmp.le.f32.partialorder %v2143, 0.7853982
        %vm2145 = vcmp.lt.s32.totalorder %v275, 0
        %v2146 = vand.u32 %v275, 2139095040
        %v2147 = vshrl.u32 %v2146, 23
        %v2148 = vsub.s32 %v2147, 127
        %v2149 = vand.u32 2147483647, %v275
        %v2150 = vand.u32 %v2149, 8388607
        %v2151 = vor.u32 %v2150, 8388608
        %v2152 = vsub.s32 0, %v2151
        %v2153 = vadd.s32 %v2148, 1
        %vm2154 = vcmp.gt.s32.totalorder %v2153, 0
        %v2155 = vsel %vm2154, %v2153, 0
        %v2156 = vshrl.u32 %v2155, 5
        %v2157 = vand.u32 %v2155, 31
        %v2158 = vsub.s32 32, %v2157
        %v2159 = vshrl.u32 683565275, %v2158
        %v2160 = vshll.u32 683565275, %v2157
        %v2161 = vshrl.u32 2475754826, %v2158
        %v2162 = vor.u32 %v2160, %v2161
        %v2163 = vshll.u32 2475754826, %v2157
        %v2164 = vshrl.u32 2131351028, %v2158
        %v2165 = vor.u32 %v2163, %v2164
        %v2166 = vshll.u32 2131351028, %v2157
        %v2167 = vshrl.u32 2102212464, %v2158
        %v2168 = vor.u32 %v2166, %v2167
        %v2169 = vshll.u32 2102212464, %v2157
        %v2170 = vshrl.u32 920167782, %v2158
        %v2171 = vor.u32 %v2169, %v2170
        %v2172 = vshll.u32 920167782, %v2157
        %v2173 = vshrl.u32 1326507024, %v2158
        %v2174 = vor.u32 %v2172, %v2173
        %vm2175 = vcmp.lt.s32.totalorder %v2156, 1
        %vm2176 = vcmp.lt.s32.totalorder %v2156, 2
        %vm2177 = vcmp.lt.s32.totalorder %v2156, 3
        %vm2178 = vcmp.lt.s32.totalorder %v2156, 4
        %v2179 = vsel %vm2175, %v2159, %v2162
        %v2180 = vsel %vm2178, %v2168, 2102212464
        %v2181 = vsel %vm2177, %v2165, %v2180
        %v2182 = vsel %vm2176, %v2179, %v2181
        %v2183 = vsel %vm2175, %v2162, %v2165
        %v2184 = vsel %vm2178, %v2171, 920167782
        %v2185 = vsel %vm2177, %v2168, %v2184
        %v2186 = vsel %vm2176, %v2183, %v2185
        %v2187 = vsel %vm2175, %v2165, %v2168
        %v2188 = vsel %vm2178, %v2174, 1326507024
        %v2189 = vsel %vm2177, %v2171, %v2188
        %v2190 = vsel %vm2176, %v2187, %v2189
        %v2191 = vshll.u32 %v2151, 8
        %v2192 = vmul.u32.u64.compose %v2191, %v2190
        %v2193 = vextract.low.u32 %v2192
        %v2194 = vextract.high.u32 %v2192
        %v2195 = vmul.u32.u64.compose %v2191, %v2186
        %v2196 = vextract.low.u32 %v2195
        %v2197 = vextract.high.u32 %v2195
        %v2198 = vmul.u32 %v2191, %v2182
        %v2199 = vadd.s32 %v2194, %v2196
        %vm2200 = vc.u32 %v2194, %v2196
        %v2201 = vadd.s32 %v2197, 1
        %v2202 = vsel %vm2200, %v2201, %v2197
        %v2203 = vadd.s32 %v2198, %v2202
        %v2204 = vadd.s32 %v2203, 536870912
        %v2205 = vshrl.u32 %v2204, 30
        %v2206 = vshll.u32 %v2205, 30
        %v2207 = vsub.s32 %v2203, %v2206
        %vm2208 = vcmp.lt.s32.totalorder %v2207, 0
        %v2209 = vsub.s32 0, %v2207
        %v2210 = vsel %vm2208, %v2209, %v2207
        %v2211 = vclz %v2210
        %v2212 = vsub.s32 %v2211, 2
        %vm2213 = vcmp.gt.s32.totalorder 0, %v2212
        %v2214 = vsel %vm2213, 0, %v2212
        %v2215 = vsub.s32 32, %v2214
        %v2216 = vshll.u32 %v2207, %v2214
        %v2217 = vshrl.u32 %v2199, %v2215
        %v2218 = vor.u32 %v2216, %v2217
        %v2219 = vsub.s32 4294967266, %v2214
        %v2220 = vadd.s32 %v2219, 127
        %v2221 = vshll.u32 %v2220, 23
        %v2222 = vor.u32 4788187, %v2221
        %v2223 = vand.u32 2147483647, %v2222
        %v2225 = vcvt.s32.f32 %v2218
        %v2226 = vmul.f32 %v2225, %v2223
        %v2227 = vxor.u32 %v2226, 2147483648
        %v2228 = vsel %vm2145, %v2227, %v2226
        %v2229 = vsub.s32 4, %v2205
        %v2230 = vsel %vm2145, %v2229, %v2205
        %v2231 = vsel %vm2144, %v275, %v2228
        %v2232 = vsel %vm2144, 0, %v2230
        %v2233 = vcosq.f32.pop %v2231
        %v2234 = vsinq.f32.pop %v2231
        %vm2235 = vweird.f32 %v275
        %v2236 = vand.u32 %v2232, 3
        %vm2237 = vcmp.lt.s32.totalorder %v2236, 2
        %vm2238 = vcmp.eq.s32.totalorder %v2236, 0
        %v2239 = vxor.u32 %v2234, 2147483648
        %v2240 = vsel %vm2238, %v2233, %v2239
        %vm2241 = vcmp.eq.s32.totalorder %v2236, 2
        %v2242 = vxor.u32 %v2233, 2147483648
        %v2243 = vsel %vm2241, %v2242, %v2234
        %v2244 = vsel %vm2237, %v2240, %v2243
        %v2245 = vsel %vm2235, nan, %v2244
        %v2246 = vand.u32 2147483647, %v276
        %vm2247 = vcmp.le.f32.partialorder %v2246, 0.7853982
        %vm2248 = vcmp.lt.s32.totalorder %v276, 0
        %v2249 = vand.u32 %v276, 2139095040
        %v2250 = vshrl.u32 %v2249, 23
        %v2251 = vsub.s32 %v2250, 127
        %v2252 = vand.u32 2147483647, %v276
        %v2253 = vand.u32 %v2252, 8388607
        %v2254 = vor.u32 %v2253, 8388608
        %v2255 = vsub.s32 0, %v2254
        %v2256 = vadd.s32 %v2251, 1
        %vm2257 = vcmp.gt.s32.totalorder %v2256, 0
        %v2258 = vsel %vm2257, %v2256, 0
        %v2259 = vshrl.u32 %v2258, 5
        %v2260 = vand.u32 %v2258, 31
        %v2261 = vsub.s32 32, %v2260
        %v2262 = vshrl.u32 683565275, %v2261
        %v2263 = vshll.u32 683565275, %v2260
        %v2264 = vshrl.u32 2475754826, %v2261
        %v2265 = vor.u32 %v2263, %v2264
        %v2266 = vshll.u32 2475754826, %v2260
        %v2267 = vshrl.u32 2131351028, %v2261
        %v2268 = vor.u32 %v2266, %v2267
        %v2269 = vshll.u32 2131351028, %v2260
        %v2270 = vshrl.u32 2102212464, %v2261
        %v2271 = vor.u32 %v2269, %v2270
        %v2272 = vshll.u32 2102212464, %v2260
        %v2273 = vshrl.u32 920167782, %v2261
        %v2274 = vor.u32 %v2272, %v2273
        %v2275 = vshll.u32 920167782, %v2260
        %v2276 = vshrl.u32 1326507024, %v2261
        %v2277 = vor.u32 %v2275, %v2276
        %vm2278 = vcmp.lt.s32.totalorder %v2259, 1
        %vm2279 = vcmp.lt.s32.totalorder %v2259, 2
        %vm2280 = vcmp.lt.s32.totalorder %v2259, 3
        %vm2281 = vcmp.lt.s32.totalorder %v2259, 4
        %v2282 = vsel %vm2278, %v2262, %v2265
        %v2283 = vsel %vm2281, %v2271, 2102212464
        %v2284 = vsel %vm2280, %v2268, %v2283
        %v2285 = vsel %vm2279, %v2282, %v2284
        %v2286 = vsel %vm2278, %v2265, %v2268
        %v2287 = vsel %vm2281, %v2274, 920167782
        %v2288 = vsel %vm2280, %v2271, %v2287
        %v2289 = vsel %vm2279, %v2286, %v2288
        %v2290 = vsel %vm2278, %v2268, %v2271
        %v2291 = vsel %vm2281, %v2277, 1326507024
        %v2292 = vsel %vm2280, %v2274, %v2291
        %v2293 = vsel %vm2279, %v2290, %v2292
        %v2294 = vshll.u32 %v2254, 8
        %v2295 = vmul.u32.u64.compose %v2294, %v2293
        %v2296 = vextract.low.u32 %v2295
        %v2297 = vextract.high.u32 %v2295
        %v2298 = vmul.u32.u64.compose %v2294, %v2289
        %v2299 = vextract.low.u32 %v2298
        %v2300 = vextract.high.u32 %v2298
        %v2301 = vmul.u32 %v2294, %v2285
        %v2302 = vadd.s32 %v2297, %v2299
        %vm2303 = vc.u32 %v2297, %v2299
        %v2304 = vadd.s32 %v2300, 1
        %v2305 = vsel %vm2303, %v2304, %v2300
        %v2306 = vadd.s32 %v2301, %v2305
        %v2307 = vadd.s32 %v2306, 536870912
        %v2308 = vshrl.u32 %v2307, 30
        %v2309 = vshll.u32 %v2308, 30
        %v2310 = vsub.s32 %v2306, %v2309
        %vm2311 = vcmp.lt.s32.totalorder %v2310, 0
        %v2312 = vsub.s32 0, %v2310
        %v2313 = vsel %vm2311, %v2312, %v2310
        %v2314 = vclz %v2313
        %v2315 = vsub.s32 %v2314, 2
        %vm2316 = vcmp.gt.s32.totalorder 0, %v2315
        %v2317 = vsel %vm2316, 0, %v2315
        %v2318 = vsub.s32 32, %v2317
        %v2319 = vshll.u32 %v2310, %v2317
        %v2320 = vshrl.u32 %v2302, %v2318
        %v2321 = vor.u32 %v2319, %v2320
        %v2322 = vsub.s32 4294967266, %v2317
        %v2323 = vadd.s32 %v2322, 127
        %v2324 = vshll.u32 %v2323, 23
        %v2325 = vor.u32 4788187, %v2324
        %v2326 = vand.u32 2147483647, %v2325
        %v2328 = vcvt.s32.f32 %v2321
        %v2329 = vmul.f32 %v2328, %v2326
        %v2330 = vxor.u32 %v2329, 2147483648
        %v2331 = vsel %vm2248, %v2330, %v2329
        %v2332 = vsub.s32 4, %v2308
        %v2333 = vsel %vm2248, %v2332, %v2308
        %v2334 = vsel %vm2247, %v276, %v2331
        %v2335 = vsel %vm2247, 0, %v2333
        %v2336 = vcosq.f32.pop %v2334
        %v2337 = vsinq.f32.pop %v2334
        %vm2338 = vweird.f32 %v276
        %v2339 = vand.u32 %v2335, 3
        %vm2340 = vcmp.lt.s32.totalorder %v2339, 2
        %vm2341 = vcmp.eq.s32.totalorder %v2339, 0
        %v2342 = vxor.u32 %v2337, 2147483648
        %v2343 = vsel %vm2341, %v2336, %v2342
        %vm2344 = vcmp.eq.s32.totalorder %v2339, 2
        %v2345 = vxor.u32 %v2336, 2147483648
        %v2346 = vsel %vm2344, %v2345, %v2337
        %v2347 = vsel %vm2340, %v2343, %v2346
        %v2348 = vsel %vm2338, nan, %v2347
        %v2349 = vand.u32 2147483647, %v277
        %vm2350 = vcmp.le.f32.partialorder %v2349, 0.7853982
        %vm2351 = vcmp.lt.s32.totalorder %v277, 0
        %v2352 = vand.u32 %v277, 2139095040
        %v2353 = vshrl.u32 %v2352, 23
        %v2354 = vsub.s32 %v2353, 127
        %v2355 = vand.u32 2147483647, %v277
        %v2356 = vand.u32 %v2355, 8388607
        %v2357 = vor.u32 %v2356, 8388608
        %v2358 = vsub.s32 0, %v2357
        %v2359 = vadd.s32 %v2354, 1
        %vm2360 = vcmp.gt.s32.totalorder %v2359, 0
        %v2361 = vsel %vm2360, %v2359, 0
        %v2362 = vshrl.u32 %v2361, 5
        %v2363 = vand.u32 %v2361, 31
        %v2364 = vsub.s32 32, %v2363
        %v2365 = vshrl.u32 683565275, %v2364
        %v2366 = vshll.u32 683565275, %v2363
        %v2367 = vshrl.u32 2475754826, %v2364
        %v2368 = vor.u32 %v2366, %v2367
        %v2369 = vshll.u32 2475754826, %v2363
        %v2370 = vshrl.u32 2131351028, %v2364
        %v2371 = vor.u32 %v2369, %v2370
        %v2372 = vshll.u32 2131351028, %v2363
        %v2373 = vshrl.u32 2102212464, %v2364
        %v2374 = vor.u32 %v2372, %v2373
        %v2375 = vshll.u32 2102212464, %v2363
        %v2376 = vshrl.u32 920167782, %v2364
        %v2377 = vor.u32 %v2375, %v2376
        %v2378 = vshll.u32 920167782, %v2363
        %v2379 = vshrl.u32 1326507024, %v2364
        %v2380 = vor.u32 %v2378, %v2379
        %vm2381 = vcmp.lt.s32.totalorder %v2362, 1
        %vm2382 = vcmp.lt.s32.totalorder %v2362, 2
        %vm2383 = vcmp.lt.s32.totalorder %v2362, 3
        %vm2384 = vcmp.lt.s32.totalorder %v2362, 4
        %v2385 = vsel %vm2381, %v2365, %v2368
        %v2386 = vsel %vm2384, %v2374, 2102212464
        %v2387 = vsel %vm2383, %v2371, %v2386
        %v2388 = vsel %vm2382, %v2385, %v2387
        %v2389 = vsel %vm2381, %v2368, %v2371
        %v2390 = vsel %vm2384, %v2377, 920167782
        %v2391 = vsel %vm2383, %v2374, %v2390
        %v2392 = vsel %vm2382, %v2389, %v2391
        %v2393 = vsel %vm2381, %v2371, %v2374
        %v2394 = vsel %vm2384, %v2380, 1326507024
        %v2395 = vsel %vm2383, %v2377, %v2394
        %v2396 = vsel %vm2382, %v2393, %v2395
        %v2397 = vshll.u32 %v2357, 8
        %v2398 = vmul.u32.u64.compose %v2397, %v2396
        %v2399 = vextract.low.u32 %v2398
        %v2400 = vextract.high.u32 %v2398
        %v2401 = vmul.u32.u64.compose %v2397, %v2392
        %v2402 = vextract.low.u32 %v2401
        %v2403 = vextract.high.u32 %v2401
        %v2404 = vmul.u32 %v2397, %v2388
        %v2405 = vadd.s32 %v2400, %v2402
        %vm2406 = vc.u32 %v2400, %v2402
        %v2407 = vadd.s32 %v2403, 1
        %v2408 = vsel %vm2406, %v2407, %v2403
        %v2409 = vadd.s32 %v2404, %v2408
        %v2410 = vadd.s32 %v2409, 536870912
        %v2411 = vshrl.u32 %v2410, 30
        %v2412 = vshll.u32 %v2411, 30
        %v2413 = vsub.s32 %v2409, %v2412
        %vm2414 = vcmp.lt.s32.totalorder %v2413, 0
        %v2415 = vsub.s32 0, %v2413
        %v2416 = vsel %vm2414, %v2415, %v2413
        %v2417 = vclz %v2416
        %v2418 = vsub.s32 %v2417, 2
        %vm2419 = vcmp.gt.s32.totalorder 0, %v2418
        %v2420 = vsel %vm2419, 0, %v2418
        %v2421 = vsub.s32 32, %v2420
        %v2422 = vshll.u32 %v2413, %v2420
        %v2423 = vshrl.u32 %v2405, %v2421
        %v2424 = vor.u32 %v2422, %v2423
        %v2425 = vsub.s32 4294967266, %v2420
        %v2426 = vadd.s32 %v2425, 127
        %v2427 = vshll.u32 %v2426, 23
        %v2428 = vor.u32 4788187, %v2427
        %v2429 = vand.u32 2147483647, %v2428
        %v2431 = vcvt.s32.f32 %v2424
        %v2432 = vmul.f32 %v2431, %v2429
        %v2433 = vxor.u32 %v2432, 2147483648
        %v2434 = vsel %vm2351, %v2433, %v2432
        %v2435 = vsub.s32 4, %v2411
        %v2436 = vsel %vm2351, %v2435, %v2411
        %v2437 = vsel %vm2350, %v277, %v2434
        %v2438 = vsel %vm2350, 0, %v2436
        %v2439 = vcosq.f32.pop %v2437
        %v2440 = vsinq.f32.pop %v2437
        %vm2441 = vweird.f32 %v277
        %v2442 = vand.u32 %v2438, 3
        %vm2443 = vcmp.lt.s32.totalorder %v2442, 2
        %vm2444 = vcmp.eq.s32.totalorder %v2442, 0
        %v2445 = vxor.u32 %v2440, 2147483648
        %v2446 = vsel %vm2444, %v2439, %v2445
        %vm2447 = vcmp.eq.s32.totalorder %v2442, 2
        %v2448 = vxor.u32 %v2439, 2147483648
        %v2449 = vsel %vm2447, %v2448, %v2440
        %v2450 = vsel %vm2443, %v2446, %v2449
        %v2451 = vsel %vm2441, nan, %v2450
        %v2452 = vand.u32 2147483647, %v278
        %vm2453 = vcmp.le.f32.partialorder %v2452, 0.7853982
        %vm2454 = vcmp.lt.s32.totalorder %v278, 0
        %v2455 = vand.u32 %v278, 2139095040
        %v2456 = vshrl.u32 %v2455, 23
        %v2457 = vsub.s32 %v2456, 127
        %v2458 = vand.u32 2147483647, %v278
        %v2459 = vand.u32 %v2458, 8388607
        %v2460 = vor.u32 %v2459, 8388608
        %v2461 = vsub.s32 0, %v2460
        %v2462 = vadd.s32 %v2457, 1
        %vm2463 = vcmp.gt.s32.totalorder %v2462, 0
        %v2464 = vsel %vm2463, %v2462, 0
        %v2465 = vshrl.u32 %v2464, 5
        %v2466 = vand.u32 %v2464, 31
        %v2467 = vsub.s32 32, %v2466
        %v2468 = vshrl.u32 683565275, %v2467
        %v2469 = vshll.u32 683565275, %v2466
        %v2470 = vshrl.u32 2475754826, %v2467
        %v2471 = vor.u32 %v2469, %v2470
        %v2472 = vshll.u32 2475754826, %v2466
        %v2473 = vshrl.u32 2131351028, %v2467
        %v2474 = vor.u32 %v2472, %v2473
        %v2475 = vshll.u32 2131351028, %v2466
        %v2476 = vshrl.u32 2102212464, %v2467
        %v2477 = vor.u32 %v2475, %v2476
        %v2478 = vshll.u32 2102212464, %v2466
        %v2479 = vshrl.u32 920167782, %v2467
        %v2480 = vor.u32 %v2478, %v2479
        %v2481 = vshll.u32 920167782, %v2466
        %v2482 = vshrl.u32 1326507024, %v2467
        %v2483 = vor.u32 %v2481, %v2482
        %vm2484 = vcmp.lt.s32.totalorder %v2465, 1
        %vm2485 = vcmp.lt.s32.totalorder %v2465, 2
        %vm2486 = vcmp.lt.s32.totalorder %v2465, 3
        %vm2487 = vcmp.lt.s32.totalorder %v2465, 4
        %v2488 = vsel %vm2484, %v2468, %v2471
        %v2489 = vsel %vm2487, %v2477, 2102212464
        %v2490 = vsel %vm2486, %v2474, %v2489
        %v2491 = vsel %vm2485, %v2488, %v2490
        %v2492 = vsel %vm2484, %v2471, %v2474
        %v2493 = vsel %vm2487, %v2480, 920167782
        %v2494 = vsel %vm2486, %v2477, %v2493
        %v2495 = vsel %vm2485, %v2492, %v2494
        %v2496 = vsel %vm2484, %v2474, %v2477
        %v2497 = vsel %vm2487, %v2483, 1326507024
        %v2498 = vsel %vm2486, %v2480, %v2497
        %v2499 = vsel %vm2485, %v2496, %v2498
        %v2500 = vshll.u32 %v2460, 8
        %v2501 = vmul.u32.u64.compose %v2500, %v2499
        %v2502 = vextract.low.u32 %v2501
        %v2503 = vextract.high.u32 %v2501
        %v2504 = vmul.u32.u64.compose %v2500, %v2495
        %v2505 = vextract.low.u32 %v2504
        %v2506 = vextract.high.u32 %v2504
        %v2507 = vmul.u32 %v2500, %v2491
        %v2508 = vadd.s32 %v2503, %v2505
        %vm2509 = vc.u32 %v2503, %v2505
        %v2510 = vadd.s32 %v2506, 1
        %v2511 = vsel %vm2509, %v2510, %v2506
        %v2512 = vadd.s32 %v2507, %v2511
        %v2513 = vadd.s32 %v2512, 536870912
        %v2514 = vshrl.u32 %v2513, 30
        %v2515 = vshll.u32 %v2514, 30
        %v2516 = vsub.s32 %v2512, %v2515
        %vm2517 = vcmp.lt.s32.totalorder %v2516, 0
        %v2518 = vsub.s32 0, %v2516
        %v2519 = vsel %vm2517, %v2518, %v2516
        %v2520 = vclz %v2519
        %v2521 = vsub.s32 %v2520, 2
        %vm2522 = vcmp.gt.s32.totalorder 0, %v2521
        %v2523 = vsel %vm2522, 0, %v2521
        %v2524 = vsub.s32 32, %v2523
        %v2525 = vshll.u32 %v2516, %v2523
        %v2526 = vshrl.u32 %v2508, %v2524
        %v2527 = vor.u32 %v2525, %v2526
        %v2528 = vsub.s32 4294967266, %v2523
        %v2529 = vadd.s32 %v2528, 127
        %v2530 = vshll.u32 %v2529, 23
        %v2531 = vor.u32 4788187, %v2530
        %v2532 = vand.u32 2147483647, %v2531
        %v2534 = vcvt.s32.f32 %v2527
        %v2535 = vmul.f32 %v2534, %v2532
        %v2536 = vxor.u32 %v2535, 2147483648
        %v2537 = vsel %vm2454, %v2536, %v2535
        %v2538 = vsub.s32 4, %v2514
        %v2539 = vsel %vm2454, %v2538, %v2514
        %v2540 = vsel %vm2453, %v278, %v2537
        %v2541 = vsel %vm2453, 0, %v2539
        %v2542 = vcosq.f32.pop %v2540
        %v2543 = vsinq.f32.pop %v2540
        %vm2544 = vweird.f32 %v278
        %v2545 = vand.u32 %v2541, 3
        %vm2546 = vcmp.lt.s32.totalorder %v2545, 2
        %vm2547 = vcmp.eq.s32.totalorder %v2545, 0
        %v2548 = vxor.u32 %v2543, 2147483648
        %v2549 = vsel %vm2547, %v2542, %v2548
        %vm2550 = vcmp.eq.s32.totalorder %v2545, 2
        %v2551 = vxor.u32 %v2542, 2147483648
        %v2552 = vsel %vm2550, %v2551, %v2543
        %v2553 = vsel %vm2546, %v2549, %v2552
        %v2554 = vsel %vm2544, nan, %v2553
        %v2555 = vand.u32 2147483647, %v279
        %vm2556 = vcmp.le.f32.partialorder %v2555, 0.7853982
        %vm2557 = vcmp.lt.s32.totalorder %v279, 0
        %v2558 = vand.u32 %v279, 2139095040
        %v2559 = vshrl.u32 %v2558, 23
        %v2560 = vsub.s32 %v2559, 127
        %v2561 = vand.u32 2147483647, %v279
        %v2562 = vand.u32 %v2561, 8388607
        %v2563 = vor.u32 %v2562, 8388608
        %v2564 = vsub.s32 0, %v2563
        %v2565 = vadd.s32 %v2560, 1
        %vm2566 = vcmp.gt.s32.totalorder %v2565, 0
        %v2567 = vsel %vm2566, %v2565, 0
        %v2568 = vshrl.u32 %v2567, 5
        %v2569 = vand.u32 %v2567, 31
        %v2570 = vsub.s32 32, %v2569
        %v2571 = vshrl.u32 683565275, %v2570
        %v2572 = vshll.u32 683565275, %v2569
        %v2573 = vshrl.u32 2475754826, %v2570
        %v2574 = vor.u32 %v2572, %v2573
        %v2575 = vshll.u32 2475754826, %v2569
        %v2576 = vshrl.u32 2131351028, %v2570
        %v2577 = vor.u32 %v2575, %v2576
        %v2578 = vshll.u32 2131351028, %v2569
        %v2579 = vshrl.u32 2102212464, %v2570
        %v2580 = vor.u32 %v2578, %v2579
        %v2581 = vshll.u32 2102212464, %v2569
        %v2582 = vshrl.u32 920167782, %v2570
        %v2583 = vor.u32 %v2581, %v2582
        %v2584 = vshll.u32 920167782, %v2569
        %v2585 = vshrl.u32 1326507024, %v2570
        %v2586 = vor.u32 %v2584, %v2585
        %vm2587 = vcmp.lt.s32.totalorder %v2568, 1
        %vm2588 = vcmp.lt.s32.totalorder %v2568, 2
        %vm2589 = vcmp.lt.s32.totalorder %v2568, 3
        %vm2590 = vcmp.lt.s32.totalorder %v2568, 4
        %v2591 = vsel %vm2587, %v2571, %v2574
        %v2592 = vsel %vm2590, %v2580, 2102212464
        %v2593 = vsel %vm2589, %v2577, %v2592
        %v2594 = vsel %vm2588, %v2591, %v2593
        %v2595 = vsel %vm2587, %v2574, %v2577
        %v2596 = vsel %vm2590, %v2583, 920167782
        %v2597 = vsel %vm2589, %v2580, %v2596
        %v2598 = vsel %vm2588, %v2595, %v2597
        %v2599 = vsel %vm2587, %v2577, %v2580
        %v2600 = vsel %vm2590, %v2586, 1326507024
        %v2601 = vsel %vm2589, %v2583, %v2600
        %v2602 = vsel %vm2588, %v2599, %v2601
        %v2603 = vshll.u32 %v2563, 8
        %v2604 = vmul.u32.u64.compose %v2603, %v2602
        %v2605 = vextract.low.u32 %v2604
        %v2606 = vextract.high.u32 %v2604
        %v2607 = vmul.u32.u64.compose %v2603, %v2598
        %v2608 = vextract.low.u32 %v2607
        %v2609 = vextract.high.u32 %v2607
        %v2610 = vmul.u32 %v2603, %v2594
        %v2611 = vadd.s32 %v2606, %v2608
        %vm2612 = vc.u32 %v2606, %v2608
        %v2613 = vadd.s32 %v2609, 1
        %v2614 = vsel %vm2612, %v2613, %v2609
        %v2615 = vadd.s32 %v2610, %v2614
        %v2616 = vadd.s32 %v2615, 536870912
        %v2617 = vshrl.u32 %v2616, 30
        %v2618 = vshll.u32 %v2617, 30
        %v2619 = vsub.s32 %v2615, %v2618
        %vm2620 = vcmp.lt.s32.totalorder %v2619, 0
        %v2621 = vsub.s32 0, %v2619
        %v2622 = vsel %vm2620, %v2621, %v2619
        %v2623 = vclz %v2622
        %v2624 = vsub.s32 %v2623, 2
        %vm2625 = vcmp.gt.s32.totalorder 0, %v2624
        %v2626 = vsel %vm2625, 0, %v2624
        %v2627 = vsub.s32 32, %v2626
        %v2628 = vshll.u32 %v2619, %v2626
        %v2629 = vshrl.u32 %v2611, %v2627
        %v2630 = vor.u32 %v2628, %v2629
        %v2631 = vsub.s32 4294967266, %v2626
        %v2632 = vadd.s32 %v2631, 127
        %v2633 = vshll.u32 %v2632, 23
        %v2634 = vor.u32 4788187, %v2633
        %v2635 = vand.u32 2147483647, %v2634
        %v2637 = vcvt.s32.f32 %v2630
        %v2638 = vmul.f32 %v2637, %v2635
        %v2639 = vxor.u32 %v2638, 2147483648
        %v2640 = vsel %vm2557, %v2639, %v2638
        %v2641 = vsub.s32 4, %v2617
        %v2642 = vsel %vm2557, %v2641, %v2617
        %v2643 = vsel %vm2556, %v279, %v2640
        %v2644 = vsel %vm2556, 0, %v2642
        %v2645 = vcosq.f32.pop %v2643
        %v2646 = vsinq.f32.pop %v2643
        %vm2647 = vweird.f32 %v279
        %v2648 = vand.u32 %v2644, 3
        %vm2649 = vcmp.lt.s32.totalorder %v2648, 2
        %vm2650 = vcmp.eq.s32.totalorder %v2648, 0
        %v2651 = vxor.u32 %v2646, 2147483648
        %v2652 = vsel %vm2650, %v2645, %v2651
        %vm2653 = vcmp.eq.s32.totalorder %v2648, 2
        %v2654 = vxor.u32 %v2645, 2147483648
        %v2655 = vsel %vm2653, %v2654, %v2646
        %v2656 = vsel %vm2649, %v2652, %v2655
        %v2657 = vsel %vm2647, nan, %v2656
        %v2658 = vand.u32 2147483647, %v280
        %vm2659 = vcmp.le.f32.partialorder %v2658, 0.7853982
        %vm2660 = vcmp.lt.s32.totalorder %v280, 0
        %v2661 = vand.u32 %v280, 2139095040
        %v2662 = vshrl.u32 %v2661, 23
        %v2663 = vsub.s32 %v2662, 127
        %v2664 = vand.u32 2147483647, %v280
        %v2665 = vand.u32 %v2664, 8388607
        %v2666 = vor.u32 %v2665, 8388608
        %v2667 = vsub.s32 0, %v2666
        %v2668 = vadd.s32 %v2663, 1
        %vm2669 = vcmp.gt.s32.totalorder %v2668, 0
        %v2670 = vsel %vm2669, %v2668, 0
        %v2671 = vshrl.u32 %v2670, 5
        %v2672 = vand.u32 %v2670, 31
        %v2673 = vsub.s32 32, %v2672
        %v2674 = vshrl.u32 683565275, %v2673
        %v2675 = vshll.u32 683565275, %v2672
        %v2676 = vshrl.u32 2475754826, %v2673
        %v2677 = vor.u32 %v2675, %v2676
        %v2678 = vshll.u32 2475754826, %v2672
        %v2679 = vshrl.u32 2131351028, %v2673
        %v2680 = vor.u32 %v2678, %v2679
        %v2681 = vshll.u32 2131351028, %v2672
        %v2682 = vshrl.u32 2102212464, %v2673
        %v2683 = vor.u32 %v2681, %v2682
        %v2684 = vshll.u32 2102212464, %v2672
        %v2685 = vshrl.u32 920167782, %v2673
        %v2686 = vor.u32 %v2684, %v2685
        %v2687 = vshll.u32 920167782, %v2672
        %v2688 = vshrl.u32 1326507024, %v2673
        %v2689 = vor.u32 %v2687, %v2688
        %vm2690 = vcmp.lt.s32.totalorder %v2671, 1
        %vm2691 = vcmp.lt.s32.totalorder %v2671, 2
        %vm2692 = vcmp.lt.s32.totalorder %v2671, 3
        %vm2693 = vcmp.lt.s32.totalorder %v2671, 4
        %v2694 = vsel %vm2690, %v2674, %v2677
        %v2695 = vsel %vm2693, %v2683, 2102212464
        %v2696 = vsel %vm2692, %v2680, %v2695
        %v2697 = vsel %vm2691, %v2694, %v2696
        %v2698 = vsel %vm2690, %v2677, %v2680
        %v2699 = vsel %vm2693, %v2686, 920167782
        %v2700 = vsel %vm2692, %v2683, %v2699
        %v2701 = vsel %vm2691, %v2698, %v2700
        %v2702 = vsel %vm2690, %v2680, %v2683
        %v2703 = vsel %vm2693, %v2689, 1326507024
        %v2704 = vsel %vm2692, %v2686, %v2703
        %v2705 = vsel %vm2691, %v2702, %v2704
        %v2706 = vshll.u32 %v2666, 8
        %v2707 = vmul.u32.u64.compose %v2706, %v2705
        %v2708 = vextract.low.u32 %v2707
        %v2709 = vextract.high.u32 %v2707
        %v2710 = vmul.u32.u64.compose %v2706, %v2701
        %v2711 = vextract.low.u32 %v2710
        %v2712 = vextract.high.u32 %v2710
        %v2713 = vmul.u32 %v2706, %v2697
        %v2714 = vadd.s32 %v2709, %v2711
        %vm2715 = vc.u32 %v2709, %v2711
        %v2716 = vadd.s32 %v2712, 1
        %v2717 = vsel %vm2715, %v2716, %v2712
        %v2718 = vadd.s32 %v2713, %v2717
        %v2719 = vadd.s32 %v2718, 536870912
        %v2720 = vshrl.u32 %v2719, 30
        %v2721 = vshll.u32 %v2720, 30
        %v2722 = vsub.s32 %v2718, %v2721
        %vm2723 = vcmp.lt.s32.totalorder %v2722, 0
        %v2724 = vsub.s32 0, %v2722
        %v2725 = vsel %vm2723, %v2724, %v2722
        %v2726 = vclz %v2725
        %v2727 = vsub.s32 %v2726, 2
        %vm2728 = vcmp.gt.s32.totalorder 0, %v2727
        %v2729 = vsel %vm2728, 0, %v2727
        %v2730 = vsub.s32 32, %v2729
        %v2731 = vshll.u32 %v2722, %v2729
        %v2732 = vshrl.u32 %v2714, %v2730
        %v2733 = vor.u32 %v2731, %v2732
        %v2734 = vsub.s32 4294967266, %v2729
        %v2735 = vadd.s32 %v2734, 127
        %v2736 = vshll.u32 %v2735, 23
        %v2737 = vor.u32 4788187, %v2736
        %v2738 = vand.u32 2147483647, %v2737
        %v2740 = vcvt.s32.f32 %v2733
        %v2741 = vmul.f32 %v2740, %v2738
        %v2742 = vxor.u32 %v2741, 2147483648
        %v2743 = vsel %vm2660, %v2742, %v2741
        %v2744 = vsub.s32 4, %v2720
        %v2745 = vsel %vm2660, %v2744, %v2720
        %v2746 = vsel %vm2659, %v280, %v2743
        %v2747 = vsel %vm2659, 0, %v2745
        %v2748 = vcosq.f32.pop %v2746
        %v2749 = vsinq.f32.pop %v2746
        %vm2750 = vweird.f32 %v280
        %v2751 = vand.u32 %v2747, 3
        %vm2752 = vcmp.lt.s32.totalorder %v2751, 2
        %vm2753 = vcmp.eq.s32.totalorder %v2751, 0
        %v2754 = vxor.u32 %v2749, 2147483648
        %v2755 = vsel %vm2753, %v2748, %v2754
        %vm2756 = vcmp.eq.s32.totalorder %v2751, 2
        %v2757 = vxor.u32 %v2748, 2147483648
        %v2758 = vsel %vm2756, %v2757, %v2749
        %v2759 = vsel %vm2752, %v2755, %v2758
        %v2760 = vsel %vm2750, nan, %v2759
        %v2761 = vand.u32 2147483647, %v281
        %vm2762 = vcmp.le.f32.partialorder %v2761, 0.7853982
        %vm2763 = vcmp.lt.s32.totalorder %v281, 0
        %v2764 = vand.u32 %v281, 2139095040
        %v2765 = vshrl.u32 %v2764, 23
        %v2766 = vsub.s32 %v2765, 127
        %v2767 = vand.u32 2147483647, %v281
        %v2768 = vand.u32 %v2767, 8388607
        %v2769 = vor.u32 %v2768, 8388608
        %v2770 = vsub.s32 0, %v2769
        %v2771 = vadd.s32 %v2766, 1
        %vm2772 = vcmp.gt.s32.totalorder %v2771, 0
        %v2773 = vsel %vm2772, %v2771, 0
        %v2774 = vshrl.u32 %v2773, 5
        %v2775 = vand.u32 %v2773, 31
        %v2776 = vsub.s32 32, %v2775
        %v2777 = vshrl.u32 683565275, %v2776
        %v2778 = vshll.u32 683565275, %v2775
        %v2779 = vshrl.u32 2475754826, %v2776
        %v2780 = vor.u32 %v2778, %v2779
        %v2781 = vshll.u32 2475754826, %v2775
        %v2782 = vshrl.u32 2131351028, %v2776
        %v2783 = vor.u32 %v2781, %v2782
        %v2784 = vshll.u32 2131351028, %v2775
        %v2785 = vshrl.u32 2102212464, %v2776
        %v2786 = vor.u32 %v2784, %v2785
        %v2787 = vshll.u32 2102212464, %v2775
        %v2788 = vshrl.u32 920167782, %v2776
        %v2789 = vor.u32 %v2787, %v2788
        %v2790 = vshll.u32 920167782, %v2775
        %v2791 = vshrl.u32 1326507024, %v2776
        %v2792 = vor.u32 %v2790, %v2791
        %vm2793 = vcmp.lt.s32.totalorder %v2774, 1
        %vm2794 = vcmp.lt.s32.totalorder %v2774, 2
        %vm2795 = vcmp.lt.s32.totalorder %v2774, 3
        %vm2796 = vcmp.lt.s32.totalorder %v2774, 4
        %v2797 = vsel %vm2793, %v2777, %v2780
        %v2798 = vsel %vm2796, %v2786, 2102212464
        %v2799 = vsel %vm2795, %v2783, %v2798
        %v2800 = vsel %vm2794, %v2797, %v2799
        %v2801 = vsel %vm2793, %v2780, %v2783
        %v2802 = vsel %vm2796, %v2789, 920167782
        %v2803 = vsel %vm2795, %v2786, %v2802
        %v2804 = vsel %vm2794, %v2801, %v2803
        %v2805 = vsel %vm2793, %v2783, %v2786
        %v2806 = vsel %vm2796, %v2792, 1326507024
        %v2807 = vsel %vm2795, %v2789, %v2806
        %v2808 = vsel %vm2794, %v2805, %v2807
        %v2809 = vshll.u32 %v2769, 8
        %v2810 = vmul.u32.u64.compose %v2809, %v2808
        %v2811 = vextract.low.u32 %v2810
        %v2812 = vextract.high.u32 %v2810
        %v2813 = vmul.u32.u64.compose %v2809, %v2804
        %v2814 = vextract.low.u32 %v2813
        %v2815 = vextract.high.u32 %v2813
        %v2816 = vmul.u32 %v2809, %v2800
        %v2817 = vadd.s32 %v2812, %v2814
        %vm2818 = vc.u32 %v2812, %v2814
        %v2819 = vadd.s32 %v2815, 1
        %v2820 = vsel %vm2818, %v2819, %v2815
        %v2821 = vadd.s32 %v2816, %v2820
        %v2822 = vadd.s32 %v2821, 536870912
        %v2823 = vshrl.u32 %v2822, 30
        %v2824 = vshll.u32 %v2823, 30
        %v2825 = vsub.s32 %v2821, %v2824
        %vm2826 = vcmp.lt.s32.totalorder %v2825, 0
        %v2827 = vsub.s32 0, %v2825
        %v2828 = vsel %vm2826, %v2827, %v2825
        %v2829 = vclz %v2828
        %v2830 = vsub.s32 %v2829, 2
        %vm2831 = vcmp.gt.s32.totalorder 0, %v2830
        %v2832 = vsel %vm2831, 0, %v2830
        %v2833 = vsub.s32 32, %v2832
        %v2834 = vshll.u32 %v2825, %v2832
        %v2835 = vshrl.u32 %v2817, %v2833
        %v2836 = vor.u32 %v2834, %v2835
        %v2837 = vsub.s32 4294967266, %v2832
        %v2838 = vadd.s32 %v2837, 127
        %v2839 = vshll.u32 %v2838, 23
        %v2840 = vor.u32 4788187, %v2839
        %v2841 = vand.u32 2147483647, %v2840
        %v2843 = vcvt.s32.f32 %v2836
        %v2844 = vmul.f32 %v2843, %v2841
        %v2845 = vxor.u32 %v2844, 2147483648
        %v2846 = vsel %vm2763, %v2845, %v2844
        %v2847 = vsub.s32 4, %v2823
        %v2848 = vsel %vm2763, %v2847, %v2823
        %v2849 = vsel %vm2762, %v281, %v2846
        %v2850 = vsel %vm2762, 0, %v2848
        %v2851 = vcosq.f32.pop %v2849
        %v2852 = vsinq.f32.pop %v2849
        %vm2853 = vweird.f32 %v281
        %v2854 = vand.u32 %v2850, 3
        %vm2855 = vcmp.lt.s32.totalorder %v2854, 2
        %vm2856 = vcmp.eq.s32.totalorder %v2854, 0
        %v2857 = vxor.u32 %v2852, 2147483648
        %v2858 = vsel %vm2856, %v2851, %v2857
        %vm2859 = vcmp.eq.s32.totalorder %v2854, 2
        %v2860 = vxor.u32 %v2851, 2147483648
        %v2861 = vsel %vm2859, %v2860, %v2852
        %v2862 = vsel %vm2855, %v2858, %v2861
        %v2863 = vsel %vm2853, nan, %v2862
        %v2864 = vand.u32 2147483647, %v282
        %vm2865 = vcmp.le.f32.partialorder %v2864, 0.7853982
        %vm2866 = vcmp.lt.s32.totalorder %v282, 0
        %v2867 = vand.u32 %v282, 2139095040
        %v2868 = vshrl.u32 %v2867, 23
        %v2869 = vsub.s32 %v2868, 127
        %v2870 = vand.u32 2147483647, %v282
        %v2871 = vand.u32 %v2870, 8388607
        %v2872 = vor.u32 %v2871, 8388608
        %v2873 = vsub.s32 0, %v2872
        %v2874 = vadd.s32 %v2869, 1
        %vm2875 = vcmp.gt.s32.totalorder %v2874, 0
        %v2876 = vsel %vm2875, %v2874, 0
        %v2877 = vshrl.u32 %v2876, 5
        %v2878 = vand.u32 %v2876, 31
        %v2879 = vsub.s32 32, %v2878
        %v2880 = vshrl.u32 683565275, %v2879
        %v2881 = vshll.u32 683565275, %v2878
        %v2882 = vshrl.u32 2475754826, %v2879
        %v2883 = vor.u32 %v2881, %v2882
        %v2884 = vshll.u32 2475754826, %v2878
        %v2885 = vshrl.u32 2131351028, %v2879
        %v2886 = vor.u32 %v2884, %v2885
        %v2887 = vshll.u32 2131351028, %v2878
        %v2888 = vshrl.u32 2102212464, %v2879
        %v2889 = vor.u32 %v2887, %v2888
        %v2890 = vshll.u32 2102212464, %v2878
        %v2891 = vshrl.u32 920167782, %v2879
        %v2892 = vor.u32 %v2890, %v2891
        %v2893 = vshll.u32 920167782, %v2878
        %v2894 = vshrl.u32 1326507024, %v2879
        %v2895 = vor.u32 %v2893, %v2894
        %vm2896 = vcmp.lt.s32.totalorder %v2877, 1
        %vm2897 = vcmp.lt.s32.totalorder %v2877, 2
        %vm2898 = vcmp.lt.s32.totalorder %v2877, 3
        %vm2899 = vcmp.lt.s32.totalorder %v2877, 4
        %v2900 = vsel %vm2896, %v2880, %v2883
        %v2901 = vsel %vm2899, %v2889, 2102212464
        %v2902 = vsel %vm2898, %v2886, %v2901
        %v2903 = vsel %vm2897, %v2900, %v2902
        %v2904 = vsel %vm2896, %v2883, %v2886
        %v2905 = vsel %vm2899, %v2892, 920167782
        %v2906 = vsel %vm2898, %v2889, %v2905
        %v2907 = vsel %vm2897, %v2904, %v2906
        %v2908 = vsel %vm2896, %v2886, %v2889
        %v2909 = vsel %vm2899, %v2895, 1326507024
        %v2910 = vsel %vm2898, %v2892, %v2909
        %v2911 = vsel %vm2897, %v2908, %v2910
        %v2912 = vshll.u32 %v2872, 8
        %v2913 = vmul.u32.u64.compose %v2912, %v2911
        %v2914 = vextract.low.u32 %v2913
        %v2915 = vextract.high.u32 %v2913
        %v2916 = vmul.u32.u64.compose %v2912, %v2907
        %v2917 = vextract.low.u32 %v2916
        %v2918 = vextract.high.u32 %v2916
        %v2919 = vmul.u32 %v2912, %v2903
        %v2920 = vadd.s32 %v2915, %v2917
        %vm2921 = vc.u32 %v2915, %v2917
        %v2922 = vadd.s32 %v2918, 1
        %v2923 = vsel %vm2921, %v2922, %v2918
        %v2924 = vadd.s32 %v2919, %v2923
        %v2925 = vadd.s32 %v2924, 536870912
        %v2926 = vshrl.u32 %v2925, 30
        %v2927 = vshll.u32 %v2926, 30
        %v2928 = vsub.s32 %v2924, %v2927
        %vm2929 = vcmp.lt.s32.totalorder %v2928, 0
        %v2930 = vsub.s32 0, %v2928
        %v2931 = vsel %vm2929, %v2930, %v2928
        %v2932 = vclz %v2931
        %v2933 = vsub.s32 %v2932, 2
        %vm2934 = vcmp.gt.s32.totalorder 0, %v2933
        %v2935 = vsel %vm2934, 0, %v2933
        %v2936 = vsub.s32 32, %v2935
        %v2937 = vshll.u32 %v2928, %v2935
        %v2938 = vshrl.u32 %v2920, %v2936
        %v2939 = vor.u32 %v2937, %v2938
        %v2940 = vsub.s32 4294967266, %v2935
        %v2941 = vadd.s32 %v2940, 127
        %v2942 = vshll.u32 %v2941, 23
        %v2943 = vor.u32 4788187, %v2942
        %v2944 = vand.u32 2147483647, %v2943
        %v2946 = vcvt.s32.f32 %v2939
        %v2947 = vmul.f32 %v2946, %v2944
        %v2948 = vxor.u32 %v2947, 2147483648
        %v2949 = vsel %vm2866, %v2948, %v2947
        %v2950 = vsub.s32 4, %v2926
        %v2951 = vsel %vm2866, %v2950, %v2926
        %v2952 = vsel %vm2865, %v282, %v2949
        %v2953 = vsel %vm2865, 0, %v2951
        %v2954 = vcosq.f32.pop %v2952
        %v2955 = vsinq.f32.pop %v2952
        %vm2956 = vweird.f32 %v282
        %v2957 = vand.u32 %v2953, 3
        %vm2958 = vcmp.lt.s32.totalorder %v2957, 2
        %vm2959 = vcmp.eq.s32.totalorder %v2957, 0
        %v2960 = vxor.u32 %v2955, 2147483648
        %v2961 = vsel %vm2959, %v2954, %v2960
        %vm2962 = vcmp.eq.s32.totalorder %v2957, 2
        %v2963 = vxor.u32 %v2954, 2147483648
        %v2964 = vsel %vm2962, %v2963, %v2955
        %v2965 = vsel %vm2958, %v2961, %v2964
        %v2966 = vsel %vm2956, nan, %v2965
        %v2967 = vand.u32 2147483647, %v283
        %vm2968 = vcmp.le.f32.partialorder %v2967, 0.7853982
        %vm2969 = vcmp.lt.s32.totalorder %v283, 0
        %v2970 = vand.u32 %v283, 2139095040
        %v2971 = vshrl.u32 %v2970, 23
        %v2972 = vsub.s32 %v2971, 127
        %v2973 = vand.u32 2147483647, %v283
        %v2974 = vand.u32 %v2973, 8388607
        %v2975 = vor.u32 %v2974, 8388608
        %v2976 = vsub.s32 0, %v2975
        %v2977 = vadd.s32 %v2972, 1
        %vm2978 = vcmp.gt.s32.totalorder %v2977, 0
        %v2979 = vsel %vm2978, %v2977, 0
        %v2980 = vshrl.u32 %v2979, 5
        %v2981 = vand.u32 %v2979, 31
        %v2982 = vsub.s32 32, %v2981
        %v2983 = vshrl.u32 683565275, %v2982
        %v2984 = vshll.u32 683565275, %v2981
        %v2985 = vshrl.u32 2475754826, %v2982
        %v2986 = vor.u32 %v2984, %v2985
        %v2987 = vshll.u32 2475754826, %v2981
        %v2988 = vshrl.u32 2131351028, %v2982
        %v2989 = vor.u32 %v2987, %v2988
        %v2990 = vshll.u32 2131351028, %v2981
        %v2991 = vshrl.u32 2102212464, %v2982
        %v2992 = vor.u32 %v2990, %v2991
        %v2993 = vshll.u32 2102212464, %v2981
        %v2994 = vshrl.u32 920167782, %v2982
        %v2995 = vor.u32 %v2993, %v2994
        %v2996 = vshll.u32 920167782, %v2981
        %v2997 = vshrl.u32 1326507024, %v2982
        %v2998 = vor.u32 %v2996, %v2997
        %vm2999 = vcmp.lt.s32.totalorder %v2980, 1
        %vm3000 = vcmp.lt.s32.totalorder %v2980, 2
        %vm3001 = vcmp.lt.s32.totalorder %v2980, 3
        %vm3002 = vcmp.lt.s32.totalorder %v2980, 4
        %v3003 = vsel %vm2999, %v2983, %v2986
        %v3004 = vsel %vm3002, %v2992, 2102212464
        %v3005 = vsel %vm3001, %v2989, %v3004
        %v3006 = vsel %vm3000, %v3003, %v3005
        %v3007 = vsel %vm2999, %v2986, %v2989
        %v3008 = vsel %vm3002, %v2995, 920167782
        %v3009 = vsel %vm3001, %v2992, %v3008
        %v3010 = vsel %vm3000, %v3007, %v3009
        %v3011 = vsel %vm2999, %v2989, %v2992
        %v3012 = vsel %vm3002, %v2998, 1326507024
        %v3013 = vsel %vm3001, %v2995, %v3012
        %v3014 = vsel %vm3000, %v3011, %v3013
        %v3015 = vshll.u32 %v2975, 8
        %v3016 = vmul.u32.u64.compose %v3015, %v3014
        %v3017 = vextract.low.u32 %v3016
        %v3018 = vextract.high.u32 %v3016
        %v3019 = vmul.u32.u64.compose %v3015, %v3010
        %v3020 = vextract.low.u32 %v3019
        %v3021 = vextract.high.u32 %v3019
        %v3022 = vmul.u32 %v3015, %v3006
        %v3023 = vadd.s32 %v3018, %v3020
        %vm3024 = vc.u32 %v3018, %v3020
        %v3025 = vadd.s32 %v3021, 1
        %v3026 = vsel %vm3024, %v3025, %v3021
        %v3027 = vadd.s32 %v3022, %v3026
        %v3028 = vadd.s32 %v3027, 536870912
        %v3029 = vshrl.u32 %v3028, 30
        %v3030 = vshll.u32 %v3029, 30
        %v3031 = vsub.s32 %v3027, %v3030
        %vm3032 = vcmp.lt.s32.totalorder %v3031, 0
        %v3033 = vsub.s32 0, %v3031
        %v3034 = vsel %vm3032, %v3033, %v3031
        %v3035 = vclz %v3034
        %v3036 = vsub.s32 %v3035, 2
        %vm3037 = vcmp.gt.s32.totalorder 0, %v3036
        %v3038 = vsel %vm3037, 0, %v3036
        %v3039 = vsub.s32 32, %v3038
        %v3040 = vshll.u32 %v3031, %v3038
        %v3041 = vshrl.u32 %v3023, %v3039
        %v3042 = vor.u32 %v3040, %v3041
        %v3043 = vsub.s32 4294967266, %v3038
        %v3044 = vadd.s32 %v3043, 127
        %v3045 = vshll.u32 %v3044, 23
        %v3046 = vor.u32 4788187, %v3045
        %v3047 = vand.u32 2147483647, %v3046
        %v3049 = vcvt.s32.f32 %v3042
        %v3050 = vmul.f32 %v3049, %v3047
        %v3051 = vxor.u32 %v3050, 2147483648
        %v3052 = vsel %vm2969, %v3051, %v3050
        %v3053 = vsub.s32 4, %v3029
        %v3054 = vsel %vm2969, %v3053, %v3029
        %v3055 = vsel %vm2968, %v283, %v3052
        %v3056 = vsel %vm2968, 0, %v3054
        %v3057 = vcosq.f32.pop %v3055
        %v3058 = vsinq.f32.pop %v3055
        %vm3059 = vweird.f32 %v283
        %v3060 = vand.u32 %v3056, 3
        %vm3061 = vcmp.lt.s32.totalorder %v3060, 2
        %vm3062 = vcmp.eq.s32.totalorder %v3060, 0
        %v3063 = vxor.u32 %v3058, 2147483648
        %v3064 = vsel %vm3062, %v3057, %v3063
        %vm3065 = vcmp.eq.s32.totalorder %v3060, 2
        %v3066 = vxor.u32 %v3057, 2147483648
        %v3067 = vsel %vm3065, %v3066, %v3058
        %v3068 = vsel %vm3061, %v3064, %v3067
        %v3069 = vsel %vm3059, nan, %v3068
        %v3070 = vand.u32 2147483647, %v284
        %vm3071 = vcmp.le.f32.partialorder %v3070, 0.7853982
        %vm3072 = vcmp.lt.s32.totalorder %v284, 0
        %v3073 = vand.u32 %v284, 2139095040
        %v3074 = vshrl.u32 %v3073, 23
        %v3075 = vsub.s32 %v3074, 127
        %v3076 = vand.u32 2147483647, %v284
        %v3077 = vand.u32 %v3076, 8388607
        %v3078 = vor.u32 %v3077, 8388608
        %v3079 = vsub.s32 0, %v3078
        %v3080 = vadd.s32 %v3075, 1
        %vm3081 = vcmp.gt.s32.totalorder %v3080, 0
        %v3082 = vsel %vm3081, %v3080, 0
        %v3083 = vshrl.u32 %v3082, 5
        %v3084 = vand.u32 %v3082, 31
        %v3085 = vsub.s32 32, %v3084
        %v3086 = vshrl.u32 683565275, %v3085
        %v3087 = vshll.u32 683565275, %v3084
        %v3088 = vshrl.u32 2475754826, %v3085
        %v3089 = vor.u32 %v3087, %v3088
        %v3090 = vshll.u32 2475754826, %v3084
        %v3091 = vshrl.u32 2131351028, %v3085
        %v3092 = vor.u32 %v3090, %v3091
        %v3093 = vshll.u32 2131351028, %v3084
        %v3094 = vshrl.u32 2102212464, %v3085
        %v3095 = vor.u32 %v3093, %v3094
        %v3096 = vshll.u32 2102212464, %v3084
        %v3097 = vshrl.u32 920167782, %v3085
        %v3098 = vor.u32 %v3096, %v3097
        %v3099 = vshll.u32 920167782, %v3084
        %v3100 = vshrl.u32 1326507024, %v3085
        %v3101 = vor.u32 %v3099, %v3100
        %vm3102 = vcmp.lt.s32.totalorder %v3083, 1
        %vm3103 = vcmp.lt.s32.totalorder %v3083, 2
        %vm3104 = vcmp.lt.s32.totalorder %v3083, 3
        %vm3105 = vcmp.lt.s32.totalorder %v3083, 4
        %v3106 = vsel %vm3102, %v3086, %v3089
        %v3107 = vsel %vm3105, %v3095, 2102212464
        %v3108 = vsel %vm3104, %v3092, %v3107
        %v3109 = vsel %vm3103, %v3106, %v3108
        %v3110 = vsel %vm3102, %v3089, %v3092
        %v3111 = vsel %vm3105, %v3098, 920167782
        %v3112 = vsel %vm3104, %v3095, %v3111
        %v3113 = vsel %vm3103, %v3110, %v3112
        %v3114 = vsel %vm3102, %v3092, %v3095
        %v3115 = vsel %vm3105, %v3101, 1326507024
        %v3116 = vsel %vm3104, %v3098, %v3115
        %v3117 = vsel %vm3103, %v3114, %v3116
        %v3118 = vshll.u32 %v3078, 8
        %v3119 = vmul.u32.u64.compose %v3118, %v3117
        %v3120 = vextract.low.u32 %v3119
        %v3121 = vextract.high.u32 %v3119
        %v3122 = vmul.u32.u64.compose %v3118, %v3113
        %v3123 = vextract.low.u32 %v3122
        %v3124 = vextract.high.u32 %v3122
        %v3125 = vmul.u32 %v3118, %v3109
        %v3126 = vadd.s32 %v3121, %v3123
        %vm3127 = vc.u32 %v3121, %v3123
        %v3128 = vadd.s32 %v3124, 1
        %v3129 = vsel %vm3127, %v3128, %v3124
        %v3130 = vadd.s32 %v3125, %v3129
        %v3131 = vadd.s32 %v3130, 536870912
        %v3132 = vshrl.u32 %v3131, 30
        %v3133 = vshll.u32 %v3132, 30
        %v3134 = vsub.s32 %v3130, %v3133
        %vm3135 = vcmp.lt.s32.totalorder %v3134, 0
        %v3136 = vsub.s32 0, %v3134
        %v3137 = vsel %vm3135, %v3136, %v3134
        %v3138 = vclz %v3137
        %v3139 = vsub.s32 %v3138, 2
        %vm3140 = vcmp.gt.s32.totalorder 0, %v3139
        %v3141 = vsel %vm3140, 0, %v3139
        %v3142 = vsub.s32 32, %v3141
        %v3143 = vshll.u32 %v3134, %v3141
        %v3144 = vshrl.u32 %v3126, %v3142
        %v3145 = vor.u32 %v3143, %v3144
        %v3146 = vsub.s32 4294967266, %v3141
        %v3147 = vadd.s32 %v3146, 127
        %v3148 = vshll.u32 %v3147, 23
        %v3149 = vor.u32 4788187, %v3148
        %v3150 = vand.u32 2147483647, %v3149
        %v3152 = vcvt.s32.f32 %v3145
        %v3153 = vmul.f32 %v3152, %v3150
        %v3154 = vxor.u32 %v3153, 2147483648
        %v3155 = vsel %vm3072, %v3154, %v3153
        %v3156 = vsub.s32 4, %v3132
        %v3157 = vsel %vm3072, %v3156, %v3132
        %v3158 = vsel %vm3071, %v284, %v3155
        %v3159 = vsel %vm3071, 0, %v3157
        %v3160 = vcosq.f32.pop %v3158
        %v3161 = vsinq.f32.pop %v3158
        %vm3162 = vweird.f32 %v284
        %v3163 = vand.u32 %v3159, 3
        %vm3164 = vcmp.lt.s32.totalorder %v3163, 2
        %vm3165 = vcmp.eq.s32.totalorder %v3163, 0
        %v3166 = vxor.u32 %v3161, 2147483648
        %v3167 = vsel %vm3165, %v3160, %v3166
        %vm3168 = vcmp.eq.s32.totalorder %v3163, 2
        %v3169 = vxor.u32 %v3160, 2147483648
        %v3170 = vsel %vm3168, %v3169, %v3161
        %v3171 = vsel %vm3164, %v3167, %v3170
        %v3172 = vsel %vm3162, nan, %v3171
        %v3173 = vand.u32 2147483647, %v285
        %vm3174 = vcmp.le.f32.partialorder %v3173, 0.7853982
        %vm3175 = vcmp.lt.s32.totalorder %v285, 0
        %v3176 = vand.u32 %v285, 2139095040
        %v3177 = vshrl.u32 %v3176, 23
        %v3178 = vsub.s32 %v3177, 127
        %v3179 = vand.u32 2147483647, %v285
        %v3180 = vand.u32 %v3179, 8388607
        %v3181 = vor.u32 %v3180, 8388608
        %v3182 = vsub.s32 0, %v3181
        %v3183 = vadd.s32 %v3178, 1
        %vm3184 = vcmp.gt.s32.totalorder %v3183, 0
        %v3185 = vsel %vm3184, %v3183, 0
        %v3186 = vshrl.u32 %v3185, 5
        %v3187 = vand.u32 %v3185, 31
        %v3188 = vsub.s32 32, %v3187
        %v3189 = vshrl.u32 683565275, %v3188
        %v3190 = vshll.u32 683565275, %v3187
        %v3191 = vshrl.u32 2475754826, %v3188
        %v3192 = vor.u32 %v3190, %v3191
        %v3193 = vshll.u32 2475754826, %v3187
        %v3194 = vshrl.u32 2131351028, %v3188
        %v3195 = vor.u32 %v3193, %v3194
        %v3196 = vshll.u32 2131351028, %v3187
        %v3197 = vshrl.u32 2102212464, %v3188
        %v3198 = vor.u32 %v3196, %v3197
        %v3199 = vshll.u32 2102212464, %v3187
        %v3200 = vshrl.u32 920167782, %v3188
        %v3201 = vor.u32 %v3199, %v3200
        %v3202 = vshll.u32 920167782, %v3187
        %v3203 = vshrl.u32 1326507024, %v3188
        %v3204 = vor.u32 %v3202, %v3203
        %vm3205 = vcmp.lt.s32.totalorder %v3186, 1
        %vm3206 = vcmp.lt.s32.totalorder %v3186, 2
        %vm3207 = vcmp.lt.s32.totalorder %v3186, 3
        %vm3208 = vcmp.lt.s32.totalorder %v3186, 4
        %v3209 = vsel %vm3205, %v3189, %v3192
        %v3210 = vsel %vm3208, %v3198, 2102212464
        %v3211 = vsel %vm3207, %v3195, %v3210
        %v3212 = vsel %vm3206, %v3209, %v3211
        %v3213 = vsel %vm3205, %v3192, %v3195
        %v3214 = vsel %vm3208, %v3201, 920167782
        %v3215 = vsel %vm3207, %v3198, %v3214
        %v3216 = vsel %vm3206, %v3213, %v3215
        %v3217 = vsel %vm3205, %v3195, %v3198
        %v3218 = vsel %vm3208, %v3204, 1326507024
        %v3219 = vsel %vm3207, %v3201, %v3218
        %v3220 = vsel %vm3206, %v3217, %v3219
        %v3221 = vshll.u32 %v3181, 8
        %v3222 = vmul.u32.u64.compose %v3221, %v3220
        %v3223 = vextract.low.u32 %v3222
        %v3224 = vextract.high.u32 %v3222
        %v3225 = vmul.u32.u64.compose %v3221, %v3216
        %v3226 = vextract.low.u32 %v3225
        %v3227 = vextract.high.u32 %v3225
        %v3228 = vmul.u32 %v3221, %v3212
        %v3229 = vadd.s32 %v3224, %v3226
        %vm3230 = vc.u32 %v3224, %v3226
        %v3231 = vadd.s32 %v3227, 1
        %v3232 = vsel %vm3230, %v3231, %v3227
        %v3233 = vadd.s32 %v3228, %v3232
        %v3234 = vadd.s32 %v3233, 536870912
        %v3235 = vshrl.u32 %v3234, 30
        %v3236 = vshll.u32 %v3235, 30
        %v3237 = vsub.s32 %v3233, %v3236
        %vm3238 = vcmp.lt.s32.totalorder %v3237, 0
        %v3239 = vsub.s32 0, %v3237
        %v3240 = vsel %vm3238, %v3239, %v3237
        %v3241 = vclz %v3240
        %v3242 = vsub.s32 %v3241, 2
        %vm3243 = vcmp.gt.s32.totalorder 0, %v3242
        %v3244 = vsel %vm3243, 0, %v3242
        %v3245 = vsub.s32 32, %v3244
        %v3246 = vshll.u32 %v3237, %v3244
        %v3247 = vshrl.u32 %v3229, %v3245
        %v3248 = vor.u32 %v3246, %v3247
        %v3249 = vsub.s32 4294967266, %v3244
        %v3250 = vadd.s32 %v3249, 127
        %v3251 = vshll.u32 %v3250, 23
        %v3252 = vor.u32 4788187, %v3251
        %v3253 = vand.u32 2147483647, %v3252
        %v3255 = vcvt.s32.f32 %v3248
        %v3256 = vmul.f32 %v3255, %v3253
        %v3257 = vxor.u32 %v3256, 2147483648
        %v3258 = vsel %vm3175, %v3257, %v3256
        %v3259 = vsub.s32 4, %v3235
        %v3260 = vsel %vm3175, %v3259, %v3235
        %v3261 = vsel %vm3174, %v285, %v3258
        %v3262 = vsel %vm3174, 0, %v3260
        %v3263 = vcosq.f32.pop %v3261
        %v3264 = vsinq.f32.pop %v3261
        %vm3265 = vweird.f32 %v285
        %v3266 = vand.u32 %v3262, 3
        %vm3267 = vcmp.lt.s32.totalorder %v3266, 2
        %vm3268 = vcmp.eq.s32.totalorder %v3266, 0
        %v3269 = vxor.u32 %v3264, 2147483648
        %v3270 = vsel %vm3268, %v3263, %v3269
        %vm3271 = vcmp.eq.s32.totalorder %v3266, 2
        %v3272 = vxor.u32 %v3263, 2147483648
        %v3273 = vsel %vm3271, %v3272, %v3264
        %v3274 = vsel %vm3267, %v3270, %v3273
        %v3275 = vsel %vm3265, nan, %v3274
        %v3276 = vand.u32 2147483647, %v286
        %vm3277 = vcmp.le.f32.partialorder %v3276, 0.7853982
        %vm3278 = vcmp.lt.s32.totalorder %v286, 0
        %v3279 = vand.u32 %v286, 2139095040
        %v3280 = vshrl.u32 %v3279, 23
        %v3281 = vsub.s32 %v3280, 127
        %v3282 = vand.u32 2147483647, %v286
        %v3283 = vand.u32 %v3282, 8388607
        %v3284 = vor.u32 %v3283, 8388608
        %v3285 = vsub.s32 0, %v3284
        %v3286 = vadd.s32 %v3281, 1
        %vm3287 = vcmp.gt.s32.totalorder %v3286, 0
        %v3288 = vsel %vm3287, %v3286, 0
        %v3289 = vshrl.u32 %v3288, 5
        %v3290 = vand.u32 %v3288, 31
        %v3291 = vsub.s32 32, %v3290
        %v3292 = vshrl.u32 683565275, %v3291
        %v3293 = vshll.u32 683565275, %v3290
        %v3294 = vshrl.u32 2475754826, %v3291
        %v3295 = vor.u32 %v3293, %v3294
        %v3296 = vshll.u32 2475754826, %v3290
        %v3297 = vshrl.u32 2131351028, %v3291
        %v3298 = vor.u32 %v3296, %v3297
        %v3299 = vshll.u32 2131351028, %v3290
        %v3300 = vshrl.u32 2102212464, %v3291
        %v3301 = vor.u32 %v3299, %v3300
        %v3302 = vshll.u32 2102212464, %v3290
        %v3303 = vshrl.u32 920167782, %v3291
        %v3304 = vor.u32 %v3302, %v3303
        %v3305 = vshll.u32 920167782, %v3290
        %v3306 = vshrl.u32 1326507024, %v3291
        %v3307 = vor.u32 %v3305, %v3306
        %vm3308 = vcmp.lt.s32.totalorder %v3289, 1
        %vm3309 = vcmp.lt.s32.totalorder %v3289, 2
        %vm3310 = vcmp.lt.s32.totalorder %v3289, 3
        %vm3311 = vcmp.lt.s32.totalorder %v3289, 4
        %v3312 = vsel %vm3308, %v3292, %v3295
        %v3313 = vsel %vm3311, %v3301, 2102212464
        %v3314 = vsel %vm3310, %v3298, %v3313
        %v3315 = vsel %vm3309, %v3312, %v3314
        %v3316 = vsel %vm3308, %v3295, %v3298
        %v3317 = vsel %vm3311, %v3304, 920167782
        %v3318 = vsel %vm3310, %v3301, %v3317
        %v3319 = vsel %vm3309, %v3316, %v3318
        %v3320 = vsel %vm3308, %v3298, %v3301
        %v3321 = vsel %vm3311, %v3307, 1326507024
        %v3322 = vsel %vm3310, %v3304, %v3321
        %v3323 = vsel %vm3309, %v3320, %v3322
        %v3324 = vshll.u32 %v3284, 8
        %v3325 = vmul.u32.u64.compose %v3324, %v3323
        %v3326 = vextract.low.u32 %v3325
        %v3327 = vextract.high.u32 %v3325
        %v3328 = vmul.u32.u64.compose %v3324, %v3319
        %v3329 = vextract.low.u32 %v3328
        %v3330 = vextract.high.u32 %v3328
        %v3331 = vmul.u32 %v3324, %v3315
        %v3332 = vadd.s32 %v3327, %v3329
        %vm3333 = vc.u32 %v3327, %v3329
        %v3334 = vadd.s32 %v3330, 1
        %v3335 = vsel %vm3333, %v3334, %v3330
        %v3336 = vadd.s32 %v3331, %v3335
        %v3337 = vadd.s32 %v3336, 536870912
        %v3338 = vshrl.u32 %v3337, 30
        %v3339 = vshll.u32 %v3338, 30
        %v3340 = vsub.s32 %v3336, %v3339
        %vm3341 = vcmp.lt.s32.totalorder %v3340, 0
        %v3342 = vsub.s32 0, %v3340
        %v3343 = vsel %vm3341, %v3342, %v3340
        %v3344 = vclz %v3343
        %v3345 = vsub.s32 %v3344, 2
        %vm3346 = vcmp.gt.s32.totalorder 0, %v3345
        %v3347 = vsel %vm3346, 0, %v3345
        %v3348 = vsub.s32 32, %v3347
        %v3349 = vshll.u32 %v3340, %v3347
        %v3350 = vshrl.u32 %v3332, %v3348
        %v3351 = vor.u32 %v3349, %v3350
        %v3352 = vsub.s32 4294967266, %v3347
        %v3353 = vadd.s32 %v3352, 127
        %v3354 = vshll.u32 %v3353, 23
        %v3355 = vor.u32 4788187, %v3354
        %v3356 = vand.u32 2147483647, %v3355
        %v3358 = vcvt.s32.f32 %v3351
        %v3359 = vmul.f32 %v3358, %v3356
        %v3360 = vxor.u32 %v3359, 2147483648
        %v3361 = vsel %vm3278, %v3360, %v3359
        %v3362 = vsub.s32 4, %v3338
        %v3363 = vsel %vm3278, %v3362, %v3338
        %v3364 = vsel %vm3277, %v286, %v3361
        %v3365 = vsel %vm3277, 0, %v3363
        %v3366 = vcosq.f32.pop %v3364
        %v3367 = vsinq.f32.pop %v3364
        %vm3368 = vweird.f32 %v286
        %v3369 = vand.u32 %v3365, 3
        %vm3370 = vcmp.lt.s32.totalorder %v3369, 2
        %vm3371 = vcmp.eq.s32.totalorder %v3369, 0
        %v3372 = vxor.u32 %v3367, 2147483648
        %v3373 = vsel %vm3371, %v3366, %v3372
        %vm3374 = vcmp.eq.s32.totalorder %v3369, 2
        %v3375 = vxor.u32 %v3366, 2147483648
        %v3376 = vsel %vm3374, %v3375, %v3367
        %v3377 = vsel %vm3370, %v3373, %v3376
        %v3378 = vsel %vm3368, nan, %v3377
        %v3379 = vand.u32 2147483647, %v287
        %vm3380 = vcmp.le.f32.partialorder %v3379, 0.7853982
        %vm3381 = vcmp.lt.s32.totalorder %v287, 0
        %v3382 = vand.u32 %v287, 2139095040
        %v3383 = vshrl.u32 %v3382, 23
        %v3384 = vsub.s32 %v3383, 127
        %v3385 = vand.u32 2147483647, %v287
        %v3386 = vand.u32 %v3385, 8388607
        %v3387 = vor.u32 %v3386, 8388608
        %v3388 = vsub.s32 0, %v3387
        %v3389 = vadd.s32 %v3384, 1
        %vm3390 = vcmp.gt.s32.totalorder %v3389, 0
        %v3391 = vsel %vm3390, %v3389, 0
        %v3392 = vshrl.u32 %v3391, 5
        %v3393 = vand.u32 %v3391, 31
        %v3394 = vsub.s32 32, %v3393
        %v3395 = vshrl.u32 683565275, %v3394
        %v3396 = vshll.u32 683565275, %v3393
        %v3397 = vshrl.u32 2475754826, %v3394
        %v3398 = vor.u32 %v3396, %v3397
        %v3399 = vshll.u32 2475754826, %v3393
        %v3400 = vshrl.u32 2131351028, %v3394
        %v3401 = vor.u32 %v3399, %v3400
        %v3402 = vshll.u32 2131351028, %v3393
        %v3403 = vshrl.u32 2102212464, %v3394
        %v3404 = vor.u32 %v3402, %v3403
        %v3405 = vshll.u32 2102212464, %v3393
        %v3406 = vshrl.u32 920167782, %v3394
        %v3407 = vor.u32 %v3405, %v3406
        %v3408 = vshll.u32 920167782, %v3393
        %v3409 = vshrl.u32 1326507024, %v3394
        %v3410 = vor.u32 %v3408, %v3409
        %vm3411 = vcmp.lt.s32.totalorder %v3392, 1
        %vm3412 = vcmp.lt.s32.totalorder %v3392, 2
        %vm3413 = vcmp.lt.s32.totalorder %v3392, 3
        %vm3414 = vcmp.lt.s32.totalorder %v3392, 4
        %v3415 = vsel %vm3411, %v3395, %v3398
        %v3416 = vsel %vm3414, %v3404, 2102212464
        %v3417 = vsel %vm3413, %v3401, %v3416
        %v3418 = vsel %vm3412, %v3415, %v3417
        %v3419 = vsel %vm3411, %v3398, %v3401
        %v3420 = vsel %vm3414, %v3407, 920167782
        %v3421 = vsel %vm3413, %v3404, %v3420
        %v3422 = vsel %vm3412, %v3419, %v3421
        %v3423 = vsel %vm3411, %v3401, %v3404
        %v3424 = vsel %vm3414, %v3410, 1326507024
        %v3425 = vsel %vm3413, %v3407, %v3424
        %v3426 = vsel %vm3412, %v3423, %v3425
        %v3427 = vshll.u32 %v3387, 8
        %v3428 = vmul.u32.u64.compose %v3427, %v3426
        %v3429 = vextract.low.u32 %v3428
        %v3430 = vextract.high.u32 %v3428
        %v3431 = vmul.u32.u64.compose %v3427, %v3422
        %v3432 = vextract.low.u32 %v3431
        %v3433 = vextract.high.u32 %v3431
        %v3434 = vmul.u32 %v3427, %v3418
        %v3435 = vadd.s32 %v3430, %v3432
        %vm3436 = vc.u32 %v3430, %v3432
        %v3437 = vadd.s32 %v3433, 1
        %v3438 = vsel %vm3436, %v3437, %v3433
        %v3439 = vadd.s32 %v3434, %v3438
        %v3440 = vadd.s32 %v3439, 536870912
        %v3441 = vshrl.u32 %v3440, 30
        %v3442 = vshll.u32 %v3441, 30
        %v3443 = vsub.s32 %v3439, %v3442
        %vm3444 = vcmp.lt.s32.totalorder %v3443, 0
        %v3445 = vsub.s32 0, %v3443
        %v3446 = vsel %vm3444, %v3445, %v3443
        %v3447 = vclz %v3446
        %v3448 = vsub.s32 %v3447, 2
        %vm3449 = vcmp.gt.s32.totalorder 0, %v3448
        %v3450 = vsel %vm3449, 0, %v3448
        %v3451 = vsub.s32 32, %v3450
        %v3452 = vshll.u32 %v3443, %v3450
        %v3453 = vshrl.u32 %v3435, %v3451
        %v3454 = vor.u32 %v3452, %v3453
        %v3455 = vsub.s32 4294967266, %v3450
        %v3456 = vadd.s32 %v3455, 127
        %v3457 = vshll.u32 %v3456, 23
        %v3458 = vor.u32 4788187, %v3457
        %v3459 = vand.u32 2147483647, %v3458
        %v3461 = vcvt.s32.f32 %v3454
        %v3462 = vmul.f32 %v3461, %v3459
        %v3463 = vxor.u32 %v3462, 2147483648
        %v3464 = vsel %vm3381, %v3463, %v3462
        %v3465 = vsub.s32 4, %v3441
        %v3466 = vsel %vm3381, %v3465, %v3441
        %v3467 = vsel %vm3380, %v287, %v3464
        %v3468 = vsel %vm3380, 0, %v3466
        %v3469 = vcosq.f32.pop %v3467
        %v3470 = vsinq.f32.pop %v3467
        %vm3471 = vweird.f32 %v287
        %v3472 = vand.u32 %v3468, 3
        %vm3473 = vcmp.lt.s32.totalorder %v3472, 2
        %vm3474 = vcmp.eq.s32.totalorder %v3472, 0
        %v3475 = vxor.u32 %v3470, 2147483648
        %v3476 = vsel %vm3474, %v3469, %v3475
        %vm3477 = vcmp.eq.s32.totalorder %v3472, 2
        %v3478 = vxor.u32 %v3469, 2147483648
        %v3479 = vsel %vm3477, %v3478, %v3470
        %v3480 = vsel %vm3473, %v3476, %v3479
        %v3481 = vsel %vm3471, nan, %v3480
        %v3482 = vand.u32 2147483647, %v288
        %vm3483 = vcmp.le.f32.partialorder %v3482, 0.7853982
        %vm3484 = vcmp.lt.s32.totalorder %v288, 0
        %v3485 = vand.u32 %v288, 2139095040
        %v3486 = vshrl.u32 %v3485, 23
        %v3487 = vsub.s32 %v3486, 127
        %v3488 = vand.u32 2147483647, %v288
        %v3489 = vand.u32 %v3488, 8388607
        %v3490 = vor.u32 %v3489, 8388608
        %v3491 = vsub.s32 0, %v3490
        %v3492 = vadd.s32 %v3487, 1
        %vm3493 = vcmp.gt.s32.totalorder %v3492, 0
        %v3494 = vsel %vm3493, %v3492, 0
        %v3495 = vshrl.u32 %v3494, 5
        %v3496 = vand.u32 %v3494, 31
        %v3497 = vsub.s32 32, %v3496
        %v3498 = vshrl.u32 683565275, %v3497
        %v3499 = vshll.u32 683565275, %v3496
        %v3500 = vshrl.u32 2475754826, %v3497
        %v3501 = vor.u32 %v3499, %v3500
        %v3502 = vshll.u32 2475754826, %v3496
        %v3503 = vshrl.u32 2131351028, %v3497
        %v3504 = vor.u32 %v3502, %v3503
        %v3505 = vshll.u32 2131351028, %v3496
        %v3506 = vshrl.u32 2102212464, %v3497
        %v3507 = vor.u32 %v3505, %v3506
        %v3508 = vshll.u32 2102212464, %v3496
        %v3509 = vshrl.u32 920167782, %v3497
        %v3510 = vor.u32 %v3508, %v3509
        %v3511 = vshll.u32 920167782, %v3496
        %v3512 = vshrl.u32 1326507024, %v3497
        %v3513 = vor.u32 %v3511, %v3512
        %vm3514 = vcmp.lt.s32.totalorder %v3495, 1
        %vm3515 = vcmp.lt.s32.totalorder %v3495, 2
        %vm3516 = vcmp.lt.s32.totalorder %v3495, 3
        %vm3517 = vcmp.lt.s32.totalorder %v3495, 4
        %v3518 = vsel %vm3514, %v3498, %v3501
        %v3519 = vsel %vm3517, %v3507, 2102212464
        %v3520 = vsel %vm3516, %v3504, %v3519
        %v3521 = vsel %vm3515, %v3518, %v3520
        %v3522 = vsel %vm3514, %v3501, %v3504
        %v3523 = vsel %vm3517, %v3510, 920167782
        %v3524 = vsel %vm3516, %v3507, %v3523
        %v3525 = vsel %vm3515, %v3522, %v3524
        %v3526 = vsel %vm3514, %v3504, %v3507
        %v3527 = vsel %vm3517, %v3513, 1326507024
        %v3528 = vsel %vm3516, %v3510, %v3527
        %v3529 = vsel %vm3515, %v3526, %v3528
        %v3530 = vshll.u32 %v3490, 8
        %v3531 = vmul.u32.u64.compose %v3530, %v3529
        %v3532 = vextract.low.u32 %v3531
        %v3533 = vextract.high.u32 %v3531
        %v3534 = vmul.u32.u64.compose %v3530, %v3525
        %v3535 = vextract.low.u32 %v3534
        %v3536 = vextract.high.u32 %v3534
        %v3537 = vmul.u32 %v3530, %v3521
        %v3538 = vadd.s32 %v3533, %v3535
        %vm3539 = vc.u32 %v3533, %v3535
        %v3540 = vadd.s32 %v3536, 1
        %v3541 = vsel %vm3539, %v3540, %v3536
        %v3542 = vadd.s32 %v3537, %v3541
        %v3543 = vadd.s32 %v3542, 536870912
        %v3544 = vshrl.u32 %v3543, 30
        %v3545 = vshll.u32 %v3544, 30
        %v3546 = vsub.s32 %v3542, %v3545
        %vm3547 = vcmp.lt.s32.totalorder %v3546, 0
        %v3548 = vsub.s32 0, %v3546
        %v3549 = vsel %vm3547, %v3548, %v3546
        %v3550 = vclz %v3549
        %v3551 = vsub.s32 %v3550, 2
        %vm3552 = vcmp.gt.s32.totalorder 0, %v3551
        %v3553 = vsel %vm3552, 0, %v3551
        %v3554 = vsub.s32 32, %v3553
        %v3555 = vshll.u32 %v3546, %v3553
        %v3556 = vshrl.u32 %v3538, %v3554
        %v3557 = vor.u32 %v3555, %v3556
        %v3558 = vsub.s32 4294967266, %v3553
        %v3559 = vadd.s32 %v3558, 127
        %v3560 = vshll.u32 %v3559, 23
        %v3561 = vor.u32 4788187, %v3560
        %v3562 = vand.u32 2147483647, %v3561
        %v3564 = vcvt.s32.f32 %v3557
        %v3565 = vmul.f32 %v3564, %v3562
        %v3566 = vxor.u32 %v3565, 2147483648
        %v3567 = vsel %vm3484, %v3566, %v3565
        %v3568 = vsub.s32 4, %v3544
        %v3569 = vsel %vm3484, %v3568, %v3544
        %v3570 = vsel %vm3483, %v288, %v3567
        %v3571 = vsel %vm3483, 0, %v3569
        %v3572 = vcosq.f32.pop %v3570
        %v3573 = vsinq.f32.pop %v3570
        %vm3574 = vweird.f32 %v288
        %v3575 = vand.u32 %v3571, 3
        %vm3576 = vcmp.lt.s32.totalorder %v3575, 2
        %vm3577 = vcmp.eq.s32.totalorder %v3575, 0
        %v3578 = vxor.u32 %v3573, 2147483648
        %v3579 = vsel %vm3577, %v3572, %v3578
        %vm3580 = vcmp.eq.s32.totalorder %v3575, 2
        %v3581 = vxor.u32 %v3572, 2147483648
        %v3582 = vsel %vm3580, %v3581, %v3573
        %v3583 = vsel %vm3576, %v3579, %v3582
        %v3584 = vsel %vm3574, nan, %v3583
        %v3585 = vpack.c.bf16 %v494, %v391
        %v3586 = vpack.c.bf16 %v700, %v597
        %v3587 = vpack.c.bf16 %v906, %v803
        %v3588 = vpack.c.bf16 %v1112, %v1009
        %v3589 = vpack.c.bf16 %v1318, %v1215
        %v3590 = vpack.c.bf16 %v1524, %v1421
        %v3591 = vpack.c.bf16 %v1730, %v1627
        %v3592 = vpack.c.bf16 %v1936, %v1833
        %v3593 = vpack.c.bf16 %v2142, %v2039
        %v3594 = vpack.c.bf16 %v2348, %v2245
        %v3595 = vpack.c.bf16 %v2554, %v2451
        %v3596 = vpack.c.bf16 %v2760, %v2657
        %v3597 = vpack.c.bf16 %v2966, %v2863
        %v3598 = vpack.c.bf16 %v3172, %v3069
        %v3599 = vpack.c.bf16 %v3378, %v3275
        %v3600 = vpack.c.bf16 %v3584, %v3481
        %v3617 = vunpack.c.l.b16 %v3585
        %v3618 = vunpack.c.h.b16 %v3585
        %v3619 = vunpack.c.l.b16 %v3586
        %v3620 = vunpack.c.h.b16 %v3586
        %v3621 = vunpack.c.l.b16 %v3587
        %v3622 = vunpack.c.h.b16 %v3587
        %v3623 = vunpack.c.l.b16 %v3588
        %v3624 = vunpack.c.h.b16 %v3588
        %v3625 = vunpack.c.l.b16 %v3589
        %v3626 = vunpack.c.h.b16 %v3589
        %v3627 = vunpack.c.l.b16 %v3590
        %v3628 = vunpack.c.h.b16 %v3590
        %v3629 = vunpack.c.l.b16 %v3591
        %v3630 = vunpack.c.h.b16 %v3591
        %v3631 = vunpack.c.l.b16 %v3592
        %v3632 = vunpack.c.h.b16 %v3592
        %v3633 = vunpack.c.l.b16 %v3593
        %v3634 = vunpack.c.h.b16 %v3593
        %v3635 = vunpack.c.l.b16 %v3594
        %v3636 = vunpack.c.h.b16 %v3594
        %v3637 = vunpack.c.l.b16 %v3595
        %v3638 = vunpack.c.h.b16 %v3595
        %v3639 = vunpack.c.l.b16 %v3596
        %v3640 = vunpack.c.h.b16 %v3596
        %v3641 = vunpack.c.l.b16 %v3597
        %v3642 = vunpack.c.h.b16 %v3597
        %v3643 = vunpack.c.l.b16 %v3598
        %v3644 = vunpack.c.h.b16 %v3598
        %v3645 = vunpack.c.l.b16 %v3599
        %v3646 = vunpack.c.h.b16 %v3599
        %v3647 = vunpack.c.l.b16 %v3600
        %v3648 = vunpack.c.h.b16 %v3600
        %v3649 = vpack.c.b16 %v3617, %v3617
        %v3650 = vpack.c.b16 %v3618, %v3618
        %v3651 = vpack.c.b16 %v3619, %v3619
        %v3652 = vpack.c.b16 %v3620, %v3620
        %v3653 = vpack.c.b16 %v3621, %v3621
        %v3654 = vpack.c.b16 %v3622, %v3622
        %v3655 = vpack.c.b16 %v3623, %v3623
        %v3656 = vpack.c.b16 %v3624, %v3624
        %v3657 = vpack.c.b16 %v3625, %v3625
        %v3658 = vpack.c.b16 %v3626, %v3626
        %v3659 = vpack.c.b16 %v3627, %v3627
        %v3660 = vpack.c.b16 %v3628, %v3628
        %v3661 = vpack.c.b16 %v3629, %v3629
        %v3662 = vpack.c.b16 %v3630, %v3630
        %v3663 = vpack.c.b16 %v3631, %v3631
        %v3664 = vpack.c.b16 %v3632, %v3632
        %v3665 = vpack.c.b16 %v3633, %v3633
        %v3666 = vpack.c.b16 %v3634, %v3634
        %v3667 = vpack.c.b16 %v3635, %v3635
        %v3668 = vpack.c.b16 %v3636, %v3636
        %v3669 = vpack.c.b16 %v3637, %v3637
        %v3670 = vpack.c.b16 %v3638, %v3638
        %v3671 = vpack.c.b16 %v3639, %v3639
        %v3672 = vpack.c.b16 %v3640, %v3640
        %v3673 = vpack.c.b16 %v3641, %v3641
        %v3674 = vpack.c.b16 %v3642, %v3642
        %v3675 = vpack.c.b16 %v3643, %v3643
        %v3676 = vpack.c.b16 %v3644, %v3644
        %v3677 = vpack.c.b16 %v3645, %v3645
        %v3678 = vpack.c.b16 %v3646, %v3646
        %v3679 = vpack.c.b16 %v3647, %v3647
        %v3680 = vpack.c.b16 %v3648, %v3648
        %3713 = vst [vmem:[%s139] sm:$0xf] %v3649
        %3714 = vst [vmem:[%s139 + $0x4] sm:$0xf] %v3650
        %3715 = vst [vmem:[%s139 + $0x8] sm:$0xf] %v3651
        %3716 = vst [vmem:[%s139 + $0xc] sm:$0xf] %v3652
        %3717 = vst [vmem:[%s139 + $0x10] sm:$0xf] %v3653
        %3718 = vst [vmem:[%s139 + $0x14] sm:$0xf] %v3654
        %3719 = vst [vmem:[%s139 + $0x18] sm:$0xf] %v3655
        %3720 = vst [vmem:[%s139 + $0x1c] sm:$0xf] %v3656
        %3721 = vst [vmem:[%s139 + $0x20] sm:$0xf] %v3657
        %3722 = vst [vmem:[%s139 + $0x24] sm:$0xf] %v3658
        %3723 = vst [vmem:[%s139 + $0x28] sm:$0xf] %v3659
        %3724 = vst [vmem:[%s139 + $0x2c] sm:$0xf] %v3660
        %3725 = vst [vmem:[%s139 + $0x30] sm:$0xf] %v3661
        %3726 = vst [vmem:[%s139 + $0x34] sm:$0xf] %v3662
        %3727 = vst [vmem:[%s139 + $0x38] sm:$0xf] %v3663
        %3728 = vst [vmem:[%s139 + $0x3c] sm:$0xf] %v3664
        %3729 = vst [vmem:[%s139 + $0x40] sm:$0xf] %v3665
        %3730 = vst [vmem:[%s139 + $0x44] sm:$0xf] %v3666
        %3731 = vst [vmem:[%s139 + $0x48] sm:$0xf] %v3667
        %3732 = vst [vmem:[%s139 + $0x4c] sm:$0xf] %v3668
        %3733 = vst [vmem:[%s139 + $0x50] sm:$0xf] %v3669
        %3734 = vst [vmem:[%s139 + $0x54] sm:$0xf] %v3670
        %3735 = vst [vmem:[%s139 + $0x58] sm:$0xf] %v3671
        %3736 = vst [vmem:[%s139 + $0x5c] sm:$0xf] %v3672
        %3737 = vst [vmem:[%s139 + $0x60] sm:$0xf] %v3673
        %3738 = vst [vmem:[%s139 + $0x64] sm:$0xf] %v3674
        %3739 = vst [vmem:[%s139 + $0x68] sm:$0xf] %v3675
        %3740 = vst [vmem:[%s139 + $0x6c] sm:$0xf] %v3676
        %3741 = vst [vmem:[%s139 + $0x70] sm:$0xf] %v3677
        %3742 = vst [vmem:[%s139 + $0x74] sm:$0xf] %v3678
        %3743 = vst [vmem:[%s139 + $0x78] sm:$0xf] %v3679
        %3744 = vst [vmem:[%s139 + $0x7c] sm:$0xf] %v3680
        %s3745 = sand.u32 %s73, 1
        %s3746 = sand.u32 %s73, 1
        %s3747 = smul.addr %s3746, 128
        %s3748 = scalar_lea.vmem [#allocation2], %s3747
        // Predicated region
        $region29: #{fourier_layer3_forward.2} parent=27 // pred_check
          %p3749 = pneg %p83
        $region30: #{fourier_layer3_forward.2} parent=27 // pred_check_branch
          %3751 = sbr.rel (%p3749) target = $region32
        $region31: #{fourier_layer3_forward.2} parent=27 // pred_region
          %s3752 = smul.addr %s13, 4
          %s3753 = scalar_lea.vmem %s2, %s3752
          // Predicated region
          $region33: #{fourier_layer3_forward.2} parent=31 // pred_check
            _
          $region34: #{fourier_layer3_forward.2} parent=31 // pred_check_branch
            %3755 = sbr.rel (0) target = $region36
          $region35: #{fourier_layer3_forward.2} parent=31 // pred_region
            // Predicated region
            $region37: #{fourier_layer3_forward.2} parent=35 // pred_check
              _
            $region38: #{fourier_layer3_forward.2} parent=35 // pred_check_branch
              %3757 = sbr.rel target = $region40
            $region39: #{fourier_layer3_forward.2} parent=35 // pred_region
              // Predicated region
              $region52: #{fourier_layer3_forward.2} parent=39 // pred_check
                _
              $region53: #{fourier_layer3_forward.2} parent=39 // pred_check_branch
                %3834 = sbr.rel (0) target = $region55
              $region54: #{fourier_layer3_forward.2} parent=39 // pred_region
                loop: start=0, step=1, limit=1
                $region56: #{fourier_layer3_forward.2} parent=54 // loop_pre_header
                  _
                $region57: #{fourier_layer3_forward.2} parent=54 // loop_header
                  %s3836 = sphi 0, %s3840
                  %p3837 = scmp.ge.s32.totalorder %s3836, 1
                  %s3841 = sphi %s3748, %s3748
                  %s3842 = sphi %s3753, %s3753
                $region58: #{fourier_layer3_forward.2} parent=54 // loop_header_branch
                  %3839 = sbr.rel (%p3837) target = $region62
                $region59: #{fourier_layer3_forward.2} parent=54 // loop_body
                  _
                $region60: #{fourier_layer3_forward.2} parent=54 // loop_footer
                  %s3840 = sadd.s32 1, %s3836
                $region61: #{fourier_layer3_forward.2} parent=54 // loop_footer_branch
                  %3835 = sbr.rel target = $region57
                $region62: #{fourier_layer3_forward.2} parent=54 // loop_exit
                  _
                loop: start=0, step=1, limit=1
                $region63: #{fourier_layer3_forward.2} parent=54 // loop_pre_header
                  _
                $region64: #{fourier_layer3_forward.2} parent=54 // loop_header
                  %s3845 = sphi 0, %s3849
                  %p3846 = scmp.ge.s32.totalorder %s3845, 1
                  %s3850 = sphi %s3748, %s3748
                  %s3851 = sphi %s3753, %s3753
                $region65: #{fourier_layer3_forward.2} parent=54 // loop_header_branch
                  %3848 = sbr.rel (%p3846) target = $region69
                $region66: #{fourier_layer3_forward.2} parent=54 // loop_body
                  %v3852 = vld [vmem:[%s3850] sm:$0xf]
                  %3853 = vst [vmem:[%s3851] sm:$0xf] %v3852
                  %v3854 = vld [vmem:[%s3850 + $0x4] sm:$0xf]
                  %3855 = vst [vmem:[%s3851 + $0x8] sm:$0xf] %v3854
                  %v3856 = vld [vmem:[%s3850 + $0x8] sm:$0xf]
                  %3857 = vst [vmem:[%s3851 + $0x10] sm:$0xf] %v3856
                  %v3858 = vld [vmem:[%s3850 + $0xc] sm:$0xf]
                  %3859 = vst [vmem:[%s3851 + $0x18] sm:$0xf] %v3858
                  %v3860 = vld [vmem:[%s3850 + $0x10] sm:$0xf]
                  %3861 = vst [vmem:[%s3851 + $0x20] sm:$0xf] %v3860
                  %v3862 = vld [vmem:[%s3850 + $0x14] sm:$0xf]
                  %3863 = vst [vmem:[%s3851 + $0x28] sm:$0xf] %v3862
                  %v3864 = vld [vmem:[%s3850 + $0x18] sm:$0xf]
                  %3865 = vst [vmem:[%s3851 + $0x30] sm:$0xf] %v3864
                  %v3866 = vld [vmem:[%s3850 + $0x1c] sm:$0xf]
                  %3867 = vst [vmem:[%s3851 + $0x38] sm:$0xf] %v3866
                  %v3868 = vld [vmem:[%s3850 + $0x20] sm:$0xf]
                  %3869 = vst [vmem:[%s3851 + $0x40] sm:$0xf] %v3868
                  %v3870 = vld [vmem:[%s3850 + $0x24] sm:$0xf]
                  %3871 = vst [vmem:[%s3851 + $0x48] sm:$0xf] %v3870
                  %v3872 = vld [vmem:[%s3850 + $0x28] sm:$0xf]
                  %3873 = vst [vmem:[%s3851 + $0x50] sm:$0xf] %v3872
                  %v3874 = vld [vmem:[%s3850 + $0x2c] sm:$0xf]
                  %3875 = vst [vmem:[%s3851 + $0x58] sm:$0xf] %v3874
                  %v3876 = vld [vmem:[%s3850 + $0x30] sm:$0xf]
                  %3877 = vst [vmem:[%s3851 + $0x60] sm:$0xf] %v3876
                  %v3878 = vld [vmem:[%s3850 + $0x34] sm:$0xf]
                  %3879 = vst [vmem:[%s3851 + $0x68] sm:$0xf] %v3878
                  %v3880 = vld [vmem:[%s3850 + $0x38] sm:$0xf]
                  %3881 = vst [vmem:[%s3851 + $0x70] sm:$0xf] %v3880
                  %v3882 = vld [vmem:[%s3850 + $0x3c] sm:$0xf]
                  %3883 = vst [vmem:[%s3851 + $0x78] sm:$0xf] %v3882
                  %v3884 = vld [vmem:[%s3850 + $0x40] sm:$0xf]
                  %3885 = vst [vmem:[%s3851 + $0x80] sm:$0xf] %v3884
                  %v3886 = vld [vmem:[%s3850 + $0x44] sm:$0xf]
                  %3887 = vst [vmem:[%s3851 + $0x88] sm:$0xf] %v3886
                  %v3888 = vld [vmem:[%s3850 + $0x48] sm:$0xf]
                  %3889 = vst [vmem:[%s3851 + $0x90] sm:$0xf] %v3888
                  %v3890 = vld [vmem:[%s3850 + $0x4c] sm:$0xf]
                  %3891 = vst [vmem:[%s3851 + $0x98] sm:$0xf] %v3890
                  %v3892 = vld [vmem:[%s3850 + $0x50] sm:$0xf]
                  %3893 = vst [vmem:[%s3851 + $0xa0] sm:$0xf] %v3892
                  %v3894 = vld [vmem:[%s3850 + $0x54] sm:$0xf]
                  %3895 = vst [vmem:[%s3851 + $0xa8] sm:$0xf] %v3894
                  %v3896 = vld [vmem:[%s3850 + $0x58] sm:$0xf]
                  %3897 = vst [vmem:[%s3851 + $0xb0] sm:$0xf] %v3896
                  %v3898 = vld [vmem:[%s3850 + $0x5c] sm:$0xf]
                  %3899 = vst [vmem:[%s3851 + $0xb8] sm:$0xf] %v3898
                  %v3900 = vld [vmem:[%s3850 + $0x60] sm:$0xf]
                  %3901 = vst [vmem:[%s3851 + $0xc0] sm:$0xf] %v3900
                  %v3902 = vld [vmem:[%s3850 + $0x64] sm:$0xf]
                  %3903 = vst [vmem:[%s3851 + $0xc8] sm:$0xf] %v3902
                  %v3904 = vld [vmem:[%s3850 + $0x68] sm:$0xf]
                  %3905 = vst [vmem:[%s3851 + $0xd0] sm:$0xf] %v3904
                  %v3906 = vld [vmem:[%s3850 + $0x6c] sm:$0xf]
                  %3907 = vst [vmem:[%s3851 + $0xd8] sm:$0xf] %v3906
                  %v3908 = vld [vmem:[%s3850 + $0x70] sm:$0xf]
                  %3909 = vst [vmem:[%s3851 + $0xe0] sm:$0xf] %v3908
                  %v3910 = vld [vmem:[%s3850 + $0x74] sm:$0xf]
                  %3911 = vst [vmem:[%s3851 + $0xe8] sm:$0xf] %v3910
                  %v3912 = vld [vmem:[%s3850 + $0x78] sm:$0xf]
                  %3913 = vst [vmem:[%s3851 + $0xf0] sm:$0xf] %v3912
                  %v3914 = vld [vmem:[%s3850 + $0x7c] sm:$0xf]
                  %3915 = vst [vmem:[%s3851 + $0xf8] sm:$0xf] %v3914
                $region67: #{fourier_layer3_forward.2} parent=54 // loop_footer
                  %s3849 = sadd.s32 1, %s3845
                $region68: #{fourier_layer3_forward.2} parent=54 // loop_footer_branch
                  %3844 = sbr.rel target = $region64
                $region69: #{fourier_layer3_forward.2} parent=54 // loop_exit
                  _
              $region55: #{fourier_layer3_forward.2} parent=39 // pred_fallthru
                _
            $region40: #{fourier_layer3_forward.2} parent=35 // pred_fallthru
              _
            // Predicated region
            $region41: #{fourier_layer3_forward.2} parent=35 // pred_check
              _
            $region42: #{fourier_layer3_forward.2} parent=35 // pred_check_branch
              %3759 = sbr.rel (0) target = $region44
            $region43: #{fourier_layer3_forward.2} parent=35 // pred_region
              loop: start=0, step=1, limit=1
              $region45: #{fourier_layer3_forward.2} parent=43 // loop_pre_header
                _
              $region46: #{fourier_layer3_forward.2} parent=43 // loop_header
                %s3762 = sphi 0, %s3766
                %p3763 = scmp.ge.s32.totalorder %s3762, 1
                %s3767 = sphi %s3748, %s3748
                %s3768 = sphi %s3753, %s3753
              $region47: #{fourier_layer3_forward.2} parent=43 // loop_header_branch
                %3765 = sbr.rel (%p3763) target = $region51
              $region48: #{fourier_layer3_forward.2} parent=43 // loop_body
                %v3769 = vld [vmem:[%s3767] sm:$0xf]
                %3770 = vst [vmem:[%s3768] sm:$0xf] %v3769
                %v3771 = vld [vmem:[%s3767 + $0x4] sm:$0xf]
                %3772 = vst [vmem:[%s3768 + $0x8] sm:$0xf] %v3771
                %v3773 = vld [vmem:[%s3767 + $0x8] sm:$0xf]
                %3774 = vst [vmem:[%s3768 + $0x10] sm:$0xf] %v3773
                %v3775 = vld [vmem:[%s3767 + $0xc] sm:$0xf]
                %3776 = vst [vmem:[%s3768 + $0x18] sm:$0xf] %v3775
                %v3777 = vld [vmem:[%s3767 + $0x10] sm:$0xf]
                %3778 = vst [vmem:[%s3768 + $0x20] sm:$0xf] %v3777
                %v3779 = vld [vmem:[%s3767 + $0x14] sm:$0xf]
                %3780 = vst [vmem:[%s3768 + $0x28] sm:$0xf] %v3779
                %v3781 = vld [vmem:[%s3767 + $0x18] sm:$0xf]
                %3782 = vst [vmem:[%s3768 + $0x30] sm:$0xf] %v3781
                %v3783 = vld [vmem:[%s3767 + $0x1c] sm:$0xf]
                %3784 = vst [vmem:[%s3768 + $0x38] sm:$0xf] %v3783
                %v3785 = vld [vmem:[%s3767 + $0x20] sm:$0xf]
                %3786 = vst [vmem:[%s3768 + $0x40] sm:$0xf] %v3785
                %v3787 = vld [vmem:[%s3767 + $0x24] sm:$0xf]
                %3788 = vst [vmem:[%s3768 + $0x48] sm:$0xf] %v3787
                %v3789 = vld [vmem:[%s3767 + $0x28] sm:$0xf]
                %3790 = vst [vmem:[%s3768 + $0x50] sm:$0xf] %v3789
                %v3791 = vld [vmem:[%s3767 + $0x2c] sm:$0xf]
                %3792 = vst [vmem:[%s3768 + $0x58] sm:$0xf] %v3791
                %v3793 = vld [vmem:[%s3767 + $0x30] sm:$0xf]
                %3794 = vst [vmem:[%s3768 + $0x60] sm:$0xf] %v3793
                %v3795 = vld [vmem:[%s3767 + $0x34] sm:$0xf]
                %3796 = vst [vmem:[%s3768 + $0x68] sm:$0xf] %v3795
                %v3797 = vld [vmem:[%s3767 + $0x38] sm:$0xf]
                %3798 = vst [vmem:[%s3768 + $0x70] sm:$0xf] %v3797
                %v3799 = vld [vmem:[%s3767 + $0x3c] sm:$0xf]
                %3800 = vst [vmem:[%s3768 + $0x78] sm:$0xf] %v3799
                %v3801 = vld [vmem:[%s3767 + $0x40] sm:$0xf]
                %3802 = vst [vmem:[%s3768 + $0x80] sm:$0xf] %v3801
                %v3803 = vld [vmem:[%s3767 + $0x44] sm:$0xf]
                %3804 = vst [vmem:[%s3768 + $0x88] sm:$0xf] %v3803
                %v3805 = vld [vmem:[%s3767 + $0x48] sm:$0xf]
                %3806 = vst [vmem:[%s3768 + $0x90] sm:$0xf] %v3805
                %v3807 = vld [vmem:[%s3767 + $0x4c] sm:$0xf]
                %3808 = vst [vmem:[%s3768 + $0x98] sm:$0xf] %v3807
                %v3809 = vld [vmem:[%s3767 + $0x50] sm:$0xf]
                %3810 = vst [vmem:[%s3768 + $0xa0] sm:$0xf] %v3809
                %v3811 = vld [vmem:[%s3767 + $0x54] sm:$0xf]
                %3812 = vst [vmem:[%s3768 + $0xa8] sm:$0xf] %v3811
                %v3813 = vld [vmem:[%s3767 + $0x58] sm:$0xf]
                %3814 = vst [vmem:[%s3768 + $0xb0] sm:$0xf] %v3813
                %v3815 = vld [vmem:[%s3767 + $0x5c] sm:$0xf]
                %3816 = vst [vmem:[%s3768 + $0xb8] sm:$0xf] %v3815
                %v3817 = vld [vmem:[%s3767 + $0x60] sm:$0xf]
                %3818 = vst [vmem:[%s3768 + $0xc0] sm:$0xf] %v3817
                %v3819 = vld [vmem:[%s3767 + $0x64] sm:$0xf]
                %3820 = vst [vmem:[%s3768 + $0xc8] sm:$0xf] %v3819
                %v3821 = vld [vmem:[%s3767 + $0x68] sm:$0xf]
                %3822 = vst [vmem:[%s3768 + $0xd0] sm:$0xf] %v3821
                %v3823 = vld [vmem:[%s3767 + $0x6c] sm:$0xf]
                %3824 = vst [vmem:[%s3768 + $0xd8] sm:$0xf] %v3823
                %v3825 = vld [vmem:[%s3767 + $0x70] sm:$0xf]
                %3826 = vst [vmem:[%s3768 + $0xe0] sm:$0xf] %v3825
                %v3827 = vld [vmem:[%s3767 + $0x74] sm:$0xf]
                %3828 = vst [vmem:[%s3768 + $0xe8] sm:$0xf] %v3827
                %v3829 = vld [vmem:[%s3767 + $0x78] sm:$0xf]
                %3830 = vst [vmem:[%s3768 + $0xf0] sm:$0xf] %v3829
                %v3831 = vld [vmem:[%s3767 + $0x7c] sm:$0xf]
                %3832 = vst [vmem:[%s3768 + $0xf8] sm:$0xf] %v3831
              $region49: #{fourier_layer3_forward.2} parent=43 // loop_footer
                %s3766 = sadd.s32 1, %s3762
              $region50: #{fourier_layer3_forward.2} parent=43 // loop_footer_branch
                %3761 = sbr.rel target = $region46
              $region51: #{fourier_layer3_forward.2} parent=43 // loop_exit
                _
            $region44: #{fourier_layer3_forward.2} parent=35 // pred_fallthru
              _
          $region36: #{fourier_layer3_forward.2} parent=31 // pred_fallthru
            _
          %3916 = vnop
        $region32: #{fourier_layer3_forward.2} parent=27 // pred_fallthru
          _
      $region28: #{fourier_layer3_forward.2} parent=5 // pred_fallthru
        _
      %p3917 = scmp.le.s32.totalorder 2, %s8
      // Predicated region
      $region70: #{fourier_layer3_forward.2} parent=5 // pred_check
        %p3918 = pneg %p3917
      $region71: #{fourier_layer3_forward.2} parent=5 // pred_check_branch
        %3920 = sbr.rel (%p3918) target = $region73
      $region72: #{fourier_layer3_forward.2} parent=5 // pred_region
        %s3921 = ssub.s32 %s8, 2
        // Predicated region
        $region74: #{fourier_layer3_forward.2} parent=72 // pred_check
          %p3922 = pneg %p89
        $region75: #{fourier_layer3_forward.2} parent=72 // pred_check_branch
          %3924 = sbr.rel (%p3922) target = $region77
        $region76: #{fourier_layer3_forward.2} parent=72 // pred_region
          %s3925 = sand.u32 %s74, 1
          %s3926 = sand.u32 %s74, 1
          %s3927 = smul.addr %s3926, 128
          %s3928 = scalar_lea.vmem [#allocation2], %s3927
        $region77: #{fourier_layer3_forward.2} parent=72 // pred_fallthru
          _
      $region73: #{fourier_layer3_forward.2} parent=5 // pred_fallthru
        _
    $region6: #{fourier_layer3_forward.2} parent=1 // loop_footer
      %s12 = sadd.s32 1, %s8
    $region7: #{fourier_layer3_forward.2} parent=1 // loop_footer_branch
      %7 = sbr.rel target = $region3
    $region8: #{fourier_layer3_forward.2} parent=1 // loop_exit
      _

</llo_original>
